<compile_context>
chip_gen: v5e
topology: v5e:2x2
jax: 0.10.0
libtpu: 0.0.40
codegen_flags: <defaults>
</compile_context>

<pallas_src>
import jax
import jax.numpy as jnp
from jax.experimental import pallas as pl
from jax.experimental.pallas import tpu as pltpu


def _group_kernel(x_ref, w1_ref, b1_ref, w2_ref, b2_ref, w3_ref, b3_ref, o_ref):
    """One grid step == a group of kg ordinal classifiers (3-layer MLP -> scalar each)."""
    B = x_ref.shape[0]
    kg, H = w3_ref.shape

    x = x_ref[...].astype(jnp.bfloat16)                                # (B, I)

    # ---- Layer 1: fused over the whole group, one (B,I)@(I,kg*H) matmul ----
    h1 = jnp.dot(x, w1_ref[...], preferred_element_type=jnp.float32) + b1_ref[...]
    h1 = jnp.maximum(h1, 0.0)                                          # (B, kg*H) f32
    # TODO(synk): Dropout is identity here (inference mode); training-mode dropout
    # would need pltpu.prng_random_bits + masking.

    # ---- Stack classifiers on the M axis: (kg*B, H) ----
    # Static, lane-aligned slices (H is a multiple of 128) + sublane concat
    # -> whole-vreg copies only, no intra-vreg shuffles.
    h1_stack = jnp.concatenate(
        [h1[:, kk * H:(kk + 1) * H] for kk in range(kg)], axis=0
    ).astype(jnp.bfloat16)                                             # (kg*B, H) bf16

    # ---- Layer 2: ONE (kg*B,H)@(H,kg*H) matmul for the whole group ----
    # Only the diagonal (row-block k, lane-block k) entries are meaningful; the
    # off-diagonal blocks (wrong weights + wrong bias) are computed but never read.
    h2 = jnp.dot(h1_stack, w2_ref[...], preferred_element_type=jnp.float32) + b2_ref[...]
    h2 = jnp.maximum(h2, 0.0)                                          # (kg*B, kg*H) f32

    # ---- Layer 3: VPU multiply + lane reduce on the diagonal blocks only ----
    # Accumulate lane-dense into (B, kg) with masked selects (no lane concats).
    lane = jax.lax.broadcasted_iota(jnp.int32, (B, kg), 1)
    logits = jnp.zeros((B, kg), jnp.float32)
    for kk in range(kg):                                               # static unroll
        blk = h2[kk * B:(kk + 1) * B, kk * H:(kk + 1) * H]             # (B, H) diag block
        col = jnp.sum(blk * w3_ref[kk], axis=-1, keepdims=True)        # (B, 1) f32
        logits = logits + jnp.where(lane == kk, col, 0.0)
    logits = logits + b3_ref[0]                                        # (1, kg) broadcast

    out = jax.nn.sigmoid(logits)                                       # (B, kg)
    if len(o_ref.shape) == 3:      # (1, B, kg) block: grouped output path (G > 1)
        o_ref[0] = out
    else:                          # (B, K) lane-dense direct output (G == 1)
        o_ref[...] = out


def _pick_group_size(K, H):
    """Classifiers per grid step: whole problem per step on single-TC v5e/v6e,
    split in two on dual-TensorCore v7x so the 'parallel' axis uses megacore."""
    try:
        kind = jax.devices()[0].device_kind.lower()
    except Exception:
        kind = ""
    dual_tc = ("v7" in kind) or ("7x" in kind)
    if dual_tc and K % 2 == 0:
        kg = K // 2
        if kg % 8 == 0 and (kg * H) % 128 == 0:   # keep blocks (8,128)-tileable
            return kg
    return K


def vgg_ordinal_fc(x, w1, b1, w2, b2, w3, b3, *, kg=None):
    """x: (B, I).  Stacked per-classifier params (flattened, no singleton dims):
         w1 (K, I, H)   b1 (K, H)
         w2 (K, H, H)   b2 (K, H)
         w3 (K, H)      b3 (K,)        (w3 row-form == torch Linear(H,1).weight)
       Returns (B, K) float32 = sigmoid of the K ordinal logits."""
    B, I = x.shape
    K, _, H = w1.shape
    b1 = b1.reshape(K, H)
    b2 = b2.reshape(K, H)
    w3 = w3.reshape(K, H)
    b3 = b3.reshape(K)

    if kg is None:
        kg = _pick_group_size(K, H)
    kg = int(max(1, min(kg, K)))
    if kg != K and (kg % 8 != 0 or (kg * H) % 128 != 0):
        kg = K        # fall back to a single group to keep blocks (8,128)-tileable

    # Pad K up to a multiple of kg with dummy zero classifiers (keeps group width /
    # DMA size fixed even for prime K); their sigmoid(0)=0.5 outputs are sliced off.
    Kp = ((K + kg - 1) // kg) * kg
    if Kp != K:
        pad = Kp - K
        cat0 = lambda t, shape: jnp.concatenate([t, jnp.zeros(shape, t.dtype)], axis=0)
        w1 = cat0(w1, (pad, I, H)); b1 = cat0(b1, (pad, H))
        w2 = cat0(w2, (pad, H, H)); b2 = cat0(b2, (pad, H))
        w3 = cat0(w3, (pad, H));    b3 = cat0(b3, (pad,))
    G = Kp // kg

    # Wrapper-side packing: concatenate classifiers along the output (N) axis so the
    # kernel does one wide matmul per layer per group.  Big weights go bf16.
    w1_cat = w1.transpose(1, 0, 2).reshape(I, Kp * H).astype(jnp.bfloat16)   # (I, Kp*H)
    w2_cat = w2.transpose(1, 0, 2).reshape(H, Kp * H).astype(jnp.bfloat16)   # (H, Kp*H)
    b1_cat = b1.reshape(1, Kp * H)
    b2_cat = b2.reshape(1, Kp * H)
    b3_g = b3.reshape(G, 1, kg)

    if G == 1:
        # Lane-dense direct (B, K) output: no post-kernel transpose/reshape.
        out_shape = jax.ShapeDtypeStruct((B, Kp), jnp.float32)
        out_spec = pl.BlockSpec((B, kg), lambda g: (0, g))
    else:
        out_shape = jax.ShapeDtypeStruct((G, B, kg), jnp.float32)
        out_spec = pl.BlockSpec((1, B, kg), lambda g: (g, 0, 0))

    out = pl.pallas_call(
        _group_kernel,
        out_shape=out_shape,
        grid_spec=pltpu.PrefetchScalarGridSpec(
            num_scalar_prefetch=0,
            grid=(G,),
            in_specs=[
                pl.BlockSpec((B, I), lambda g: (0, 0)),          # x: resident across steps
                pl.BlockSpec((I, kg * H), lambda g: (0, g)),     # W1 group (bf16)
                pl.BlockSpec((1, kg * H), lambda g: (0, g)),     # b1 group (f32)
                pl.BlockSpec((H, kg * H), lambda g: (0, g)),     # W2 group (bf16)
                pl.BlockSpec((1, kg * H), lambda g: (0, g)),     # b2 group (f32)
                pl.BlockSpec((kg, H), lambda g: (g, 0)),         # w3 group rows (f32)
                pl.BlockSpec((1, 1, kg), lambda g: (g, 0, 0)),   # b3 group (f32)
            ],
            out_specs=out_spec,
        ),
        compiler_params=pltpu.CompilerParams(
            # v7x megacore shards the classifier groups across its 2 TensorCores
            # when G > 1; neutral on single-TC v5e/v6e (G == 1).
            dimension_semantics=("parallel",),
        ),
    )(x, w1_cat, b1_cat, w2_cat, b2_cat, w3, b3_g)

    if G == 1:
        res = out                                          # already (B, Kp)
    else:
        # classifier index = g*kg + j -> column order matches torch.cat.
        res = out.transpose(1, 0, 2).reshape(B, Kp)
    return res[:, :K] if Kp != K else res


def _reference_f32(x, w1, b1, w2, b2, w3, b3):
    """Pure-f32 JAX reference of the PyTorch forward (eval mode)."""
    cols = []
    for k in range(w1.shape[0]):
        h1 = jnp.maximum(x @ w1[k] + b1[k], 0.0)
        h2 = jnp.maximum(h1 @ w2[k] + b2[k], 0.0)
        cols.append(jnp.sum(h2 * w3[k], axis=-1, keepdims=True) + b3[k])
    return jax.nn.sigmoid(jnp.concatenate(cols, axis=1))


def _reference_bf16(x, w1, b1, w2, b2, w3, b3):
    """Same numerics as the kernel: bf16 weights/activations into the MXU,
    f32 accumulation, f32 layer-3 reduction."""
    xb = x.astype(jnp.bfloat16)
    cols = []
    for k in range(w1.shape[0]):
        h1 = jnp.maximum(jnp.dot(xb, w1[k].astype(jnp.bfloat16),
                                 preferred_element_type=jnp.float32) + b1[k], 0.0)
        h2 = jnp.maximum(jnp.dot(h1.astype(jnp.bfloat16), w2[k].astype(jnp.bfloat16),
                                 preferred_element_type=jnp.float32) + b2[k], 0.0)
        cols.append(jnp.sum(h2 * w3[k], axis=-1, keepdims=True) + b3[k])
    return jax.nn.sigmoid(jnp.concatenate(cols, axis=1))


if __name__ == "__main__":
    # num_classes = 17 -> K = 16 classifiers, hidden = 4096 // 16 = 256
    B = 8            # batch
    I = 32           # input_size
    num_classes = 17
    K = num_classes - 1
    H = 4096 // K    # 256, exactly as in __init__

    key = jax.random.PRNGKey(0)
    kx, k1, k2, k3, k4, k5, k6 = jax.random.split(key, 7)

    x = jax.random.normal(kx, (B, I), dtype=jnp.float32)
    w1 = jax.random.normal(k1, (K, I, H), dtype=jnp.float32) * (1.0 / jnp.sqrt(I))
    b1 = jax.random.normal(k2, (K, H), dtype=jnp.float32) * 0.01
    w2 = jax.random.normal(k3, (K, H, H), dtype=jnp.float32) * (1.0 / jnp.sqrt(H))
    b2 = jax.random.normal(k4, (K, H), dtype=jnp.float32) * 0.01
    w3 = jax.random.normal(k5, (K, H), dtype=jnp.float32) * (1.0 / jnp.sqrt(H))
    b3 = jax.random.normal(k6, (K,), dtype=jnp.float32) * 0.01

    out = jax.block_until_ready(vgg_ordinal_fc(x, w1, b1, w2, b2, w3, b3))
    assert out.shape == (B, K), out.shape

    # Tight check against a reference with the same bf16-weight / f32-acc numerics.
    ref_same = _reference_bf16(x, w1, b1, w2, b2, w3, b3)
    err_same = float(jnp.max(jnp.abs(out - ref_same)))
    assert err_same < 1e-3, f"same-numerics mismatch: {err_same}"

    # Loose sanity check against the pure-f32 module semantics (bf16 quantization).
    ref_f32 = _reference_f32(x, w1, b1, w2, b2, w3, b3)
    err_f32 = float(jnp.max(jnp.abs(out - ref_f32)))
    assert err_f32 < 5e-2, f"f32 mismatch: {err_f32}"

    print("KERNEL_OK")
</pallas_src>

<mosaic_0001>
module attributes {stable_mosaic.version = 11 : i64} {
  func.func @_group_kernel(%arg0: i32, %arg1: memref<8x32xf32, #tpu.memory_space<vmem>>, %arg2: memref<32x4096xbf16, #tpu.memory_space<vmem>>, %arg3: memref<1x4096xf32, #tpu.memory_space<vmem>>, %arg4: memref<256x4096xbf16, #tpu.memory_space<vmem>>, %arg5: memref<1x4096xf32, #tpu.memory_space<vmem>>, %arg6: memref<16x256xf32, #tpu.memory_space<vmem>>, %arg7: memref<1x1x16xf32, #tpu.memory_space<vmem>>, %arg8: memref<8x16xf32, #tpu.memory_space<vmem>>) attributes {dimension_semantics = [#tpu.dimension_semantics<parallel>], iteration_bounds = array<i64: 1>, scalar_prefetch = 0 : i64, scratch_operands = 0 : i64, tpu.core_type = #tpu.core_type<tc>, window_params = [{pipeline_mode = #tpu.pipeline_mode<synchronous>, transform_indices = @transform_0, window_bounds = array<i64: 8, 32>}, {transform_indices = @transform_1, window_bounds = array<i64: 32, 4096>}, {transform_indices = @transform_2, window_bounds = array<i64: 1, 4096>}, {transform_indices = @transform_3, window_bounds = array<i64: 256, 4096>}, {transform_indices = @transform_4, window_bounds = array<i64: 1, 4096>}, {transform_indices = @transform_5, window_bounds = array<i64: 16, 256>}, {transform_indices = @transform_6, window_bounds = array<i64: 1, 1, 16>}, {transform_indices = @transform_7, window_bounds = array<i64: 8, 16>}]} {
    %c0 = arith.constant 0 : index
    %c0_0 = arith.constant 0 : index
    %0 = vector.load %arg1[%c0, %c0_0] : memref<8x32xf32, #tpu.memory_space<vmem>>, vector<8x32xf32>
    %1 = arith.truncf %0 : vector<8x32xf32> to vector<8x32xbf16>
    %c0_1 = arith.constant 0 : index
    %c0_2 = arith.constant 0 : index
    %2 = vector.load %arg2[%c0_1, %c0_2] : memref<32x4096xbf16, #tpu.memory_space<vmem>>, vector<32x4096xbf16>
    %cst = arith.constant dense<0.000000e+00> : vector<8x4096xf32>
    %3 = tpu.matmul %1, %2, %cst {dimension_numbers = #tpu.dot_dimension_numbers<[1], [0], [0], [1], [0, 0, 1, 1], [], []>} : vector<8x32xbf16>, vector<32x4096xbf16>, vector<8x4096xf32> -> vector<8x4096xf32>
    %c0_3 = arith.constant 0 : index
    %c0_4 = arith.constant 0 : index
    %4 = vector.load %arg3[%c0_3, %c0_4] : memref<1x4096xf32, #tpu.memory_space<vmem>>, vector<1x4096xf32>
    %5 = vector.broadcast %4 : vector<1x4096xf32> to vector<8x4096xf32>
    %6 = arith.addf %3, %5 : vector<8x4096xf32>
    %cst_5 = arith.constant 0.000000e+00 : f32
    %7 = vector.broadcast %cst_5 : f32 to vector<8x4096xf32>
    %8 = arith.maximumf %6, %7 : vector<8x4096xf32>
    %9 = vector.extract_strided_slice %8 {offsets = [0, 0], sizes = [8, 256], strides = [1, 1]} : vector<8x4096xf32> to vector<8x256xf32>
    %10 = vector.extract_strided_slice %8 {offsets = [0, 256], sizes = [8, 256], strides = [1, 1]} : vector<8x4096xf32> to vector<8x256xf32>
    %11 = vector.extract_strided_slice %8 {offsets = [0, 512], sizes = [8, 256], strides = [1, 1]} : vector<8x4096xf32> to vector<8x256xf32>
    %12 = vector.extract_strided_slice %8 {offsets = [0, 768], sizes = [8, 256], strides = [1, 1]} : vector<8x4096xf32> to vector<8x256xf32>
    %13 = vector.extract_strided_slice %8 {offsets = [0, 1024], sizes = [8, 256], strides = [1, 1]} : vector<8x4096xf32> to vector<8x256xf32>
    %14 = vector.extract_strided_slice %8 {offsets = [0, 1280], sizes = [8, 256], strides = [1, 1]} : vector<8x4096xf32> to vector<8x256xf32>
    %15 = vector.extract_strided_slice %8 {offsets = [0, 1536], sizes = [8, 256], strides = [1, 1]} : vector<8x4096xf32> to vector<8x256xf32>
    %16 = vector.extract_strided_slice %8 {offsets = [0, 1792], sizes = [8, 256], strides = [1, 1]} : vector<8x4096xf32> to vector<8x256xf32>
    %17 = vector.extract_strided_slice %8 {offsets = [0, 2048], sizes = [8, 256], strides = [1, 1]} : vector<8x4096xf32> to vector<8x256xf32>
    %18 = vector.extract_strided_slice %8 {offsets = [0, 2304], sizes = [8, 256], strides = [1, 1]} : vector<8x4096xf32> to vector<8x256xf32>
    %19 = vector.extract_strided_slice %8 {offsets = [0, 2560], sizes = [8, 256], strides = [1, 1]} : vector<8x4096xf32> to vector<8x256xf32>
    %20 = vector.extract_strided_slice %8 {offsets = [0, 2816], sizes = [8, 256], strides = [1, 1]} : vector<8x4096xf32> to vector<8x256xf32>
    %21 = vector.extract_strided_slice %8 {offsets = [0, 3072], sizes = [8, 256], strides = [1, 1]} : vector<8x4096xf32> to vector<8x256xf32>
    %22 = vector.extract_strided_slice %8 {offsets = [0, 3328], sizes = [8, 256], strides = [1, 1]} : vector<8x4096xf32> to vector<8x256xf32>
    %23 = vector.extract_strided_slice %8 {offsets = [0, 3584], sizes = [8, 256], strides = [1, 1]} : vector<8x4096xf32> to vector<8x256xf32>
    %24 = vector.extract_strided_slice %8 {offsets = [0, 3840], sizes = [8, 256], strides = [1, 1]} : vector<8x4096xf32> to vector<8x256xf32>
    %25 = tpu.concatenate %9, %10, %11, %12, %13, %14, %15, %16, %17, %18, %19, %20, %21, %22, %23, %24 in 0 : vector<8x256xf32>, vector<8x256xf32>, vector<8x256xf32>, vector<8x256xf32>, vector<8x256xf32>, vector<8x256xf32>, vector<8x256xf32>, vector<8x256xf32>, vector<8x256xf32>, vector<8x256xf32>, vector<8x256xf32>, vector<8x256xf32>, vector<8x256xf32>, vector<8x256xf32>, vector<8x256xf32>, vector<8x256xf32> -> vector<128x256xf32>
    %26 = arith.truncf %25 : vector<128x256xf32> to vector<128x256xbf16>
    %c0_6 = arith.constant 0 : index
    %c0_7 = arith.constant 0 : index
    %27 = vector.load %arg4[%c0_6, %c0_7] : memref<256x4096xbf16, #tpu.memory_space<vmem>>, vector<256x4096xbf16>
    %cst_8 = arith.constant dense<0.000000e+00> : vector<128x4096xf32>
    %28 = tpu.matmul %26, %27, %cst_8 {dimension_numbers = #tpu.dot_dimension_numbers<[1], [0], [0], [1], [0, 0, 1, 1], [], []>} : vector<128x256xbf16>, vector<256x4096xbf16>, vector<128x4096xf32> -> vector<128x4096xf32>
    %c0_9 = arith.constant 0 : index
    %c0_10 = arith.constant 0 : index
    %29 = vector.load %arg5[%c0_9, %c0_10] : memref<1x4096xf32, #tpu.memory_space<vmem>>, vector<1x4096xf32>
    %30 = vector.broadcast %29 : vector<1x4096xf32> to vector<128x4096xf32>
    %31 = arith.addf %28, %30 : vector<128x4096xf32>
    %cst_11 = arith.constant 0.000000e+00 : f32
    %32 = vector.broadcast %cst_11 : f32 to vector<128x4096xf32>
    %33 = arith.maximumf %31, %32 : vector<128x4096xf32>
    %34 = tpu.iota {dimensions = array<i32: 1>} : vector<8x16xi32>
    %cst_12 = arith.constant 0.000000e+00 : f32
    %35 = vector.broadcast %cst_12 : f32 to vector<8x16xf32>
    %36 = vector.extract_strided_slice %33 {offsets = [0, 0], sizes = [8, 256], strides = [1, 1]} : vector<128x4096xf32> to vector<8x256xf32>
    %c0_13 = arith.constant 0 : index
    %c0_14 = arith.constant 0 : index
    %37 = vector.load %arg6[%c0_13, %c0_14] : memref<16x256xf32, #tpu.memory_space<vmem>>, vector<1x256xf32>
    %38 = vector.shape_cast %37 : vector<1x256xf32> to vector<256xf32>
    %39 = vector.shape_cast %38 : vector<256xf32> to vector<1x256xf32>
    %40 = vector.broadcast %39 : vector<1x256xf32> to vector<8x256xf32>
    %41 = arith.mulf %36, %40 : vector<8x256xf32>
    %cst_15 = arith.constant dense<0.000000e+00> : vector<8xf32>
    %42 = vector.multi_reduction <add>, %41, %cst_15 [1] : vector<8x256xf32> to vector<8xf32>
    %43 = vector.shape_cast %42 : vector<8xf32> to vector<8x1xf32>
    %c0_i32 = arith.constant 0 : i32
    %44 = vector.broadcast %c0_i32 : i32 to vector<8x16xi32>
    %45 = arith.cmpi eq, %34, %44 : vector<8x16xi32>
    %cst_16 = arith.constant 0.000000e+00 : f32
    %46 = vector.shape_cast %43 : vector<8x1xf32> to vector<8x1xf32>
    %47 = vector.broadcast %46 : vector<8x1xf32> to vector<8x16xf32>
    %48 = vector.broadcast %cst_16 : f32 to vector<8x16xf32>
    %49 = arith.select %45, %47, %48 : vector<8x16xi1>, vector<8x16xf32>
    %50 = arith.addf %35, %49 : vector<8x16xf32>
    %51 = vector.extract_strided_slice %33 {offsets = [8, 256], sizes = [8, 256], strides = [1, 1]} : vector<128x4096xf32> to vector<8x256xf32>
    %c1 = arith.constant 1 : index
    %c0_17 = arith.constant 0 : index
    %52 = vector.load %arg6[%c1, %c0_17] : memref<16x256xf32, #tpu.memory_space<vmem>>, vector<1x256xf32>
    %53 = vector.shape_cast %52 : vector<1x256xf32> to vector<256xf32>
    %54 = vector.shape_cast %53 : vector<256xf32> to vector<1x256xf32>
    %55 = vector.broadcast %54 : vector<1x256xf32> to vector<8x256xf32>
    %56 = arith.mulf %51, %55 : vector<8x256xf32>
    %cst_18 = arith.constant dense<0.000000e+00> : vector<8xf32>
    %57 = vector.multi_reduction <add>, %56, %cst_18 [1] : vector<8x256xf32> to vector<8xf32>
    %58 = vector.shape_cast %57 : vector<8xf32> to vector<8x1xf32>
    %c1_i32 = arith.constant 1 : i32
    %59 = vector.broadcast %c1_i32 : i32 to vector<8x16xi32>
    %60 = arith.cmpi eq, %34, %59 : vector<8x16xi32>
    %cst_19 = arith.constant 0.000000e+00 : f32
    %61 = vector.shape_cast %58 : vector<8x1xf32> to vector<8x1xf32>
    %62 = vector.broadcast %61 : vector<8x1xf32> to vector<8x16xf32>
    %63 = vector.broadcast %cst_19 : f32 to vector<8x16xf32>
    %64 = arith.select %60, %62, %63 : vector<8x16xi1>, vector<8x16xf32>
    %65 = arith.addf %50, %64 : vector<8x16xf32>
    %66 = vector.extract_strided_slice %33 {offsets = [16, 512], sizes = [8, 256], strides = [1, 1]} : vector<128x4096xf32> to vector<8x256xf32>
    %c2 = arith.constant 2 : index
    %c0_20 = arith.constant 0 : index
    %67 = vector.load %arg6[%c2, %c0_20] : memref<16x256xf32, #tpu.memory_space<vmem>>, vector<1x256xf32>
    %68 = vector.shape_cast %67 : vector<1x256xf32> to vector<256xf32>
    %69 = vector.shape_cast %68 : vector<256xf32> to vector<1x256xf32>
    %70 = vector.broadcast %69 : vector<1x256xf32> to vector<8x256xf32>
    %71 = arith.mulf %66, %70 : vector<8x256xf32>
    %cst_21 = arith.constant dense<0.000000e+00> : vector<8xf32>
    %72 = vector.multi_reduction <add>, %71, %cst_21 [1] : vector<8x256xf32> to vector<8xf32>
    %73 = vector.shape_cast %72 : vector<8xf32> to vector<8x1xf32>
    %c2_i32 = arith.constant 2 : i32
    %74 = vector.broadcast %c2_i32 : i32 to vector<8x16xi32>
    %75 = arith.cmpi eq, %34, %74 : vector<8x16xi32>
    %cst_22 = arith.constant 0.000000e+00 : f32
    %76 = vector.shape_cast %73 : vector<8x1xf32> to vector<8x1xf32>
    %77 = vector.broadcast %76 : vector<8x1xf32> to vector<8x16xf32>
    %78 = vector.broadcast %cst_22 : f32 to vector<8x16xf32>
    %79 = arith.select %75, %77, %78 : vector<8x16xi1>, vector<8x16xf32>
    %80 = arith.addf %65, %79 : vector<8x16xf32>
    %81 = vector.extract_strided_slice %33 {offsets = [24, 768], sizes = [8, 256], strides = [1, 1]} : vector<128x4096xf32> to vector<8x256xf32>
    %c3 = arith.constant 3 : index
    %c0_23 = arith.constant 0 : index
    %82 = vector.load %arg6[%c3, %c0_23] : memref<16x256xf32, #tpu.memory_space<vmem>>, vector<1x256xf32>
    %83 = vector.shape_cast %82 : vector<1x256xf32> to vector<256xf32>
    %84 = vector.shape_cast %83 : vector<256xf32> to vector<1x256xf32>
    %85 = vector.broadcast %84 : vector<1x256xf32> to vector<8x256xf32>
    %86 = arith.mulf %81, %85 : vector<8x256xf32>
    %cst_24 = arith.constant dense<0.000000e+00> : vector<8xf32>
    %87 = vector.multi_reduction <add>, %86, %cst_24 [1] : vector<8x256xf32> to vector<8xf32>
    %88 = vector.shape_cast %87 : vector<8xf32> to vector<8x1xf32>
    %c3_i32 = arith.constant 3 : i32
    %89 = vector.broadcast %c3_i32 : i32 to vector<8x16xi32>
    %90 = arith.cmpi eq, %34, %89 : vector<8x16xi32>
    %cst_25 = arith.constant 0.000000e+00 : f32
    %91 = vector.shape_cast %88 : vector<8x1xf32> to vector<8x1xf32>
    %92 = vector.broadcast %91 : vector<8x1xf32> to vector<8x16xf32>
    %93 = vector.broadcast %cst_25 : f32 to vector<8x16xf32>
    %94 = arith.select %90, %92, %93 : vector<8x16xi1>, vector<8x16xf32>
    %95 = arith.addf %80, %94 : vector<8x16xf32>
    %96 = vector.extract_strided_slice %33 {offsets = [32, 1024], sizes = [8, 256], strides = [1, 1]} : vector<128x4096xf32> to vector<8x256xf32>
    %c4 = arith.constant 4 : index
    %c0_26 = arith.constant 0 : index
    %97 = vector.load %arg6[%c4, %c0_26] : memref<16x256xf32, #tpu.memory_space<vmem>>, vector<1x256xf32>
    %98 = vector.shape_cast %97 : vector<1x256xf32> to vector<256xf32>
    %99 = vector.shape_cast %98 : vector<256xf32> to vector<1x256xf32>
    %100 = vector.broadcast %99 : vector<1x256xf32> to vector<8x256xf32>
    %101 = arith.mulf %96, %100 : vector<8x256xf32>
    %cst_27 = arith.constant dense<0.000000e+00> : vector<8xf32>
    %102 = vector.multi_reduction <add>, %101, %cst_27 [1] : vector<8x256xf32> to vector<8xf32>
    %103 = vector.shape_cast %102 : vector<8xf32> to vector<8x1xf32>
    %c4_i32 = arith.constant 4 : i32
    %104 = vector.broadcast %c4_i32 : i32 to vector<8x16xi32>
    %105 = arith.cmpi eq, %34, %104 : vector<8x16xi32>
    %cst_28 = arith.constant 0.000000e+00 : f32
    %106 = vector.shape_cast %103 : vector<8x1xf32> to vector<8x1xf32>
    %107 = vector.broadcast %106 : vector<8x1xf32> to vector<8x16xf32>
    %108 = vector.broadcast %cst_28 : f32 to vector<8x16xf32>
    %109 = arith.select %105, %107, %108 : vector<8x16xi1>, vector<8x16xf32>
    %110 = arith.addf %95, %109 : vector<8x16xf32>
    %111 = vector.extract_strided_slice %33 {offsets = [40, 1280], sizes = [8, 256], strides = [1, 1]} : vector<128x4096xf32> to vector<8x256xf32>
    %c5 = arith.constant 5 : index
    %c0_29 = arith.constant 0 : index
    %112 = vector.load %arg6[%c5, %c0_29] : memref<16x256xf32, #tpu.memory_space<vmem>>, vector<1x256xf32>
    %113 = vector.shape_cast %112 : vector<1x256xf32> to vector<256xf32>
    %114 = vector.shape_cast %113 : vector<256xf32> to vector<1x256xf32>
    %115 = vector.broadcast %114 : vector<1x256xf32> to vector<8x256xf32>
    %116 = arith.mulf %111, %115 : vector<8x256xf32>
    %cst_30 = arith.constant dense<0.000000e+00> : vector<8xf32>
    %117 = vector.multi_reduction <add>, %116, %cst_30 [1] : vector<8x256xf32> to vector<8xf32>
    %118 = vector.shape_cast %117 : vector<8xf32> to vector<8x1xf32>
    %c5_i32 = arith.constant 5 : i32
    %119 = vector.broadcast %c5_i32 : i32 to vector<8x16xi32>
    %120 = arith.cmpi eq, %34, %119 : vector<8x16xi32>
    %cst_31 = arith.constant 0.000000e+00 : f32
    %121 = vector.shape_cast %118 : vector<8x1xf32> to vector<8x1xf32>
    %122 = vector.broadcast %121 : vector<8x1xf32> to vector<8x16xf32>
    %123 = vector.broadcast %cst_31 : f32 to vector<8x16xf32>
    %124 = arith.select %120, %122, %123 : vector<8x16xi1>, vector<8x16xf32>
    %125 = arith.addf %110, %124 : vector<8x16xf32>
    %126 = vector.extract_strided_slice %33 {offsets = [48, 1536], sizes = [8, 256], strides = [1, 1]} : vector<128x4096xf32> to vector<8x256xf32>
    %c6 = arith.constant 6 : index
    %c0_32 = arith.constant 0 : index
    %127 = vector.load %arg6[%c6, %c0_32] : memref<16x256xf32, #tpu.memory_space<vmem>>, vector<1x256xf32>
    %128 = vector.shape_cast %127 : vector<1x256xf32> to vector<256xf32>
    %129 = vector.shape_cast %128 : vector<256xf32> to vector<1x256xf32>
    %130 = vector.broadcast %129 : vector<1x256xf32> to vector<8x256xf32>
    %131 = arith.mulf %126, %130 : vector<8x256xf32>
    %cst_33 = arith.constant dense<0.000000e+00> : vector<8xf32>
    %132 = vector.multi_reduction <add>, %131, %cst_33 [1] : vector<8x256xf32> to vector<8xf32>
    %133 = vector.shape_cast %132 : vector<8xf32> to vector<8x1xf32>
    %c6_i32 = arith.constant 6 : i32
    %134 = vector.broadcast %c6_i32 : i32 to vector<8x16xi32>
    %135 = arith.cmpi eq, %34, %134 : vector<8x16xi32>
    %cst_34 = arith.constant 0.000000e+00 : f32
    %136 = vector.shape_cast %133 : vector<8x1xf32> to vector<8x1xf32>
    %137 = vector.broadcast %136 : vector<8x1xf32> to vector<8x16xf32>
    %138 = vector.broadcast %cst_34 : f32 to vector<8x16xf32>
    %139 = arith.select %135, %137, %138 : vector<8x16xi1>, vector<8x16xf32>
    %140 = arith.addf %125, %139 : vector<8x16xf32>
    %141 = vector.extract_strided_slice %33 {offsets = [56, 1792], sizes = [8, 256], strides = [1, 1]} : vector<128x4096xf32> to vector<8x256xf32>
    %c7 = arith.constant 7 : index
    %c0_35 = arith.constant 0 : index
    %142 = vector.load %arg6[%c7, %c0_35] : memref<16x256xf32, #tpu.memory_space<vmem>>, vector<1x256xf32>
    %143 = vector.shape_cast %142 : vector<1x256xf32> to vector<256xf32>
    %144 = vector.shape_cast %143 : vector<256xf32> to vector<1x256xf32>
    %145 = vector.broadcast %144 : vector<1x256xf32> to vector<8x256xf32>
    %146 = arith.mulf %141, %145 : vector<8x256xf32>
    %cst_36 = arith.constant dense<0.000000e+00> : vector<8xf32>
    %147 = vector.multi_reduction <add>, %146, %cst_36 [1] : vector<8x256xf32> to vector<8xf32>
    %148 = vector.shape_cast %147 : vector<8xf32> to vector<8x1xf32>
    %c7_i32 = arith.constant 7 : i32
    %149 = vector.broadcast %c7_i32 : i32 to vector<8x16xi32>
    %150 = arith.cmpi eq, %34, %149 : vector<8x16xi32>
    %cst_37 = arith.constant 0.000000e+00 : f32
    %151 = vector.shape_cast %148 : vector<8x1xf32> to vector<8x1xf32>
    %152 = vector.broadcast %151 : vector<8x1xf32> to vector<8x16xf32>
    %153 = vector.broadcast %cst_37 : f32 to vector<8x16xf32>
    %154 = arith.select %150, %152, %153 : vector<8x16xi1>, vector<8x16xf32>
    %155 = arith.addf %140, %154 : vector<8x16xf32>
    %156 = vector.extract_strided_slice %33 {offsets = [64, 2048], sizes = [8, 256], strides = [1, 1]} : vector<128x4096xf32> to vector<8x256xf32>
    %c8 = arith.constant 8 : index
    %c0_38 = arith.constant 0 : index
    %157 = vector.load %arg6[%c8, %c0_38] : memref<16x256xf32, #tpu.memory_space<vmem>>, vector<1x256xf32>
    %158 = vector.shape_cast %157 : vector<1x256xf32> to vector<256xf32>
    %159 = vector.shape_cast %158 : vector<256xf32> to vector<1x256xf32>
    %160 = vector.broadcast %159 : vector<1x256xf32> to vector<8x256xf32>
    %161 = arith.mulf %156, %160 : vector<8x256xf32>
    %cst_39 = arith.constant dense<0.000000e+00> : vector<8xf32>
    %162 = vector.multi_reduction <add>, %161, %cst_39 [1] : vector<8x256xf32> to vector<8xf32>
    %163 = vector.shape_cast %162 : vector<8xf32> to vector<8x1xf32>
    %c8_i32 = arith.constant 8 : i32
    %164 = vector.broadcast %c8_i32 : i32 to vector<8x16xi32>
    %165 = arith.cmpi eq, %34, %164 : vector<8x16xi32>
    %cst_40 = arith.constant 0.000000e+00 : f32
    %166 = vector.shape_cast %163 : vector<8x1xf32> to vector<8x1xf32>
    %167 = vector.broadcast %166 : vector<8x1xf32> to vector<8x16xf32>
    %168 = vector.broadcast %cst_40 : f32 to vector<8x16xf32>
    %169 = arith.select %165, %167, %168 : vector<8x16xi1>, vector<8x16xf32>
    %170 = arith.addf %155, %169 : vector<8x16xf32>
    %171 = vector.extract_strided_slice %33 {offsets = [72, 2304], sizes = [8, 256], strides = [1, 1]} : vector<128x4096xf32> to vector<8x256xf32>
    %c9 = arith.constant 9 : index
    %c0_41 = arith.constant 0 : index
    %172 = vector.load %arg6[%c9, %c0_41] : memref<16x256xf32, #tpu.memory_space<vmem>>, vector<1x256xf32>
    %173 = vector.shape_cast %172 : vector<1x256xf32> to vector<256xf32>
    %174 = vector.shape_cast %173 : vector<256xf32> to vector<1x256xf32>
    %175 = vector.broadcast %174 : vector<1x256xf32> to vector<8x256xf32>
    %176 = arith.mulf %171, %175 : vector<8x256xf32>
    %cst_42 = arith.constant dense<0.000000e+00> : vector<8xf32>
    %177 = vector.multi_reduction <add>, %176, %cst_42 [1] : vector<8x256xf32> to vector<8xf32>
    %178 = vector.shape_cast %177 : vector<8xf32> to vector<8x1xf32>
    %c9_i32 = arith.constant 9 : i32
    %179 = vector.broadcast %c9_i32 : i32 to vector<8x16xi32>
    %180 = arith.cmpi eq, %34, %179 : vector<8x16xi32>
    %cst_43 = arith.constant 0.000000e+00 : f32
    %181 = vector.shape_cast %178 : vector<8x1xf32> to vector<8x1xf32>
    %182 = vector.broadcast %181 : vector<8x1xf32> to vector<8x16xf32>
    %183 = vector.broadcast %cst_43 : f32 to vector<8x16xf32>
    %184 = arith.select %180, %182, %183 : vector<8x16xi1>, vector<8x16xf32>
    %185 = arith.addf %170, %184 : vector<8x16xf32>
    %186 = vector.extract_strided_slice %33 {offsets = [80, 2560], sizes = [8, 256], strides = [1, 1]} : vector<128x4096xf32> to vector<8x256xf32>
    %c10 = arith.constant 10 : index
    %c0_44 = arith.constant 0 : index
    %187 = vector.load %arg6[%c10, %c0_44] : memref<16x256xf32, #tpu.memory_space<vmem>>, vector<1x256xf32>
    %188 = vector.shape_cast %187 : vector<1x256xf32> to vector<256xf32>
    %189 = vector.shape_cast %188 : vector<256xf32> to vector<1x256xf32>
    %190 = vector.broadcast %189 : vector<1x256xf32> to vector<8x256xf32>
    %191 = arith.mulf %186, %190 : vector<8x256xf32>
    %cst_45 = arith.constant dense<0.000000e+00> : vector<8xf32>
    %192 = vector.multi_reduction <add>, %191, %cst_45 [1] : vector<8x256xf32> to vector<8xf32>
    %193 = vector.shape_cast %192 : vector<8xf32> to vector<8x1xf32>
    %c10_i32 = arith.constant 10 : i32
    %194 = vector.broadcast %c10_i32 : i32 to vector<8x16xi32>
    %195 = arith.cmpi eq, %34, %194 : vector<8x16xi32>
    %cst_46 = arith.constant 0.000000e+00 : f32
    %196 = vector.shape_cast %193 : vector<8x1xf32> to vector<8x1xf32>
    %197 = vector.broadcast %196 : vector<8x1xf32> to vector<8x16xf32>
    %198 = vector.broadcast %cst_46 : f32 to vector<8x16xf32>
    %199 = arith.select %195, %197, %198 : vector<8x16xi1>, vector<8x16xf32>
    %200 = arith.addf %185, %199 : vector<8x16xf32>
    %201 = vector.extract_strided_slice %33 {offsets = [88, 2816], sizes = [8, 256], strides = [1, 1]} : vector<128x4096xf32> to vector<8x256xf32>
    %c11 = arith.constant 11 : index
    %c0_47 = arith.constant 0 : index
    %202 = vector.load %arg6[%c11, %c0_47] : memref<16x256xf32, #tpu.memory_space<vmem>>, vector<1x256xf32>
    %203 = vector.shape_cast %202 : vector<1x256xf32> to vector<256xf32>
    %204 = vector.shape_cast %203 : vector<256xf32> to vector<1x256xf32>
    %205 = vector.broadcast %204 : vector<1x256xf32> to vector<8x256xf32>
    %206 = arith.mulf %201, %205 : vector<8x256xf32>
    %cst_48 = arith.constant dense<0.000000e+00> : vector<8xf32>
    %207 = vector.multi_reduction <add>, %206, %cst_48 [1] : vector<8x256xf32> to vector<8xf32>
    %208 = vector.shape_cast %207 : vector<8xf32> to vector<8x1xf32>
    %c11_i32 = arith.constant 11 : i32
    %209 = vector.broadcast %c11_i32 : i32 to vector<8x16xi32>
    %210 = arith.cmpi eq, %34, %209 : vector<8x16xi32>
    %cst_49 = arith.constant 0.000000e+00 : f32
    %211 = vector.shape_cast %208 : vector<8x1xf32> to vector<8x1xf32>
    %212 = vector.broadcast %211 : vector<8x1xf32> to vector<8x16xf32>
    %213 = vector.broadcast %cst_49 : f32 to vector<8x16xf32>
    %214 = arith.select %210, %212, %213 : vector<8x16xi1>, vector<8x16xf32>
    %215 = arith.addf %200, %214 : vector<8x16xf32>
    %216 = vector.extract_strided_slice %33 {offsets = [96, 3072], sizes = [8, 256], strides = [1, 1]} : vector<128x4096xf32> to vector<8x256xf32>
    %c12 = arith.constant 12 : index
    %c0_50 = arith.constant 0 : index
    %217 = vector.load %arg6[%c12, %c0_50] : memref<16x256xf32, #tpu.memory_space<vmem>>, vector<1x256xf32>
    %218 = vector.shape_cast %217 : vector<1x256xf32> to vector<256xf32>
    %219 = vector.shape_cast %218 : vector<256xf32> to vector<1x256xf32>
    %220 = vector.broadcast %219 : vector<1x256xf32> to vector<8x256xf32>
    %221 = arith.mulf %216, %220 : vector<8x256xf32>
    %cst_51 = arith.constant dense<0.000000e+00> : vector<8xf32>
    %222 = vector.multi_reduction <add>, %221, %cst_51 [1] : vector<8x256xf32> to vector<8xf32>
    %223 = vector.shape_cast %222 : vector<8xf32> to vector<8x1xf32>
    %c12_i32 = arith.constant 12 : i32
    %224 = vector.broadcast %c12_i32 : i32 to vector<8x16xi32>
    %225 = arith.cmpi eq, %34, %224 : vector<8x16xi32>
    %cst_52 = arith.constant 0.000000e+00 : f32
    %226 = vector.shape_cast %223 : vector<8x1xf32> to vector<8x1xf32>
    %227 = vector.broadcast %226 : vector<8x1xf32> to vector<8x16xf32>
    %228 = vector.broadcast %cst_52 : f32 to vector<8x16xf32>
    %229 = arith.select %225, %227, %228 : vector<8x16xi1>, vector<8x16xf32>
    %230 = arith.addf %215, %229 : vector<8x16xf32>
    %231 = vector.extract_strided_slice %33 {offsets = [104, 3328], sizes = [8, 256], strides = [1, 1]} : vector<128x4096xf32> to vector<8x256xf32>
    %c13 = arith.constant 13 : index
    %c0_53 = arith.constant 0 : index
    %232 = vector.load %arg6[%c13, %c0_53] : memref<16x256xf32, #tpu.memory_space<vmem>>, vector<1x256xf32>
    %233 = vector.shape_cast %232 : vector<1x256xf32> to vector<256xf32>
    %234 = vector.shape_cast %233 : vector<256xf32> to vector<1x256xf32>
    %235 = vector.broadcast %234 : vector<1x256xf32> to vector<8x256xf32>
    %236 = arith.mulf %231, %235 : vector<8x256xf32>
    %cst_54 = arith.constant dense<0.000000e+00> : vector<8xf32>
    %237 = vector.multi_reduction <add>, %236, %cst_54 [1] : vector<8x256xf32> to vector<8xf32>
    %238 = vector.shape_cast %237 : vector<8xf32> to vector<8x1xf32>
    %c13_i32 = arith.constant 13 : i32
    %239 = vector.broadcast %c13_i32 : i32 to vector<8x16xi32>
    %240 = arith.cmpi eq, %34, %239 : vector<8x16xi32>
    %cst_55 = arith.constant 0.000000e+00 : f32
    %241 = vector.shape_cast %238 : vector<8x1xf32> to vector<8x1xf32>
    %242 = vector.broadcast %241 : vector<8x1xf32> to vector<8x16xf32>
    %243 = vector.broadcast %cst_55 : f32 to vector<8x16xf32>
    %244 = arith.select %240, %242, %243 : vector<8x16xi1>, vector<8x16xf32>
    %245 = arith.addf %230, %244 : vector<8x16xf32>
    %246 = vector.extract_strided_slice %33 {offsets = [112, 3584], sizes = [8, 256], strides = [1, 1]} : vector<128x4096xf32> to vector<8x256xf32>
    %c14 = arith.constant 14 : index
    %c0_56 = arith.constant 0 : index
    %247 = vector.load %arg6[%c14, %c0_56] : memref<16x256xf32, #tpu.memory_space<vmem>>, vector<1x256xf32>
    %248 = vector.shape_cast %247 : vector<1x256xf32> to vector<256xf32>
    %249 = vector.shape_cast %248 : vector<256xf32> to vector<1x256xf32>
    %250 = vector.broadcast %249 : vector<1x256xf32> to vector<8x256xf32>
    %251 = arith.mulf %246, %250 : vector<8x256xf32>
    %cst_57 = arith.constant dense<0.000000e+00> : vector<8xf32>
    %252 = vector.multi_reduction <add>, %251, %cst_57 [1] : vector<8x256xf32> to vector<8xf32>
    %253 = vector.shape_cast %252 : vector<8xf32> to vector<8x1xf32>
    %c14_i32 = arith.constant 14 : i32
    %254 = vector.broadcast %c14_i32 : i32 to vector<8x16xi32>
    %255 = arith.cmpi eq, %34, %254 : vector<8x16xi32>
    %cst_58 = arith.constant 0.000000e+00 : f32
    %256 = vector.shape_cast %253 : vector<8x1xf32> to vector<8x1xf32>
    %257 = vector.broadcast %256 : vector<8x1xf32> to vector<8x16xf32>
    %258 = vector.broadcast %cst_58 : f32 to vector<8x16xf32>
    %259 = arith.select %255, %257, %258 : vector<8x16xi1>, vector<8x16xf32>
    %260 = arith.addf %245, %259 : vector<8x16xf32>
    %261 = vector.extract_strided_slice %33 {offsets = [120, 3840], sizes = [8, 256], strides = [1, 1]} : vector<128x4096xf32> to vector<8x256xf32>
    %c15 = arith.constant 15 : index
    %c0_59 = arith.constant 0 : index
    %262 = vector.load %arg6[%c15, %c0_59] : memref<16x256xf32, #tpu.memory_space<vmem>>, vector<1x256xf32>
    %263 = vector.shape_cast %262 : vector<1x256xf32> to vector<256xf32>
    %264 = vector.shape_cast %263 : vector<256xf32> to vector<1x256xf32>
    %265 = vector.broadcast %264 : vector<1x256xf32> to vector<8x256xf32>
    %266 = arith.mulf %261, %265 : vector<8x256xf32>
    %cst_60 = arith.constant dense<0.000000e+00> : vector<8xf32>
    %267 = vector.multi_reduction <add>, %266, %cst_60 [1] : vector<8x256xf32> to vector<8xf32>
    %268 = vector.shape_cast %267 : vector<8xf32> to vector<8x1xf32>
    %c15_i32 = arith.constant 15 : i32
    %269 = vector.broadcast %c15_i32 : i32 to vector<8x16xi32>
    %270 = arith.cmpi eq, %34, %269 : vector<8x16xi32>
    %cst_61 = arith.constant 0.000000e+00 : f32
    %271 = vector.shape_cast %268 : vector<8x1xf32> to vector<8x1xf32>
    %272 = vector.broadcast %271 : vector<8x1xf32> to vector<8x16xf32>
    %273 = vector.broadcast %cst_61 : f32 to vector<8x16xf32>
    %274 = arith.select %270, %272, %273 : vector<8x16xi1>, vector<8x16xf32>
    %275 = arith.addf %260, %274 : vector<8x16xf32>
    %c0_62 = arith.constant 0 : index
    %c0_63 = arith.constant 0 : index
    %c0_64 = arith.constant 0 : index
    %276 = vector.load %arg7[%c0_62, %c0_63, %c0_64] : memref<1x1x16xf32, #tpu.memory_space<vmem>>, vector<1x1x16xf32>
    %277 = vector.shape_cast %276 : vector<1x1x16xf32> to vector<1x16xf32>
    %278 = vector.broadcast %277 : vector<1x16xf32> to vector<8x16xf32>
    %279 = arith.addf %275, %278 : vector<8x16xf32>
    %280 = arith.negf %279 : vector<8x16xf32>
    %281 = math.exp %280 : vector<8x16xf32>
    %cst_65 = arith.constant 1.000000e+00 : f32
    %282 = vector.broadcast %cst_65 : f32 to vector<8x16xf32>
    %283 = arith.addf %282, %281 : vector<8x16xf32>
    %284 = arith.divf %282, %283 : vector<8x16xf32>
    %c0_66 = arith.constant 0 : index
    %c0_67 = arith.constant 0 : index
    %285 = vector.load %arg8[%c0_66, %c0_67] : memref<8x16xf32, #tpu.memory_space<vmem>>, vector<8x16xf32>
    tpu.vector_store %arg8[%c0_66, %c0_67], %284 {strides = array<i32>} : memref<8x16xf32, #tpu.memory_space<vmem>>, vector<8x16xf32>,
    return
  }
  func.func @transform_0(%arg0: i32) -> (i32, i32) {
    %c0_i32 = arith.constant 0 : i32
    %c0_i32_0 = arith.constant 0 : i32
    %c0_i32_1 = arith.constant 0 : i32
    return %c0_i32, %c0_i32_0 : i32, i32
  }
  func.func @transform_1(%arg0: i32) -> (i32, i32) {
    %c0_i32 = arith.constant 0 : i32
    %c0_i32_0 = arith.constant 0 : i32
    return %c0_i32, %arg0 : i32, i32
  }
  func.func @transform_2(%arg0: i32) -> (i32, i32) {
    %c0_i32 = arith.constant 0 : i32
    %c0_i32_0 = arith.constant 0 : i32
    return %c0_i32, %arg0 : i32, i32
  }
  func.func @transform_3(%arg0: i32) -> (i32, i32) {
    %c0_i32 = arith.constant 0 : i32
    %c0_i32_0 = arith.constant 0 : i32
    return %c0_i32, %arg0 : i32, i32
  }
  func.func @transform_4(%arg0: i32) -> (i32, i32) {
    %c0_i32 = arith.constant 0 : i32
    %c0_i32_0 = arith.constant 0 : i32
    return %c0_i32, %arg0 : i32, i32
  }
  func.func @transform_5(%arg0: i32) -> (i32, i32) {
    %c0_i32 = arith.constant 0 : i32
    %c0_i32_0 = arith.constant 0 : i32
    return %arg0, %c0_i32 : i32, i32
  }
  func.func @transform_6(%arg0: i32) -> (i32, i32, i32) {
    %c0_i32 = arith.constant 0 : i32
    %c0_i32_0 = arith.constant 0 : i32
    %c0_i32_1 = arith.constant 0 : i32
    return %arg0, %c0_i32, %c0_i32_0 : i32, i32, i32
  }
  func.func @transform_7(%arg0: i32) -> (i32, i32) {
    %c0_i32 = arith.constant 0 : i32
    %c0_i32_0 = arith.constant 0 : i32
    return %c0_i32, %arg0 : i32, i32
  }
}

</mosaic_0001>

<llo_original>
// kernel: tpu_custom_call.1
$region0: #{tpu_custom_call.1}
  #allocation0 [shape = 'u32[]', space=smem, size = 0x4, offset = 0x4, fixed_abs, tag = 'smem constant byte address 0x4 - core index']
  #allocation1 [shape = 'u32[72,128]{1,0:T(1,128)}', space=vmem, size = 0x9000, scoped, tag = 'internal scratch']
  %s0 = inlined_call_operand.hbm [shape: f32[8,32], index: 0, kind: input, shape index: {}]
  %s1 = inlined_call_operand.hbm [shape: bf16[32,4096], index: 1, kind: input, shape index: {}]
  %s2 = inlined_call_operand.hbm [shape: f32[1,4096], index: 2, kind: input, shape index: {}]
  %s3 = inlined_call_operand.hbm [shape: bf16[256,4096], index: 3, kind: input, shape index: {}]
  %s4 = inlined_call_operand.hbm [shape: f32[1,4096], index: 4, kind: input, shape index: {}]
  %s5 = inlined_call_operand.hbm [shape: f32[16,256], index: 5, kind: input, shape index: {}]
  %s6 = inlined_call_operand.hbm [shape: f32[1,1,16], index: 6, kind: input, shape index: {}]
  %s7 = inlined_call_operand.hbm [shape: f32[8,16], index: 7, kind: output, shape index: {}]
  %s8 = sld [smem:[#allocation0]]
  $region66: #{tpu_custom_call.1} parent=0
    _
  %s10 = ssub.s32 1, %s8
  %s11 = scalar_select 0, %s10, %s8
  $region1: #{tpu_custom_call.1} parent=0
    #allocation2 [shape = 'u8[4096]{0}', space=vmem, size = 0x1000, scoped, tag = 'input window, operand 0, single buffered']
    #allocation3 [shape = 's32[1]{0}', space=sflag, size = 0x4, scoped, tag = 'scoped memory for tpu_custom_call.1']
    #allocation4 [shape = 's32[1]{0}', space=sflag, size = 0x4, scoped, tag = 'scoped memory for tpu_custom_call.1']
    #allocation5 [shape = 'u8[262144]{0}', space=vmem, size = 0x40000, scoped, tag = 'input window, operand 1, single buffered']
    #allocation6 [shape = 's32[1]{0}', space=sflag, size = 0x4, scoped, tag = 'scoped memory for tpu_custom_call.1']
    #allocation7 [shape = 'u8[16384]{0}', space=vmem, size = 0x4000, scoped, tag = 'input window, operand 2, single buffered']
    #allocation8 [shape = 'u8[2097152]{0}', space=vmem, size = 0x200000, scoped, tag = 'input window, operand 3, single buffered']
    #allocation9 [shape = 's32[1]{0}', space=sflag, size = 0x4, scoped, tag = 'scoped memory for tpu_custom_call.1']
    #allocation10 [shape = 'u8[16384]{0}', space=vmem, size = 0x4000, scoped, tag = 'input window, operand 4, single buffered']
    #allocation11 [shape = 'u8[16384]{0}', space=vmem, size = 0x4000, scoped, tag = 'input window, operand 5, single buffered']
    #allocation12 [shape = 's32[1]{0}', space=sflag, size = 0x4, scoped, tag = 'scoped memory for tpu_custom_call.1']
    #allocation13 [shape = 'u8[512]{0}', space=vmem, size = 0x400, scoped, tag = 'input window, operand 6, single buffered']
    #allocation14 [shape = 'u8[4096]{0}', space=vmem, size = 0x1000, scoped, tag = 'output window, operand 0, single buffered']
    %12 = vsyncpa [#allocation3], 0
    %13 = vsyncpa [#allocation6], 0
    %14 = vsyncpa [#allocation9], 0
    %15 = vsyncpa [#allocation12], 0
    %16 = vsyncpa [#allocation4], 0
    // Predicated region
    $region2: #{tpu_custom_call.1} parent=1 // pred_check
      _
    $region3: #{tpu_custom_call.1} parent=1 // pred_check_branch
      %18 = sbr.rel (0) target = $region5
    $region4: #{tpu_custom_call.1} parent=1 // pred_region
      %20 = vsyncadd [#allocation3], 0
      %s22 = sshll.u32 %s0, 4
      %s23 = int_to_ptr.hbm [resolvable:$true] %s22
      %s24 = sshll.u32 [#allocation2], 4
      %s25 = int_to_ptr.vmem [resolvable:$true] %s24
      %27 = dma.hbm_to_vmem [thread:$0]  %s23, 128, %s25, [#allocation3]
    $region5: #{tpu_custom_call.1} parent=1 // pred_fallthru
      _
    // Predicated region
    $region6: #{tpu_custom_call.1} parent=1 // pred_check
      _
    $region7: #{tpu_custom_call.1} parent=1 // pred_check_branch
      %29 = sbr.rel (0) target = $region9
    $region8: #{tpu_custom_call.1} parent=1 // pred_region
      %31 = vsyncadd [#allocation6], 0
      %s32 = sshll.u32 %s1, 4
      %s33 = int_to_ptr.hbm [resolvable:$true] %s32
      %s34 = sshll.u32 [#allocation5], 4
      %s35 = int_to_ptr.vmem [resolvable:$true] %s34
      %40 = dma.hbm_to_vmem [thread:$0]  %s33, 8192, %s35, [#allocation6], 2048, 2048, 128
    $region9: #{tpu_custom_call.1} parent=1 // pred_fallthru
      _
    // Predicated region
    $region10: #{tpu_custom_call.1} parent=1 // pred_check
      _
    $region11: #{tpu_custom_call.1} parent=1 // pred_check_branch
      %42 = sbr.rel (0) target = $region13
    $region12: #{tpu_custom_call.1} parent=1 // pred_region
      %44 = vsyncadd [#allocation6], 0
      %s46 = sshll.u32 %s2, 4
      %s47 = int_to_ptr.hbm [resolvable:$true] %s46
      %s48 = sshll.u32 [#allocation7], 4
      %s49 = int_to_ptr.vmem [resolvable:$true] %s48
      %51 = dma.hbm_to_vmem [thread:$0]  %s47, 512, %s49, [#allocation6]
    $region13: #{tpu_custom_call.1} parent=1 // pred_fallthru
      _
    // Predicated region
    $region14: #{tpu_custom_call.1} parent=1 // pred_check
      _
    $region15: #{tpu_custom_call.1} parent=1 // pred_check_branch
      %53 = sbr.rel (0) target = $region17
    $region16: #{tpu_custom_call.1} parent=1 // pred_region
      %55 = vsyncadd [#allocation9], 0
      %s56 = sshll.u32 %s3, 4
      %s57 = int_to_ptr.hbm [resolvable:$true] %s56
      %s58 = sshll.u32 [#allocation8], 4
      %s59 = int_to_ptr.vmem [resolvable:$true] %s58
      %64 = dma.hbm_to_vmem [thread:$0]  %s57, 65536, %s59, [#allocation9], 2048, 2048, 128
    $region17: #{tpu_custom_call.1} parent=1 // pred_fallthru
      _
    // Predicated region
    $region18: #{tpu_custom_call.1} parent=1 // pred_check
      _
    $region19: #{tpu_custom_call.1} parent=1 // pred_check_branch
      %66 = sbr.rel (0) target = $region21
    $region20: #{tpu_custom_call.1} parent=1 // pred_region
      %68 = vsyncadd [#allocation9], 0
      %s70 = sshll.u32 %s4, 4
      %s71 = int_to_ptr.hbm [resolvable:$true] %s70
      %s72 = sshll.u32 [#allocation10], 4
      %s73 = int_to_ptr.vmem [resolvable:$true] %s72
      %75 = dma.hbm_to_vmem [thread:$0]  %s71, 512, %s73, [#allocation9]
    $region21: #{tpu_custom_call.1} parent=1 // pred_fallthru
      _
    // Predicated region
    $region22: #{tpu_custom_call.1} parent=1 // pred_check
      _
    $region23: #{tpu_custom_call.1} parent=1 // pred_check_branch
      %77 = sbr.rel (0) target = $region25
    $region24: #{tpu_custom_call.1} parent=1 // pred_region
      %79 = vsyncadd [#allocation12], 0
      %s80 = sshll.u32 %s5, 4
      %s81 = int_to_ptr.hbm [resolvable:$true] %s80
      %s82 = sshll.u32 [#allocation11], 4
      %s83 = int_to_ptr.vmem [resolvable:$true] %s82
      %88 = dma.hbm_to_vmem [thread:$0]  %s81, 512, %s83, [#allocation12], 256, 256, 16
    $region25: #{tpu_custom_call.1} parent=1 // pred_fallthru
      _
    // Predicated region
    $region26: #{tpu_custom_call.1} parent=1 // pred_check
      _
    $region27: #{tpu_custom_call.1} parent=1 // pred_check_branch
      %90 = sbr.rel (0) target = $region29
    $region28: #{tpu_custom_call.1} parent=1 // pred_region
      %92 = vsyncadd [#allocation12], 0
      %s94 = sshll.u32 %s6, 4
      %s95 = int_to_ptr.hbm [resolvable:$true] %s94
      %s96 = sshll.u32 [#allocation13], 4
      %s97 = int_to_ptr.vmem [resolvable:$true] %s96
      %99 = dma.hbm_to_vmem [thread:$0]  %s95, 16, %s97, [#allocation12]
    $region29: #{tpu_custom_call.1} parent=1 // pred_fallthru
      _
    // Predicated region
    $region30: #{tpu_custom_call.1} parent=1 // pred_check
      _
    $region31: #{tpu_custom_call.1} parent=1 // pred_check_branch
      %101 = sbr.rel (0) target = $region33
    $region32: #{tpu_custom_call.1} parent=1 // pred_region
      %103 = dma.done [#allocation3], 128
    $region33: #{tpu_custom_call.1} parent=1 // pred_fallthru
      _
    // Predicated region
    $region34: #{tpu_custom_call.1} parent=1 // pred_check
      _
    $region35: #{tpu_custom_call.1} parent=1 // pred_check_branch
      %105 = sbr.rel (0) target = $region37
    $region36: #{tpu_custom_call.1} parent=1 // pred_region
      %107 = dma.done [#allocation6], 8192
    $region37: #{tpu_custom_call.1} parent=1 // pred_fallthru
      _
    // Predicated region
    $region38: #{tpu_custom_call.1} parent=1 // pred_check
      _
    $region39: #{tpu_custom_call.1} parent=1 // pred_check_branch
      %109 = sbr.rel (0) target = $region41
    $region40: #{tpu_custom_call.1} parent=1 // pred_region
      %111 = dma.done [#allocation6], 512
    $region41: #{tpu_custom_call.1} parent=1 // pred_fallthru
      _
    // Predicated region
    $region42: #{tpu_custom_call.1} parent=1 // pred_check
      _
    $region43: #{tpu_custom_call.1} parent=1 // pred_check_branch
      %113 = sbr.rel (0) target = $region45
    $region44: #{tpu_custom_call.1} parent=1 // pred_region
      %115 = dma.done [#allocation9], 65536
    $region45: #{tpu_custom_call.1} parent=1 // pred_fallthru
      _
    // Predicated region
    $region46: #{tpu_custom_call.1} parent=1 // pred_check
      _
    $region47: #{tpu_custom_call.1} parent=1 // pred_check_branch
      %117 = sbr.rel (0) target = $region49
    $region48: #{tpu_custom_call.1} parent=1 // pred_region
      %119 = dma.done [#allocation9], 512
    $region49: #{tpu_custom_call.1} parent=1 // pred_fallthru
      _
    // Predicated region
    $region50: #{tpu_custom_call.1} parent=1 // pred_check
      _
    $region51: #{tpu_custom_call.1} parent=1 // pred_check_branch
      %121 = sbr.rel (0) target = $region53
    $region52: #{tpu_custom_call.1} parent=1 // pred_region
      %123 = dma.done [#allocation12], 512
    $region53: #{tpu_custom_call.1} parent=1 // pred_fallthru
      _
    // Predicated region
    $region54: #{tpu_custom_call.1} parent=1 // pred_check
      _
    $region55: #{tpu_custom_call.1} parent=1 // pred_check_branch
      %125 = sbr.rel (0) target = $region57
    $region56: #{tpu_custom_call.1} parent=1 // pred_region
      %127 = dma.done [#allocation12], 16
    $region57: #{tpu_custom_call.1} parent=1 // pred_fallthru
      _
    %v129 = vld [vmem:[#allocation2] sm:$0xff]
    %v130 = vpack.c.bf16 %v129, %v129
    %v131 = vld [vmem:[#allocation5] sm:$0xff]
    %v132 = vld [vmem:[#allocation5 + $0x8] sm:$0xff]
    %v133 = vld [vmem:[#allocation5 + $0x10] sm:$0xff]
    %v134 = vld [vmem:[#allocation5 + $0x18] sm:$0xff]
    %v135 = vld [vmem:[#allocation5 + $0x20] sm:$0xff]
    %v136 = vld [vmem:[#allocation5 + $0x28] sm:$0xff]
    %v137 = vld [vmem:[#allocation5 + $0x30] sm:$0xff]
    %v138 = vld [vmem:[#allocation5 + $0x38] sm:$0xff]
    %v139 = vld [vmem:[#allocation5 + $0x40] sm:$0xff]
    %v140 = vld [vmem:[#allocation5 + $0x48] sm:$0xff]
    %v141 = vld [vmem:[#allocation5 + $0x50] sm:$0xff]
    %v142 = vld [vmem:[#allocation5 + $0x58] sm:$0xff]
    %v143 = vld [vmem:[#allocation5 + $0x60] sm:$0xff]
    %v144 = vld [vmem:[#allocation5 + $0x68] sm:$0xff]
    %v145 = vld [vmem:[#allocation5 + $0x70] sm:$0xff]
    %v146 = vld [vmem:[#allocation5 + $0x78] sm:$0xff]
    %v147 = vld [vmem:[#allocation5 + $0x80] sm:$0xff]
    %v148 = vld [vmem:[#allocation5 + $0x88] sm:$0xff]
    %v149 = vld [vmem:[#allocation5 + $0x90] sm:$0xff]
    %v150 = vld [vmem:[#allocation5 + $0x98] sm:$0xff]
    %v151 = vld [vmem:[#allocation5 + $0xa0] sm:$0xff]
    %v152 = vld [vmem:[#allocation5 + $0xa8] sm:$0xff]
    %v153 = vld [vmem:[#allocation5 + $0xb0] sm:$0xff]
    %v154 = vld [vmem:[#allocation5 + $0xb8] sm:$0xff]
    %v155 = vld [vmem:[#allocation5 + $0xc0] sm:$0xff]
    %v156 = vld [vmem:[#allocation5 + $0xc8] sm:$0xff]
    %v157 = vld [vmem:[#allocation5 + $0xd0] sm:$0xff]
    %v158 = vld [vmem:[#allocation5 + $0xd8] sm:$0xff]
    %v159 = vld [vmem:[#allocation5 + $0xe0] sm:$0xff]
    %v160 = vld [vmem:[#allocation5 + $0xe8] sm:$0xff]
    %v161 = vld [vmem:[#allocation5 + $0xf0] sm:$0xff]
    %v162 = vld [vmem:[#allocation5 + $0xf8] sm:$0xff]
    %v163 = vld [vmem:[#allocation5 + $0x100] sm:$0xff]
    %v164 = vld [vmem:[#allocation5 + $0x108] sm:$0xff]
    %v165 = vld [vmem:[#allocation5 + $0x110] sm:$0xff]
    %v166 = vld [vmem:[#allocation5 + $0x118] sm:$0xff]
    %v167 = vld [vmem:[#allocation5 + $0x120] sm:$0xff]
    %v168 = vld [vmem:[#allocation5 + $0x128] sm:$0xff]
    %v169 = vld [vmem:[#allocation5 + $0x130] sm:$0xff]
    %v170 = vld [vmem:[#allocation5 + $0x138] sm:$0xff]
    %v171 = vld [vmem:[#allocation5 + $0x140] sm:$0xff]
    %v172 = vld [vmem:[#allocation5 + $0x148] sm:$0xff]
    %v173 = vld [vmem:[#allocation5 + $0x150] sm:$0xff]
    %v174 = vld [vmem:[#allocation5 + $0x158] sm:$0xff]
    %v175 = vld [vmem:[#allocation5 + $0x160] sm:$0xff]
    %v176 = vld [vmem:[#allocation5 + $0x168] sm:$0xff]
    %v177 = vld [vmem:[#allocation5 + $0x170] sm:$0xff]
    %v178 = vld [vmem:[#allocation5 + $0x178] sm:$0xff]
    %v179 = vld [vmem:[#allocation5 + $0x180] sm:$0xff]
    %v180 = vld [vmem:[#allocation5 + $0x188] sm:$0xff]
    %v181 = vld [vmem:[#allocation5 + $0x190] sm:$0xff]
    %v182 = vld [vmem:[#allocation5 + $0x198] sm:$0xff]
    %v183 = vld [vmem:[#allocation5 + $0x1a0] sm:$0xff]
    %v184 = vld [vmem:[#allocation5 + $0x1a8] sm:$0xff]
    %v185 = vld [vmem:[#allocation5 + $0x1b0] sm:$0xff]
    %v186 = vld [vmem:[#allocation5 + $0x1b8] sm:$0xff]
    %v187 = vld [vmem:[#allocation5 + $0x1c0] sm:$0xff]
    %v188 = vld [vmem:[#allocation5 + $0x1c8] sm:$0xff]
    %v189 = vld [vmem:[#allocation5 + $0x1d0] sm:$0xff]
    %v190 = vld [vmem:[#allocation5 + $0x1d8] sm:$0xff]
    %v191 = vld [vmem:[#allocation5 + $0x1e0] sm:$0xff]
    %v192 = vld [vmem:[#allocation5 + $0x1e8] sm:$0xff]
    %v193 = vld [vmem:[#allocation5 + $0x1f0] sm:$0xff]
    %v194 = vld [vmem:[#allocation5 + $0x1f8] sm:$0xff]
    %v195 = vld [vmem:[#allocation7] sm:$0xff]
    %v196 = vld [vmem:[#allocation7 + $0x8] sm:$0xff]
    %v197 = vld [vmem:[#allocation7 + $0x10] sm:$0xff]
    %v198 = vld [vmem:[#allocation7 + $0x18] sm:$0xff]
    %v203 = vperm.slane %v195, 0
    %v204 = vperm.slane %v195, 1
    %v205 = vperm.slane %v195, 2
    %v206 = vperm.slane %v195, 3
    %v207 = vperm.slane %v195, 4
    %v208 = vperm.slane %v195, 5
    %v209 = vperm.slane %v195, 6
    %v210 = vperm.slane %v195, 7
    %v211 = vperm.slane %v196, 0
    %v212 = vperm.slane %v196, 1
    %v213 = vperm.slane %v196, 2
    %v214 = vperm.slane %v196, 3
    %v215 = vperm.slane %v196, 4
    %v216 = vperm.slane %v196, 5
    %v217 = vperm.slane %v196, 6
    %v218 = vperm.slane %v196, 7
    %v219 = vperm.slane %v197, 0
    %v220 = vperm.slane %v197, 1
    %v221 = vperm.slane %v197, 2
    %v222 = vperm.slane %v197, 3
    %v223 = vperm.slane %v197, 4
    %v224 = vperm.slane %v197, 5
    %v225 = vperm.slane %v197, 6
    %v226 = vperm.slane %v197, 7
    %v227 = vperm.slane %v198, 0
    %v228 = vperm.slane %v198, 1
    %v229 = vperm.slane %v198, 2
    %v230 = vperm.slane %v198, 3
    %v231 = vperm.slane %v198, 4
    %v232 = vperm.slane %v198, 5
    %v233 = vperm.slane %v198, 6
    %v234 = vperm.slane %v198, 7
    %v331 = vunpack.c.l.b16 %v131
    %v332 = vunpack.c.h.b16 %v131
    %v333 = vunpack.c.l.b16 %v132
    %v334 = vunpack.c.h.b16 %v132
    %v335 = vunpack.c.l.b16 %v133
    %v336 = vunpack.c.h.b16 %v133
    %v337 = vunpack.c.l.b16 %v134
    %v338 = vunpack.c.h.b16 %v134
    %v339 = vunpack.c.l.b16 %v135
    %v340 = vunpack.c.h.b16 %v135
    %v341 = vunpack.c.l.b16 %v136
    %v342 = vunpack.c.h.b16 %v136
    %v343 = vunpack.c.l.b16 %v137
    %v344 = vunpack.c.h.b16 %v137
    %v345 = vunpack.c.l.b16 %v138
    %v346 = vunpack.c.h.b16 %v138
    %v347 = vunpack.c.l.b16 %v139
    %v348 = vunpack.c.h.b16 %v139
    %v349 = vunpack.c.l.b16 %v140
    %v350 = vunpack.c.h.b16 %v140
    %v351 = vunpack.c.l.b16 %v141
    %v352 = vunpack.c.h.b16 %v141
    %v353 = vunpack.c.l.b16 %v142
    %v354 = vunpack.c.h.b16 %v142
    %v355 = vunpack.c.l.b16 %v143
    %v356 = vunpack.c.h.b16 %v143
    %v357 = vunpack.c.l.b16 %v144
    %v358 = vunpack.c.h.b16 %v144
    %v359 = vunpack.c.l.b16 %v145
    %v360 = vunpack.c.h.b16 %v145
    %v361 = vunpack.c.l.b16 %v146
    %v362 = vunpack.c.h.b16 %v146
    %v363 = vunpack.c.l.b16 %v147
    %v364 = vunpack.c.h.b16 %v147
    %v365 = vunpack.c.l.b16 %v148
    %v366 = vunpack.c.h.b16 %v148
    %v367 = vunpack.c.l.b16 %v149
    %v368 = vunpack.c.h.b16 %v149
    %v369 = vunpack.c.l.b16 %v150
    %v370 = vunpack.c.h.b16 %v150
    %v371 = vunpack.c.l.b16 %v151
    %v372 = vunpack.c.h.b16 %v151
    %v373 = vunpack.c.l.b16 %v152
    %v374 = vunpack.c.h.b16 %v152
    %v375 = vunpack.c.l.b16 %v153
    %v376 = vunpack.c.h.b16 %v153
    %v377 = vunpack.c.l.b16 %v154
    %v378 = vunpack.c.h.b16 %v154
    %v379 = vunpack.c.l.b16 %v155
    %v380 = vunpack.c.h.b16 %v155
    %v381 = vunpack.c.l.b16 %v156
    %v382 = vunpack.c.h.b16 %v156
    %v383 = vunpack.c.l.b16 %v157
    %v384 = vunpack.c.h.b16 %v157
    %v385 = vunpack.c.l.b16 %v158
    %v386 = vunpack.c.h.b16 %v158
    %v387 = vunpack.c.l.b16 %v159
    %v388 = vunpack.c.h.b16 %v159
    %v389 = vunpack.c.l.b16 %v160
    %v390 = vunpack.c.h.b16 %v160
    %v391 = vunpack.c.l.b16 %v161
    %v392 = vunpack.c.h.b16 %v161
    %v393 = vunpack.c.l.b16 %v162
    %v394 = vunpack.c.h.b16 %v162
    %v395 = vunpack.c.l.b16 %v163
    %v396 = vunpack.c.h.b16 %v163
    %v397 = vunpack.c.l.b16 %v164
    %v398 = vunpack.c.h.b16 %v164
    %v399 = vunpack.c.l.b16 %v165
    %v400 = vunpack.c.h.b16 %v165
    %v401 = vunpack.c.l.b16 %v166
    %v402 = vunpack.c.h.b16 %v166
    %v403 = vunpack.c.l.b16 %v167
    %v404 = vunpack.c.h.b16 %v167
    %v405 = vunpack.c.l.b16 %v168
    %v406 = vunpack.c.h.b16 %v168
    %v407 = vunpack.c.l.b16 %v169
    %v408 = vunpack.c.h.b16 %v169
    %v409 = vunpack.c.l.b16 %v170
    %v410 = vunpack.c.h.b16 %v170
    %v411 = vunpack.c.l.b16 %v171
    %v412 = vunpack.c.h.b16 %v171
    %v413 = vunpack.c.l.b16 %v172
    %v414 = vunpack.c.h.b16 %v172
    %v415 = vunpack.c.l.b16 %v173
    %v416 = vunpack.c.h.b16 %v173
    %v417 = vunpack.c.l.b16 %v174
    %v418 = vunpack.c.h.b16 %v174
    %v419 = vunpack.c.l.b16 %v175
    %v420 = vunpack.c.h.b16 %v175
    %v421 = vunpack.c.l.b16 %v176
    %v422 = vunpack.c.h.b16 %v176
    %v423 = vunpack.c.l.b16 %v177
    %v424 = vunpack.c.h.b16 %v177
    %v425 = vunpack.c.l.b16 %v178
    %v426 = vunpack.c.h.b16 %v178
    %v427 = vunpack.c.l.b16 %v179
    %v428 = vunpack.c.h.b16 %v179
    %v429 = vunpack.c.l.b16 %v180
    %v430 = vunpack.c.h.b16 %v180
    %v431 = vunpack.c.l.b16 %v181
    %v432 = vunpack.c.h.b16 %v181
    %v433 = vunpack.c.l.b16 %v182
    %v434 = vunpack.c.h.b16 %v182
    %v435 = vunpack.c.l.b16 %v183
    %v436 = vunpack.c.h.b16 %v183
    %v437 = vunpack.c.l.b16 %v184
    %v438 = vunpack.c.h.b16 %v184
    %v439 = vunpack.c.l.b16 %v185
    %v440 = vunpack.c.h.b16 %v185
    %v441 = vunpack.c.l.b16 %v186
    %v442 = vunpack.c.h.b16 %v186
    %v443 = vunpack.c.l.b16 %v187
    %v444 = vunpack.c.h.b16 %v187
    %v445 = vunpack.c.l.b16 %v188
    %v446 = vunpack.c.h.b16 %v188
    %v447 = vunpack.c.l.b16 %v189
    %v448 = vunpack.c.h.b16 %v189
    %v449 = vunpack.c.l.b16 %v190
    %v450 = vunpack.c.h.b16 %v190
    %v451 = vunpack.c.l.b16 %v191
    %v452 = vunpack.c.h.b16 %v191
    %v453 = vunpack.c.l.b16 %v192
    %v454 = vunpack.c.h.b16 %v192
    %v455 = vunpack.c.l.b16 %v193
    %v456 = vunpack.c.h.b16 %v193
    %v457 = vunpack.c.l.b16 %v194
    %v458 = vunpack.c.h.b16 %v194
    %v459 = vpack.c.b16 %v363, %v331
    %v460 = vpack.c.b16 %v364, %v332
    %v461 = vpack.c.b16 %v365, %v333
    %v462 = vpack.c.b16 %v366, %v334
    %v463 = vpack.c.b16 %v367, %v335
    %v464 = vpack.c.b16 %v368, %v336
    %v465 = vpack.c.b16 %v369, %v337
    %v466 = vpack.c.b16 %v370, %v338
    %v467 = vpack.c.b16 %v371, %v339
    %v468 = vpack.c.b16 %v372, %v340
    %v469 = vpack.c.b16 %v373, %v341
    %v470 = vpack.c.b16 %v374, %v342
    %v471 = vpack.c.b16 %v375, %v343
    %v472 = vpack.c.b16 %v376, %v344
    %v473 = vpack.c.b16 %v377, %v345
    %v474 = vpack.c.b16 %v378, %v346
    %v475 = vpack.c.b16 %v379, %v347
    %v476 = vpack.c.b16 %v380, %v348
    %v477 = vpack.c.b16 %v381, %v349
    %v478 = vpack.c.b16 %v382, %v350
    %v479 = vpack.c.b16 %v383, %v351
    %v480 = vpack.c.b16 %v384, %v352
    %v481 = vpack.c.b16 %v385, %v353
    %v482 = vpack.c.b16 %v386, %v354
    %v483 = vpack.c.b16 %v387, %v355
    %v484 = vpack.c.b16 %v388, %v356
    %v485 = vpack.c.b16 %v389, %v357
    %v486 = vpack.c.b16 %v390, %v358
    %v487 = vpack.c.b16 %v391, %v359
    %v488 = vpack.c.b16 %v392, %v360
    %v489 = vpack.c.b16 %v393, %v361
    %v490 = vpack.c.b16 %v394, %v362
    %v491 = vpack.c.b16 %v427, %v395
    %v492 = vpack.c.b16 %v428, %v396
    %v493 = vpack.c.b16 %v429, %v397
    %v494 = vpack.c.b16 %v430, %v398
    %v495 = vpack.c.b16 %v431, %v399
    %v496 = vpack.c.b16 %v432, %v400
    %v497 = vpack.c.b16 %v433, %v401
    %v498 = vpack.c.b16 %v434, %v402
    %v499 = vpack.c.b16 %v435, %v403
    %v500 = vpack.c.b16 %v436, %v404
    %v501 = vpack.c.b16 %v437, %v405
    %v502 = vpack.c.b16 %v438, %v406
    %v503 = vpack.c.b16 %v439, %v407
    %v504 = vpack.c.b16 %v440, %v408
    %v505 = vpack.c.b16 %v441, %v409
    %v506 = vpack.c.b16 %v442, %v410
    %v507 = vpack.c.b16 %v443, %v411
    %v508 = vpack.c.b16 %v444, %v412
    %v509 = vpack.c.b16 %v445, %v413
    %v510 = vpack.c.b16 %v446, %v414
    %v511 = vpack.c.b16 %v447, %v415
    %v512 = vpack.c.b16 %v448, %v416
    %v513 = vpack.c.b16 %v449, %v417
    %v514 = vpack.c.b16 %v450, %v418
    %v515 = vpack.c.b16 %v451, %v419
    %v516 = vpack.c.b16 %v452, %v420
    %v517 = vpack.c.b16 %v453, %v421
    %v518 = vpack.c.b16 %v454, %v422
    %v519 = vpack.c.b16 %v455, %v423
    %v520 = vpack.c.b16 %v456, %v424
    %v521 = vpack.c.b16 %v457, %v425
    %v522 = vpack.c.b16 %v458, %v426
    %vm587 = vcmask 261120
    %v589 = vsel %vm587, %v130, 0
    %591 = vmatpush.bf16.msra.mxu0 0
    %592 = vmatpush.bf16.msra.mxu0 0
    %593 = vmatpush.bf16.msra.mxu0 0
    %594 = vmatpush.bf16.msra.mxu0 0
    %595 = vmatpush.bf16.msra.mxu0 0
    %596 = vmatpush.bf16.msra.mxu0 0
    %597 = vmatpush.bf16.msra.mxu0 %v491
    %598 = vmatpush.bf16.msra.mxu0 %v459
    %599 = vmatmul.bf16.gmra.mxu0 %v589
    %v600 = vpop.f32.mrf.mxu0
    %v601 = vadd.f32 %v203, %v600
    %v602 = vpop.f32.mrf.mxu0
    %603 = vdwg.mxu0
    %604 = vmatpush.bf16.msra.mxu0 0
    %605 = vmatpush.bf16.msra.mxu0 0
    %606 = vmatpush.bf16.msra.mxu0 0
    %607 = vmatpush.bf16.msra.mxu0 0
    %608 = vmatpush.bf16.msra.mxu0 0
    %609 = vmatpush.bf16.msra.mxu0 0
    %610 = vmatpush.bf16.msra.mxu0 %v492
    %611 = vmatpush.bf16.msra.mxu0 %v460
    %612 = vmatmul.bf16.gmra.mxu0 %v589
    %v613 = vpop.f32.mrf.mxu0
    %v614 = vadd.f32 %v204, %v613
    %v615 = vpop.f32.mrf.mxu0
    %616 = vdwg.mxu0
    %617 = vmatpush.bf16.msra.mxu0 0
    %618 = vmatpush.bf16.msra.mxu0 0
    %619 = vmatpush.bf16.msra.mxu0 0
    %620 = vmatpush.bf16.msra.mxu0 0
    %621 = vmatpush.bf16.msra.mxu0 0
    %622 = vmatpush.bf16.msra.mxu0 0
    %623 = vmatpush.bf16.msra.mxu0 %v493
    %624 = vmatpush.bf16.msra.mxu0 %v461
    %625 = vmatmul.bf16.gmra.mxu0 %v589
    %v626 = vpop.f32.mrf.mxu0
    %v627 = vadd.f32 %v205, %v626
    %v628 = vpop.f32.mrf.mxu0
    %629 = vdwg.mxu0
    %630 = vmatpush.bf16.msra.mxu0 0
    %631 = vmatpush.bf16.msra.mxu0 0
    %632 = vmatpush.bf16.msra.mxu0 0
    %633 = vmatpush.bf16.msra.mxu0 0
    %634 = vmatpush.bf16.msra.mxu0 0
    %635 = vmatpush.bf16.msra.mxu0 0
    %636 = vmatpush.bf16.msra.mxu0 %v494
    %637 = vmatpush.bf16.msra.mxu0 %v462
    %638 = vmatmul.bf16.gmra.mxu0 %v589
    %v639 = vpop.f32.mrf.mxu0
    %v640 = vadd.f32 %v206, %v639
    %v641 = vpop.f32.mrf.mxu0
    %642 = vdwg.mxu0
    %643 = vmatpush.bf16.msra.mxu0 0
    %644 = vmatpush.bf16.msra.mxu0 0
    %645 = vmatpush.bf16.msra.mxu0 0
    %646 = vmatpush.bf16.msra.mxu0 0
    %647 = vmatpush.bf16.msra.mxu0 0
    %648 = vmatpush.bf16.msra.mxu0 0
    %649 = vmatpush.bf16.msra.mxu0 %v495
    %650 = vmatpush.bf16.msra.mxu0 %v463
    %651 = vmatmul.bf16.gmra.mxu0 %v589
    %v652 = vpop.f32.mrf.mxu0
    %v653 = vadd.f32 %v207, %v652
    %v654 = vpop.f32.mrf.mxu0
    %655 = vdwg.mxu0
    %656 = vmatpush.bf16.msra.mxu0 0
    %657 = vmatpush.bf16.msra.mxu0 0
    %658 = vmatpush.bf16.msra.mxu0 0
    %659 = vmatpush.bf16.msra.mxu0 0
    %660 = vmatpush.bf16.msra.mxu0 0
    %661 = vmatpush.bf16.msra.mxu0 0
    %662 = vmatpush.bf16.msra.mxu0 %v496
    %663 = vmatpush.bf16.msra.mxu0 %v464
    %664 = vmatmul.bf16.gmra.mxu0 %v589
    %v665 = vpop.f32.mrf.mxu0
    %v666 = vadd.f32 %v208, %v665
    %v667 = vpop.f32.mrf.mxu0
    %668 = vdwg.mxu0
    %669 = vmatpush.bf16.msra.mxu0 0
    %670 = vmatpush.bf16.msra.mxu0 0
    %671 = vmatpush.bf16.msra.mxu0 0
    %672 = vmatpush.bf16.msra.mxu0 0
    %673 = vmatpush.bf16.msra.mxu0 0
    %674 = vmatpush.bf16.msra.mxu0 0
    %675 = vmatpush.bf16.msra.mxu0 %v497
    %676 = vmatpush.bf16.msra.mxu0 %v465
    %677 = vmatmul.bf16.gmra.mxu0 %v589
    %v678 = vpop.f32.mrf.mxu0
    %v679 = vadd.f32 %v209, %v678
    %v680 = vpop.f32.mrf.mxu0
    %681 = vdwg.mxu0
    %682 = vmatpush.bf16.msra.mxu0 0
    %683 = vmatpush.bf16.msra.mxu0 0
    %684 = vmatpush.bf16.msra.mxu0 0
    %685 = vmatpush.bf16.msra.mxu0 0
    %686 = vmatpush.bf16.msra.mxu0 0
    %687 = vmatpush.bf16.msra.mxu0 0
    %688 = vmatpush.bf16.msra.mxu0 %v498
    %689 = vmatpush.bf16.msra.mxu0 %v466
    %690 = vmatmul.bf16.gmra.mxu0 %v589
    %v691 = vpop.f32.mrf.mxu0
    %v692 = vadd.f32 %v210, %v691
    %v693 = vpop.f32.mrf.mxu0
    %694 = vdwg.mxu0
    %695 = vmatpush.bf16.msra.mxu0 0
    %696 = vmatpush.bf16.msra.mxu0 0
    %697 = vmatpush.bf16.msra.mxu0 0
    %698 = vmatpush.bf16.msra.mxu0 0
    %699 = vmatpush.bf16.msra.mxu0 0
    %700 = vmatpush.bf16.msra.mxu0 0
    %701 = vmatpush.bf16.msra.mxu0 %v499
    %702 = vmatpush.bf16.msra.mxu0 %v467
    %703 = vmatmul.bf16.gmra.mxu0 %v589
    %v704 = vpop.f32.mrf.mxu0
    %v705 = vadd.f32 %v211, %v704
    %v706 = vpop.f32.mrf.mxu0
    %707 = vdwg.mxu0
    %708 = vmatpush.bf16.msra.mxu0 0
    %709 = vmatpush.bf16.msra.mxu0 0
    %710 = vmatpush.bf16.msra.mxu0 0
    %711 = vmatpush.bf16.msra.mxu0 0
    %712 = vmatpush.bf16.msra.mxu0 0
    %713 = vmatpush.bf16.msra.mxu0 0
    %714 = vmatpush.bf16.msra.mxu0 %v500
    %715 = vmatpush.bf16.msra.mxu0 %v468
    %716 = vmatmul.bf16.gmra.mxu0 %v589
    %v717 = vpop.f32.mrf.mxu0
    %v718 = vadd.f32 %v212, %v717
    %v719 = vpop.f32.mrf.mxu0
    %720 = vdwg.mxu0
    %721 = vmatpush.bf16.msra.mxu0 0
    %722 = vmatpush.bf16.msra.mxu0 0
    %723 = vmatpush.bf16.msra.mxu0 0
    %724 = vmatpush.bf16.msra.mxu0 0
    %725 = vmatpush.bf16.msra.mxu0 0
    %726 = vmatpush.bf16.msra.mxu0 0
    %727 = vmatpush.bf16.msra.mxu0 %v501
    %728 = vmatpush.bf16.msra.mxu0 %v469
    %729 = vmatmul.bf16.gmra.mxu0 %v589
    %v730 = vpop.f32.mrf.mxu0
    %v731 = vadd.f32 %v213, %v730
    %v732 = vpop.f32.mrf.mxu0
    %733 = vdwg.mxu0
    %734 = vmatpush.bf16.msra.mxu0 0
    %735 = vmatpush.bf16.msra.mxu0 0
    %736 = vmatpush.bf16.msra.mxu0 0
    %737 = vmatpush.bf16.msra.mxu0 0
    %738 = vmatpush.bf16.msra.mxu0 0
    %739 = vmatpush.bf16.msra.mxu0 0
    %740 = vmatpush.bf16.msra.mxu0 %v502
    %741 = vmatpush.bf16.msra.mxu0 %v470
    %742 = vmatmul.bf16.gmra.mxu0 %v589
    %v743 = vpop.f32.mrf.mxu0
    %v744 = vadd.f32 %v214, %v743
    %v745 = vpop.f32.mrf.mxu0
    %746 = vdwg.mxu0
    %747 = vmatpush.bf16.msra.mxu0 0
    %748 = vmatpush.bf16.msra.mxu0 0
    %749 = vmatpush.bf16.msra.mxu0 0
    %750 = vmatpush.bf16.msra.mxu0 0
    %751 = vmatpush.bf16.msra.mxu0 0
    %752 = vmatpush.bf16.msra.mxu0 0
    %753 = vmatpush.bf16.msra.mxu0 %v503
    %754 = vmatpush.bf16.msra.mxu0 %v471
    %755 = vmatmul.bf16.gmra.mxu0 %v589
    %v756 = vpop.f32.mrf.mxu0
    %v757 = vadd.f32 %v215, %v756
    %v758 = vpop.f32.mrf.mxu0
    %759 = vdwg.mxu0
    %760 = vmatpush.bf16.msra.mxu0 0
    %761 = vmatpush.bf16.msra.mxu0 0
    %762 = vmatpush.bf16.msra.mxu0 0
    %763 = vmatpush.bf16.msra.mxu0 0
    %764 = vmatpush.bf16.msra.mxu0 0
    %765 = vmatpush.bf16.msra.mxu0 0
    %766 = vmatpush.bf16.msra.mxu0 %v504
    %767 = vmatpush.bf16.msra.mxu0 %v472
    %768 = vmatmul.bf16.gmra.mxu0 %v589
    %v769 = vpop.f32.mrf.mxu0
    %v770 = vadd.f32 %v216, %v769
    %v771 = vpop.f32.mrf.mxu0
    %772 = vdwg.mxu0
    %773 = vmatpush.bf16.msra.mxu0 0
    %774 = vmatpush.bf16.msra.mxu0 0
    %775 = vmatpush.bf16.msra.mxu0 0
    %776 = vmatpush.bf16.msra.mxu0 0
    %777 = vmatpush.bf16.msra.mxu0 0
    %778 = vmatpush.bf16.msra.mxu0 0
    %779 = vmatpush.bf16.msra.mxu0 %v505
    %780 = vmatpush.bf16.msra.mxu0 %v473
    %781 = vmatmul.bf16.gmra.mxu0 %v589
    %v782 = vpop.f32.mrf.mxu0
    %v783 = vadd.f32 %v217, %v782
    %v784 = vpop.f32.mrf.mxu0
    %785 = vdwg.mxu0
    %786 = vmatpush.bf16.msra.mxu0 0
    %787 = vmatpush.bf16.msra.mxu0 0
    %788 = vmatpush.bf16.msra.mxu0 0
    %789 = vmatpush.bf16.msra.mxu0 0
    %790 = vmatpush.bf16.msra.mxu0 0
    %791 = vmatpush.bf16.msra.mxu0 0
    %792 = vmatpush.bf16.msra.mxu0 %v506
    %793 = vmatpush.bf16.msra.mxu0 %v474
    %794 = vmatmul.bf16.gmra.mxu0 %v589
    %v795 = vpop.f32.mrf.mxu0
    %v796 = vadd.f32 %v218, %v795
    %v797 = vpop.f32.mrf.mxu0
    %798 = vdwg.mxu0
    %799 = vmatpush.bf16.msra.mxu0 0
    %800 = vmatpush.bf16.msra.mxu0 0
    %801 = vmatpush.bf16.msra.mxu0 0
    %802 = vmatpush.bf16.msra.mxu0 0
    %803 = vmatpush.bf16.msra.mxu0 0
    %804 = vmatpush.bf16.msra.mxu0 0
    %805 = vmatpush.bf16.msra.mxu0 %v507
    %806 = vmatpush.bf16.msra.mxu0 %v475
    %807 = vmatmul.bf16.gmra.mxu0 %v589
    %v808 = vpop.f32.mrf.mxu0
    %v809 = vadd.f32 %v219, %v808
    %v810 = vpop.f32.mrf.mxu0
    %811 = vdwg.mxu0
    %812 = vmatpush.bf16.msra.mxu0 0
    %813 = vmatpush.bf16.msra.mxu0 0
    %814 = vmatpush.bf16.msra.mxu0 0
    %815 = vmatpush.bf16.msra.mxu0 0
    %816 = vmatpush.bf16.msra.mxu0 0
    %817 = vmatpush.bf16.msra.mxu0 0
    %818 = vmatpush.bf16.msra.mxu0 %v508
    %819 = vmatpush.bf16.msra.mxu0 %v476
    %820 = vmatmul.bf16.gmra.mxu0 %v589
    %v821 = vpop.f32.mrf.mxu0
    %v822 = vadd.f32 %v220, %v821
    %v823 = vpop.f32.mrf.mxu0
    %824 = vdwg.mxu0
    %825 = vmatpush.bf16.msra.mxu0 0
    %826 = vmatpush.bf16.msra.mxu0 0
    %827 = vmatpush.bf16.msra.mxu0 0
    %828 = vmatpush.bf16.msra.mxu0 0
    %829 = vmatpush.bf16.msra.mxu0 0
    %830 = vmatpush.bf16.msra.mxu0 0
    %831 = vmatpush.bf16.msra.mxu0 %v509
    %832 = vmatpush.bf16.msra.mxu0 %v477
    %833 = vmatmul.bf16.gmra.mxu0 %v589
    %v834 = vpop.f32.mrf.mxu0
    %v835 = vadd.f32 %v221, %v834
    %v836 = vpop.f32.mrf.mxu0
    %837 = vdwg.mxu0
    %838 = vmatpush.bf16.msra.mxu0 0
    %839 = vmatpush.bf16.msra.mxu0 0
    %840 = vmatpush.bf16.msra.mxu0 0
    %841 = vmatpush.bf16.msra.mxu0 0
    %842 = vmatpush.bf16.msra.mxu0 0
    %843 = vmatpush.bf16.msra.mxu0 0
    %844 = vmatpush.bf16.msra.mxu0 %v510
    %845 = vmatpush.bf16.msra.mxu0 %v478
    %846 = vmatmul.bf16.gmra.mxu0 %v589
    %v847 = vpop.f32.mrf.mxu0
    %v848 = vadd.f32 %v222, %v847
    %v849 = vpop.f32.mrf.mxu0
    %850 = vdwg.mxu0
    %851 = vmatpush.bf16.msra.mxu0 0
    %852 = vmatpush.bf16.msra.mxu0 0
    %853 = vmatpush.bf16.msra.mxu0 0
    %854 = vmatpush.bf16.msra.mxu0 0
    %855 = vmatpush.bf16.msra.mxu0 0
    %856 = vmatpush.bf16.msra.mxu0 0
    %857 = vmatpush.bf16.msra.mxu0 %v511
    %858 = vmatpush.bf16.msra.mxu0 %v479
    %859 = vmatmul.bf16.gmra.mxu0 %v589
    %v860 = vpop.f32.mrf.mxu0
    %v861 = vadd.f32 %v223, %v860
    %v862 = vpop.f32.mrf.mxu0
    %863 = vdwg.mxu0
    %864 = vmatpush.bf16.msra.mxu0 0
    %865 = vmatpush.bf16.msra.mxu0 0
    %866 = vmatpush.bf16.msra.mxu0 0
    %867 = vmatpush.bf16.msra.mxu0 0
    %868 = vmatpush.bf16.msra.mxu0 0
    %869 = vmatpush.bf16.msra.mxu0 0
    %870 = vmatpush.bf16.msra.mxu0 %v512
    %871 = vmatpush.bf16.msra.mxu0 %v480
    %872 = vmatmul.bf16.gmra.mxu0 %v589
    %v873 = vpop.f32.mrf.mxu0
    %v874 = vadd.f32 %v224, %v873
    %v875 = vpop.f32.mrf.mxu0
    %876 = vdwg.mxu0
    %877 = vmatpush.bf16.msra.mxu0 0
    %878 = vmatpush.bf16.msra.mxu0 0
    %879 = vmatpush.bf16.msra.mxu0 0
    %880 = vmatpush.bf16.msra.mxu0 0
    %881 = vmatpush.bf16.msra.mxu0 0
    %882 = vmatpush.bf16.msra.mxu0 0
    %883 = vmatpush.bf16.msra.mxu0 %v513
    %884 = vmatpush.bf16.msra.mxu0 %v481
    %885 = vmatmul.bf16.gmra.mxu0 %v589
    %v886 = vpop.f32.mrf.mxu0
    %v887 = vadd.f32 %v225, %v886
    %v888 = vpop.f32.mrf.mxu0
    %889 = vdwg.mxu0
    %890 = vmatpush.bf16.msra.mxu0 0
    %891 = vmatpush.bf16.msra.mxu0 0
    %892 = vmatpush.bf16.msra.mxu0 0
    %893 = vmatpush.bf16.msra.mxu0 0
    %894 = vmatpush.bf16.msra.mxu0 0
    %895 = vmatpush.bf16.msra.mxu0 0
    %896 = vmatpush.bf16.msra.mxu0 %v514
    %897 = vmatpush.bf16.msra.mxu0 %v482
    %898 = vmatmul.bf16.gmra.mxu0 %v589
    %v899 = vpop.f32.mrf.mxu0
    %v900 = vadd.f32 %v226, %v899
    %v901 = vpop.f32.mrf.mxu0
    %902 = vdwg.mxu0
    %903 = vmatpush.bf16.msra.mxu0 0
    %904 = vmatpush.bf16.msra.mxu0 0
    %905 = vmatpush.bf16.msra.mxu0 0
    %906 = vmatpush.bf16.msra.mxu0 0
    %907 = vmatpush.bf16.msra.mxu0 0
    %908 = vmatpush.bf16.msra.mxu0 0
    %909 = vmatpush.bf16.msra.mxu0 %v515
    %910 = vmatpush.bf16.msra.mxu0 %v483
    %911 = vmatmul.bf16.gmra.mxu0 %v589
    %v912 = vpop.f32.mrf.mxu0
    %v913 = vadd.f32 %v227, %v912
    %v914 = vpop.f32.mrf.mxu0
    %915 = vdwg.mxu0
    %916 = vmatpush.bf16.msra.mxu0 0
    %917 = vmatpush.bf16.msra.mxu0 0
    %918 = vmatpush.bf16.msra.mxu0 0
    %919 = vmatpush.bf16.msra.mxu0 0
    %920 = vmatpush.bf16.msra.mxu0 0
    %921 = vmatpush.bf16.msra.mxu0 0
    %922 = vmatpush.bf16.msra.mxu0 %v516
    %923 = vmatpush.bf16.msra.mxu0 %v484
    %924 = vmatmul.bf16.gmra.mxu0 %v589
    %v925 = vpop.f32.mrf.mxu0
    %v926 = vadd.f32 %v228, %v925
    %v927 = vpop.f32.mrf.mxu0
    %928 = vdwg.mxu0
    %929 = vmatpush.bf16.msra.mxu0 0
    %930 = vmatpush.bf16.msra.mxu0 0
    %931 = vmatpush.bf16.msra.mxu0 0
    %932 = vmatpush.bf16.msra.mxu0 0
    %933 = vmatpush.bf16.msra.mxu0 0
    %934 = vmatpush.bf16.msra.mxu0 0
    %935 = vmatpush.bf16.msra.mxu0 %v517
    %936 = vmatpush.bf16.msra.mxu0 %v485
    %937 = vmatmul.bf16.gmra.mxu0 %v589
    %v938 = vpop.f32.mrf.mxu0
    %v939 = vadd.f32 %v229, %v938
    %v940 = vpop.f32.mrf.mxu0
    %941 = vdwg.mxu0
    %942 = vmatpush.bf16.msra.mxu0 0
    %943 = vmatpush.bf16.msra.mxu0 0
    %944 = vmatpush.bf16.msra.mxu0 0
    %945 = vmatpush.bf16.msra.mxu0 0
    %946 = vmatpush.bf16.msra.mxu0 0
    %947 = vmatpush.bf16.msra.mxu0 0
    %948 = vmatpush.bf16.msra.mxu0 %v518
    %949 = vmatpush.bf16.msra.mxu0 %v486
    %950 = vmatmul.bf16.gmra.mxu0 %v589
    %v951 = vpop.f32.mrf.mxu0
    %v952 = vadd.f32 %v230, %v951
    %v953 = vpop.f32.mrf.mxu0
    %954 = vdwg.mxu0
    %955 = vmatpush.bf16.msra.mxu0 0
    %956 = vmatpush.bf16.msra.mxu0 0
    %957 = vmatpush.bf16.msra.mxu0 0
    %958 = vmatpush.bf16.msra.mxu0 0
    %959 = vmatpush.bf16.msra.mxu0 0
    %960 = vmatpush.bf16.msra.mxu0 0
    %961 = vmatpush.bf16.msra.mxu0 %v519
    %962 = vmatpush.bf16.msra.mxu0 %v487
    %963 = vmatmul.bf16.gmra.mxu0 %v589
    %v964 = vpop.f32.mrf.mxu0
    %v965 = vadd.f32 %v231, %v964
    %v966 = vpop.f32.mrf.mxu0
    %967 = vdwg.mxu0
    %968 = vmatpush.bf16.msra.mxu0 0
    %969 = vmatpush.bf16.msra.mxu0 0
    %970 = vmatpush.bf16.msra.mxu0 0
    %971 = vmatpush.bf16.msra.mxu0 0
    %972 = vmatpush.bf16.msra.mxu0 0
    %973 = vmatpush.bf16.msra.mxu0 0
    %974 = vmatpush.bf16.msra.mxu0 %v520
    %975 = vmatpush.bf16.msra.mxu0 %v488
    %976 = vmatmul.bf16.gmra.mxu0 %v589
    %v977 = vpop.f32.mrf.mxu0
    %v978 = vadd.f32 %v232, %v977
    %v979 = vpop.f32.mrf.mxu0
    %980 = vdwg.mxu0
    %981 = vmatpush.bf16.msra.mxu0 0
    %982 = vmatpush.bf16.msra.mxu0 0
    %983 = vmatpush.bf16.msra.mxu0 0
    %984 = vmatpush.bf16.msra.mxu0 0
    %985 = vmatpush.bf16.msra.mxu0 0
    %986 = vmatpush.bf16.msra.mxu0 0
    %987 = vmatpush.bf16.msra.mxu0 %v521
    %988 = vmatpush.bf16.msra.mxu0 %v489
    %989 = vmatmul.bf16.gmra.mxu0 %v589
    %v990 = vpop.f32.mrf.mxu0
    %v991 = vadd.f32 %v233, %v990
    %v992 = vpop.f32.mrf.mxu0
    %993 = vdwg.mxu0
    %994 = vmatpush.bf16.msra.mxu0 0
    %995 = vmatpush.bf16.msra.mxu0 0
    %996 = vmatpush.bf16.msra.mxu0 0
    %997 = vmatpush.bf16.msra.mxu0 0
    %998 = vmatpush.bf16.msra.mxu0 0
    %999 = vmatpush.bf16.msra.mxu0 0
    %1000 = vmatpush.bf16.msra.mxu0 %v522
    %1001 = vmatpush.bf16.msra.mxu0 %v490
    %1002 = vmatmul.bf16.gmra.mxu0 %v589
    %v1003 = vpop.f32.mrf.mxu0
    %v1004 = vadd.f32 %v234, %v1003
    %v1005 = vpop.f32.mrf.mxu0
    %1006 = vdwg.mxu0
    %v1007 = vmax.f32 %v601, 0.0
    %v1008 = vmax.f32 %v614, 0.0
    %v1009 = vmax.f32 %v627, 0.0
    %v1010 = vmax.f32 %v640, 0.0
    %v1011 = vmax.f32 %v653, 0.0
    %v1012 = vmax.f32 %v666, 0.0
    %v1013 = vmax.f32 %v679, 0.0
    %v1014 = vmax.f32 %v692, 0.0
    %v1015 = vmax.f32 %v705, 0.0
    %v1016 = vmax.f32 %v718, 0.0
    %v1017 = vmax.f32 %v731, 0.0
    %v1018 = vmax.f32 %v744, 0.0
    %v1019 = vmax.f32 %v757, 0.0
    %v1020 = vmax.f32 %v770, 0.0
    %v1021 = vmax.f32 %v783, 0.0
    %v1022 = vmax.f32 %v796, 0.0
    %v1023 = vmax.f32 %v809, 0.0
    %v1024 = vmax.f32 %v822, 0.0
    %v1025 = vmax.f32 %v835, 0.0
    %v1026 = vmax.f32 %v848, 0.0
    %v1027 = vmax.f32 %v861, 0.0
    %v1028 = vmax.f32 %v874, 0.0
    %v1029 = vmax.f32 %v887, 0.0
    %v1030 = vmax.f32 %v900, 0.0
    %v1031 = vmax.f32 %v913, 0.0
    %v1032 = vmax.f32 %v926, 0.0
    %v1033 = vmax.f32 %v939, 0.0
    %v1034 = vmax.f32 %v952, 0.0
    %v1035 = vmax.f32 %v965, 0.0
    %v1036 = vmax.f32 %v978, 0.0
    %v1037 = vmax.f32 %v991, 0.0
    %v1038 = vmax.f32 %v1004, 0.0
    %v1039 = vpack.c.bf16 %v1009, %v1007
    %v1040 = vpack.c.bf16 %v1010, %v1008
    %v1041 = vpack.c.bf16 %v1013, %v1011
    %v1042 = vpack.c.bf16 %v1014, %v1012
    %v1043 = vpack.c.bf16 %v1017, %v1015
    %v1044 = vpack.c.bf16 %v1018, %v1016
    %v1045 = vpack.c.bf16 %v1021, %v1019
    %v1046 = vpack.c.bf16 %v1022, %v1020
    %v1047 = vpack.c.bf16 %v1025, %v1023
    %v1048 = vpack.c.bf16 %v1026, %v1024
    %v1049 = vpack.c.bf16 %v1029, %v1027
    %v1050 = vpack.c.bf16 %v1030, %v1028
    %v1051 = vpack.c.bf16 %v1033, %v1031
    %v1052 = vpack.c.bf16 %v1034, %v1032
    %v1053 = vpack.c.bf16 %v1037, %v1035
    %v1054 = vpack.c.bf16 %v1038, %v1036
    %v1055 = vld [vmem:[#allocation8] sm:$0xff]
    %v1056 = vld [vmem:[#allocation8 + $0x8] sm:$0xff]
    %v1057 = vld [vmem:[#allocation8 + $0x10] sm:$0xff]
    %v1058 = vld [vmem:[#allocation8 + $0x18] sm:$0xff]
    %v1059 = vld [vmem:[#allocation8 + $0x20] sm:$0xff]
    %v1060 = vld [vmem:[#allocation8 + $0x28] sm:$0xff]
    %v1061 = vld [vmem:[#allocation8 + $0x30] sm:$0xff]
    %v1062 = vld [vmem:[#allocation8 + $0x38] sm:$0xff]
    %v1063 = vld [vmem:[#allocation8 + $0x40] sm:$0xff]
    %v1064 = vld [vmem:[#allocation8 + $0x48] sm:$0xff]
    %v1065 = vld [vmem:[#allocation8 + $0x50] sm:$0xff]
    %v1066 = vld [vmem:[#allocation8 + $0x58] sm:$0xff]
    %v1067 = vld [vmem:[#allocation8 + $0x60] sm:$0xff]
    %v1068 = vld [vmem:[#allocation8 + $0x68] sm:$0xff]
    %v1069 = vld [vmem:[#allocation8 + $0x70] sm:$0xff]
    %v1070 = vld [vmem:[#allocation8 + $0x78] sm:$0xff]
    %v1071 = vld [vmem:[#allocation8 + $0x80] sm:$0xff]
    %v1072 = vld [vmem:[#allocation8 + $0x88] sm:$0xff]
    %v1073 = vld [vmem:[#allocation8 + $0x90] sm:$0xff]
    %v1074 = vld [vmem:[#allocation8 + $0x98] sm:$0xff]
    %v1075 = vld [vmem:[#allocation8 + $0xa0] sm:$0xff]
    %v1076 = vld [vmem:[#allocation8 + $0xa8] sm:$0xff]
    %v1077 = vld [vmem:[#allocation8 + $0xb0] sm:$0xff]
    %v1078 = vld [vmem:[#allocation8 + $0xb8] sm:$0xff]
    %v1079 = vld [vmem:[#allocation8 + $0xc0] sm:$0xff]
    %v1080 = vld [vmem:[#allocation8 + $0xc8] sm:$0xff]
    %v1081 = vld [vmem:[#allocation8 + $0xd0] sm:$0xff]
    %v1082 = vld [vmem:[#allocation8 + $0xd8] sm:$0xff]
    %v1083 = vld [vmem:[#allocation8 + $0xe0] sm:$0xff]
    %v1084 = vld [vmem:[#allocation8 + $0xe8] sm:$0xff]
    %v1085 = vld [vmem:[#allocation8 + $0xf0] sm:$0xff]
    %v1086 = vld [vmem:[#allocation8 + $0xf8] sm:$0xff]
    %v1087 = vld [vmem:[#allocation8 + $0x100] sm:$0xff]
    %v1088 = vld [vmem:[#allocation8 + $0x108] sm:$0xff]
    %v1089 = vld [vmem:[#allocation8 + $0x110] sm:$0xff]
    %v1090 = vld [vmem:[#allocation8 + $0x118] sm:$0xff]
    %v1091 = vld [vmem:[#allocation8 + $0x120] sm:$0xff]
    %v1092 = vld [vmem:[#allocation8 + $0x128] sm:$0xff]
    %v1093 = vld [vmem:[#allocation8 + $0x130] sm:$0xff]
    %v1094 = vld [vmem:[#allocation8 + $0x138] sm:$0xff]
    %v1095 = vld [vmem:[#allocation8 + $0x140] sm:$0xff]
    %v1096 = vld [vmem:[#allocation8 + $0x148] sm:$0xff]
    %v1097 = vld [vmem:[#allocation8 + $0x150] sm:$0xff]
    %v1098 = vld [vmem:[#allocation8 + $0x158] sm:$0xff]
    %v1099 = vld [vmem:[#allocation8 + $0x160] sm:$0xff]
    %v1100 = vld [vmem:[#allocation8 + $0x168] sm:$0xff]
    %v1101 = vld [vmem:[#allocation8 + $0x170] sm:$0xff]
    %v1102 = vld [vmem:[#allocation8 + $0x178] sm:$0xff]
    %v1103 = vld [vmem:[#allocation8 + $0x180] sm:$0xff]
    %v1104 = vld [vmem:[#allocation8 + $0x188] sm:$0xff]
    %v1105 = vld [vmem:[#allocation8 + $0x190] sm:$0xff]
    %v1106 = vld [vmem:[#allocation8 + $0x198] sm:$0xff]
    %v1107 = vld [vmem:[#allocation8 + $0x1a0] sm:$0xff]
    %v1108 = vld [vmem:[#allocation8 + $0x1a8] sm:$0xff]
    %v1109 = vld [vmem:[#allocation8 + $0x1b0] sm:$0xff]
    %v1110 = vld [vmem:[#allocation8 + $0x1b8] sm:$0xff]
    %v1111 = vld [vmem:[#allocation8 + $0x1c0] sm:$0xff]
    %v1112 = vld [vmem:[#allocation8 + $0x1c8] sm:$0xff]
    %v1113 = vld [vmem:[#allocation8 + $0x1d0] sm:$0xff]
    %v1114 = vld [vmem:[#allocation8 + $0x1d8] sm:$0xff]
    %v1115 = vld [vmem:[#allocation8 + $0x1e0] sm:$0xff]
    %v1116 = vld [vmem:[#allocation8 + $0x1e8] sm:$0xff]
    %v1117 = vld [vmem:[#allocation8 + $0x1f0] sm:$0xff]
    %v1118 = vld [vmem:[#allocation8 + $0x1f8] sm:$0xff]
    %v1119 = vld [vmem:[#allocation8 + $0x200] sm:$0xff]
    %v1120 = vld [vmem:[#allocation8 + $0x208] sm:$0xff]
    %v1121 = vld [vmem:[#allocation8 + $0x210] sm:$0xff]
    %v1122 = vld [vmem:[#allocation8 + $0x218] sm:$0xff]
    %v1123 = vld [vmem:[#allocation8 + $0x220] sm:$0xff]
    %v1124 = vld [vmem:[#allocation8 + $0x228] sm:$0xff]
    %v1125 = vld [vmem:[#allocation8 + $0x230] sm:$0xff]
    %v1126 = vld [vmem:[#allocation8 + $0x238] sm:$0xff]
    %v1127 = vld [vmem:[#allocation8 + $0x240] sm:$0xff]
    %v1128 = vld [vmem:[#allocation8 + $0x248] sm:$0xff]
    %v1129 = vld [vmem:[#allocation8 + $0x250] sm:$0xff]
    %v1130 = vld [vmem:[#allocation8 + $0x258] sm:$0xff]
    %v1131 = vld [vmem:[#allocation8 + $0x260] sm:$0xff]
    %v1132 = vld [vmem:[#allocation8 + $0x268] sm:$0xff]
    %v1133 = vld [vmem:[#allocation8 + $0x270] sm:$0xff]
    %v1134 = vld [vmem:[#allocation8 + $0x278] sm:$0xff]
    %v1135 = vld [vmem:[#allocation8 + $0x280] sm:$0xff]
    %v1136 = vld [vmem:[#allocation8 + $0x288] sm:$0xff]
    %v1137 = vld [vmem:[#allocation8 + $0x290] sm:$0xff]
    %v1138 = vld [vmem:[#allocation8 + $0x298] sm:$0xff]
    %v1139 = vld [vmem:[#allocation8 + $0x2a0] sm:$0xff]
    %v1140 = vld [vmem:[#allocation8 + $0x2a8] sm:$0xff]
    %v1141 = vld [vmem:[#allocation8 + $0x2b0] sm:$0xff]
    %v1142 = vld [vmem:[#allocation8 + $0x2b8] sm:$0xff]
    %v1143 = vld [vmem:[#allocation8 + $0x2c0] sm:$0xff]
    %v1144 = vld [vmem:[#allocation8 + $0x2c8] sm:$0xff]
    %v1145 = vld [vmem:[#allocation8 + $0x2d0] sm:$0xff]
    %v1146 = vld [vmem:[#allocation8 + $0x2d8] sm:$0xff]
    %v1147 = vld [vmem:[#allocation8 + $0x2e0] sm:$0xff]
    %v1148 = vld [vmem:[#allocation8 + $0x2e8] sm:$0xff]
    %v1149 = vld [vmem:[#allocation8 + $0x2f0] sm:$0xff]
    %v1150 = vld [vmem:[#allocation8 + $0x2f8] sm:$0xff]
    %v1151 = vld [vmem:[#allocation8 + $0x300] sm:$0xff]
    %v1152 = vld [vmem:[#allocation8 + $0x308] sm:$0xff]
    %v1153 = vld [vmem:[#allocation8 + $0x310] sm:$0xff]
    %v1154 = vld [vmem:[#allocation8 + $0x318] sm:$0xff]
    %v1155 = vld [vmem:[#allocation8 + $0x320] sm:$0xff]
    %v1156 = vld [vmem:[#allocation8 + $0x328] sm:$0xff]
    %v1157 = vld [vmem:[#allocation8 + $0x330] sm:$0xff]
    %v1158 = vld [vmem:[#allocation8 + $0x338] sm:$0xff]
    %v1159 = vld [vmem:[#allocation8 + $0x340] sm:$0xff]
    %v1160 = vld [vmem:[#allocation8 + $0x348] sm:$0xff]
    %v1161 = vld [vmem:[#allocation8 + $0x350] sm:$0xff]
    %v1162 = vld [vmem:[#allocation8 + $0x358] sm:$0xff]
    %v1163 = vld [vmem:[#allocation8 + $0x360] sm:$0xff]
    %v1164 = vld [vmem:[#allocation8 + $0x368] sm:$0xff]
    %v1165 = vld [vmem:[#allocation8 + $0x370] sm:$0xff]
    %v1166 = vld [vmem:[#allocation8 + $0x378] sm:$0xff]
    %v1167 = vld [vmem:[#allocation8 + $0x380] sm:$0xff]
    %v1168 = vld [vmem:[#allocation8 + $0x388] sm:$0xff]
    %v1169 = vld [vmem:[#allocation8 + $0x390] sm:$0xff]
    %v1170 = vld [vmem:[#allocation8 + $0x398] sm:$0xff]
    %v1171 = vld [vmem:[#allocation8 + $0x3a0] sm:$0xff]
    %v1172 = vld [vmem:[#allocation8 + $0x3a8] sm:$0xff]
    %v1173 = vld [vmem:[#allocation8 + $0x3b0] sm:$0xff]
    %v1174 = vld [vmem:[#allocation8 + $0x3b8] sm:$0xff]
    %v1175 = vld [vmem:[#allocation8 + $0x3c0] sm:$0xff]
    %v1176 = vld [vmem:[#allocation8 + $0x3c8] sm:$0xff]
    %v1177 = vld [vmem:[#allocation8 + $0x3d0] sm:$0xff]
    %v1178 = vld [vmem:[#allocation8 + $0x3d8] sm:$0xff]
    %v1179 = vld [vmem:[#allocation8 + $0x3e0] sm:$0xff]
    %v1180 = vld [vmem:[#allocation8 + $0x3e8] sm:$0xff]
    %v1181 = vld [vmem:[#allocation8 + $0x3f0] sm:$0xff]
    %v1182 = vld [vmem:[#allocation8 + $0x3f8] sm:$0xff]
    %v1183 = vld [vmem:[#allocation8 + $0x400] sm:$0xff]
    %v1184 = vld [vmem:[#allocation8 + $0x408] sm:$0xff]
    %v1185 = vld [vmem:[#allocation8 + $0x410] sm:$0xff]
    %v1186 = vld [vmem:[#allocation8 + $0x418] sm:$0xff]
    %v1187 = vld [vmem:[#allocation8 + $0x420] sm:$0xff]
    %v1188 = vld [vmem:[#allocation8 + $0x428] sm:$0xff]
    %v1189 = vld [vmem:[#allocation8 + $0x430] sm:$0xff]
    %v1190 = vld [vmem:[#allocation8 + $0x438] sm:$0xff]
    %v1191 = vld [vmem:[#allocation8 + $0x440] sm:$0xff]
    %v1192 = vld [vmem:[#allocation8 + $0x448] sm:$0xff]
    %v1193 = vld [vmem:[#allocation8 + $0x450] sm:$0xff]
    %v1194 = vld [vmem:[#allocation8 + $0x458] sm:$0xff]
    %v1195 = vld [vmem:[#allocation8 + $0x460] sm:$0xff]
    %v1196 = vld [vmem:[#allocation8 + $0x468] sm:$0xff]
    %v1197 = vld [vmem:[#allocation8 + $0x470] sm:$0xff]
    %v1198 = vld [vmem:[#allocation8 + $0x478] sm:$0xff]
    %v1199 = vld [vmem:[#allocation8 + $0x480] sm:$0xff]
    %v1200 = vld [vmem:[#allocation8 + $0x488] sm:$0xff]
    %v1201 = vld [vmem:[#allocation8 + $0x490] sm:$0xff]
    %v1202 = vld [vmem:[#allocation8 + $0x498] sm:$0xff]
    %v1203 = vld [vmem:[#allocation8 + $0x4a0] sm:$0xff]
    %v1204 = vld [vmem:[#allocation8 + $0x4a8] sm:$0xff]
    %v1205 = vld [vmem:[#allocation8 + $0x4b0] sm:$0xff]
    %v1206 = vld [vmem:[#allocation8 + $0x4b8] sm:$0xff]
    %v1207 = vld [vmem:[#allocation8 + $0x4c0] sm:$0xff]
    %v1208 = vld [vmem:[#allocation8 + $0x4c8] sm:$0xff]
    %v1209 = vld [vmem:[#allocation8 + $0x4d0] sm:$0xff]
    %v1210 = vld [vmem:[#allocation8 + $0x4d8] sm:$0xff]
    %v1211 = vld [vmem:[#allocation8 + $0x4e0] sm:$0xff]
    %v1212 = vld [vmem:[#allocation8 + $0x4e8] sm:$0xff]
    %v1213 = vld [vmem:[#allocation8 + $0x4f0] sm:$0xff]
    %v1214 = vld [vmem:[#allocation8 + $0x4f8] sm:$0xff]
    %v1215 = vld [vmem:[#allocation8 + $0x500] sm:$0xff]
    %v1216 = vld [vmem:[#allocation8 + $0x508] sm:$0xff]
    %v1217 = vld [vmem:[#allocation8 + $0x510] sm:$0xff]
    %v1218 = vld [vmem:[#allocation8 + $0x518] sm:$0xff]
    %v1219 = vld [vmem:[#allocation8 + $0x520] sm:$0xff]
    %v1220 = vld [vmem:[#allocation8 + $0x528] sm:$0xff]
    %v1221 = vld [vmem:[#allocation8 + $0x530] sm:$0xff]
    %v1222 = vld [vmem:[#allocation8 + $0x538] sm:$0xff]
    %v1223 = vld [vmem:[#allocation8 + $0x540] sm:$0xff]
    %v1224 = vld [vmem:[#allocation8 + $0x548] sm:$0xff]
    %v1225 = vld [vmem:[#allocation8 + $0x550] sm:$0xff]
    %v1226 = vld [vmem:[#allocation8 + $0x558] sm:$0xff]
    %v1227 = vld [vmem:[#allocation8 + $0x560] sm:$0xff]
    %v1228 = vld [vmem:[#allocation8 + $0x568] sm:$0xff]
    %v1229 = vld [vmem:[#allocation8 + $0x570] sm:$0xff]
    %v1230 = vld [vmem:[#allocation8 + $0x578] sm:$0xff]
    %v1231 = vld [vmem:[#allocation8 + $0x580] sm:$0xff]
    %v1232 = vld [vmem:[#allocation8 + $0x588] sm:$0xff]
    %v1233 = vld [vmem:[#allocation8 + $0x590] sm:$0xff]
    %v1234 = vld [vmem:[#allocation8 + $0x598] sm:$0xff]
    %v1235 = vld [vmem:[#allocation8 + $0x5a0] sm:$0xff]
    %v1236 = vld [vmem:[#allocation8 + $0x5a8] sm:$0xff]
    %v1237 = vld [vmem:[#allocation8 + $0x5b0] sm:$0xff]
    %v1238 = vld [vmem:[#allocation8 + $0x5b8] sm:$0xff]
    %v1239 = vld [vmem:[#allocation8 + $0x5c0] sm:$0xff]
    %v1240 = vld [vmem:[#allocation8 + $0x5c8] sm:$0xff]
    %v1241 = vld [vmem:[#allocation8 + $0x5d0] sm:$0xff]
    %v1242 = vld [vmem:[#allocation8 + $0x5d8] sm:$0xff]
    %v1243 = vld [vmem:[#allocation8 + $0x5e0] sm:$0xff]
    %v1244 = vld [vmem:[#allocation8 + $0x5e8] sm:$0xff]
    %v1245 = vld [vmem:[#allocation8 + $0x5f0] sm:$0xff]
    %v1246 = vld [vmem:[#allocation8 + $0x5f8] sm:$0xff]
    %v1247 = vld [vmem:[#allocation8 + $0x600] sm:$0xff]
    %v1248 = vld [vmem:[#allocation8 + $0x608] sm:$0xff]
    %v1249 = vld [vmem:[#allocation8 + $0x610] sm:$0xff]
    %v1250 = vld [vmem:[#allocation8 + $0x618] sm:$0xff]
    %v1251 = vld [vmem:[#allocation8 + $0x620] sm:$0xff]
    %v1252 = vld [vmem:[#allocation8 + $0x628] sm:$0xff]
    %v1253 = vld [vmem:[#allocation8 + $0x630] sm:$0xff]
    %v1254 = vld [vmem:[#allocation8 + $0x638] sm:$0xff]
    %v1255 = vld [vmem:[#allocation8 + $0x640] sm:$0xff]
    %v1256 = vld [vmem:[#allocation8 + $0x648] sm:$0xff]
    %v1257 = vld [vmem:[#allocation8 + $0x650] sm:$0xff]
    %v1258 = vld [vmem:[#allocation8 + $0x658] sm:$0xff]
    %v1259 = vld [vmem:[#allocation8 + $0x660] sm:$0xff]
    %v1260 = vld [vmem:[#allocation8 + $0x668] sm:$0xff]
    %v1261 = vld [vmem:[#allocation8 + $0x670] sm:$0xff]
    %v1262 = vld [vmem:[#allocation8 + $0x678] sm:$0xff]
    %v1263 = vld [vmem:[#allocation8 + $0x680] sm:$0xff]
    %v1264 = vld [vmem:[#allocation8 + $0x688] sm:$0xff]
    %v1265 = vld [vmem:[#allocation8 + $0x690] sm:$0xff]
    %v1266 = vld [vmem:[#allocation8 + $0x698] sm:$0xff]
    %v1267 = vld [vmem:[#allocation8 + $0x6a0] sm:$0xff]
    %v1268 = vld [vmem:[#allocation8 + $0x6a8] sm:$0xff]
    %v1269 = vld [vmem:[#allocation8 + $0x6b0] sm:$0xff]
    %v1270 = vld [vmem:[#allocation8 + $0x6b8] sm:$0xff]
    %v1271 = vld [vmem:[#allocation8 + $0x6c0] sm:$0xff]
    %v1272 = vld [vmem:[#allocation8 + $0x6c8] sm:$0xff]
    %v1273 = vld [vmem:[#allocation8 + $0x6d0] sm:$0xff]
    %v1274 = vld [vmem:[#allocation8 + $0x6d8] sm:$0xff]
    %v1275 = vld [vmem:[#allocation8 + $0x6e0] sm:$0xff]
    %v1276 = vld [vmem:[#allocation8 + $0x6e8] sm:$0xff]
    %v1277 = vld [vmem:[#allocation8 + $0x6f0] sm:$0xff]
    %v1278 = vld [vmem:[#allocation8 + $0x6f8] sm:$0xff]
    %v1279 = vld [vmem:[#allocation8 + $0x700] sm:$0xff]
    %v1280 = vld [vmem:[#allocation8 + $0x708] sm:$0xff]
    %v1281 = vld [vmem:[#allocation8 + $0x710] sm:$0xff]
    %v1282 = vld [vmem:[#allocation8 + $0x718] sm:$0xff]
    %v1283 = vld [vmem:[#allocation8 + $0x720] sm:$0xff]
    %v1284 = vld [vmem:[#allocation8 + $0x728] sm:$0xff]
    %v1285 = vld [vmem:[#allocation8 + $0x730] sm:$0xff]
    %v1286 = vld [vmem:[#allocation8 + $0x738] sm:$0xff]
    %v1287 = vld [vmem:[#allocation8 + $0x740] sm:$0xff]
    %v1288 = vld [vmem:[#allocation8 + $0x748] sm:$0xff]
    %v1289 = vld [vmem:[#allocation8 + $0x750] sm:$0xff]
    %v1290 = vld [vmem:[#allocation8 + $0x758] sm:$0xff]
    %v1291 = vld [vmem:[#allocation8 + $0x760] sm:$0xff]
    %v1292 = vld [vmem:[#allocation8 + $0x768] sm:$0xff]
    %v1293 = vld [vmem:[#allocation8 + $0x770] sm:$0xff]
    %v1294 = vld [vmem:[#allocation8 + $0x778] sm:$0xff]
    %v1295 = vld [vmem:[#allocation8 + $0x780] sm:$0xff]
    %v1296 = vld [vmem:[#allocation8 + $0x788] sm:$0xff]
    %v1297 = vld [vmem:[#allocation8 + $0x790] sm:$0xff]
    %v1298 = vld [vmem:[#allocation8 + $0x798] sm:$0xff]
    %v1299 = vld [vmem:[#allocation8 + $0x7a0] sm:$0xff]
    %v1300 = vld [vmem:[#allocation8 + $0x7a8] sm:$0xff]
    %v1301 = vld [vmem:[#allocation8 + $0x7b0] sm:$0xff]
    %v1302 = vld [vmem:[#allocation8 + $0x7b8] sm:$0xff]
    %v1303 = vld [vmem:[#allocation8 + $0x7c0] sm:$0xff]
    %v1304 = vld [vmem:[#allocation8 + $0x7c8] sm:$0xff]
    %v1305 = vld [vmem:[#allocation8 + $0x7d0] sm:$0xff]
    %v1306 = vld [vmem:[#allocation8 + $0x7d8] sm:$0xff]
    %v1307 = vld [vmem:[#allocation8 + $0x7e0] sm:$0xff]
    %v1308 = vld [vmem:[#allocation8 + $0x7e8] sm:$0xff]
    %v1309 = vld [vmem:[#allocation8 + $0x7f0] sm:$0xff]
    %v1310 = vld [vmem:[#allocation8 + $0x7f8] sm:$0xff]
    %v1311 = vld [vmem:[#allocation8 + $0x800] sm:$0xff]
    %v1312 = vld [vmem:[#allocation8 + $0x808] sm:$0xff]
    %v1313 = vld [vmem:[#allocation8 + $0x810] sm:$0xff]
    %v1314 = vld [vmem:[#allocation8 + $0x818] sm:$0xff]
    %v1315 = vld [vmem:[#allocation8 + $0x820] sm:$0xff]
    %v1316 = vld [vmem:[#allocation8 + $0x828] sm:$0xff]
    %v1317 = vld [vmem:[#allocation8 + $0x830] sm:$0xff]
    %v1318 = vld [vmem:[#allocation8 + $0x838] sm:$0xff]
    %v1319 = vld [vmem:[#allocation8 + $0x840] sm:$0xff]
    %v1320 = vld [vmem:[#allocation8 + $0x848] sm:$0xff]
    %v1321 = vld [vmem:[#allocation8 + $0x850] sm:$0xff]
    %v1322 = vld [vmem:[#allocation8 + $0x858] sm:$0xff]
    %v1323 = vld [vmem:[#allocation8 + $0x860] sm:$0xff]
    %v1324 = vld [vmem:[#allocation8 + $0x868] sm:$0xff]
    %v1325 = vld [vmem:[#allocation8 + $0x870] sm:$0xff]
    %v1326 = vld [vmem:[#allocation8 + $0x878] sm:$0xff]
    %v1327 = vld [vmem:[#allocation8 + $0x880] sm:$0xff]
    %v1328 = vld [vmem:[#allocation8 + $0x888] sm:$0xff]
    %v1329 = vld [vmem:[#allocation8 + $0x890] sm:$0xff]
    %v1330 = vld [vmem:[#allocation8 + $0x898] sm:$0xff]
    %v1331 = vld [vmem:[#allocation8 + $0x8a0] sm:$0xff]
    %v1332 = vld [vmem:[#allocation8 + $0x8a8] sm:$0xff]
    %v1333 = vld [vmem:[#allocation8 + $0x8b0] sm:$0xff]
    %v1334 = vld [vmem:[#allocation8 + $0x8b8] sm:$0xff]
    %v1335 = vld [vmem:[#allocation8 + $0x8c0] sm:$0xff]
    %v1336 = vld [vmem:[#allocation8 + $0x8c8] sm:$0xff]
    %v1337 = vld [vmem:[#allocation8 + $0x8d0] sm:$0xff]
    %v1338 = vld [vmem:[#allocation8 + $0x8d8] sm:$0xff]
    %v1339 = vld [vmem:[#allocation8 + $0x8e0] sm:$0xff]
    %v1340 = vld [vmem:[#allocation8 + $0x8e8] sm:$0xff]
    %v1341 = vld [vmem:[#allocation8 + $0x8f0] sm:$0xff]
    %v1342 = vld [vmem:[#allocation8 + $0x8f8] sm:$0xff]
    %v1343 = vld [vmem:[#allocation8 + $0x900] sm:$0xff]
    %v1344 = vld [vmem:[#allocation8 + $0x908] sm:$0xff]
    %v1345 = vld [vmem:[#allocation8 + $0x910] sm:$0xff]
    %v1346 = vld [vmem:[#allocation8 + $0x918] sm:$0xff]
    %v1347 = vld [vmem:[#allocation8 + $0x920] sm:$0xff]
    %v1348 = vld [vmem:[#allocation8 + $0x928] sm:$0xff]
    %v1349 = vld [vmem:[#allocation8 + $0x930] sm:$0xff]
    %v1350 = vld [vmem:[#allocation8 + $0x938] sm:$0xff]
    %v1351 = vld [vmem:[#allocation8 + $0x940] sm:$0xff]
    %v1352 = vld [vmem:[#allocation8 + $0x948] sm:$0xff]
    %v1353 = vld [vmem:[#allocation8 + $0x950] sm:$0xff]
    %v1354 = vld [vmem:[#allocation8 + $0x958] sm:$0xff]
    %v1355 = vld [vmem:[#allocation8 + $0x960] sm:$0xff]
    %v1356 = vld [vmem:[#allocation8 + $0x968] sm:$0xff]
    %v1357 = vld [vmem:[#allocation8 + $0x970] sm:$0xff]
    %v1358 = vld [vmem:[#allocation8 + $0x978] sm:$0xff]
    %v1359 = vld [vmem:[#allocation8 + $0x980] sm:$0xff]
    %v1360 = vld [vmem:[#allocation8 + $0x988] sm:$0xff]
    %v1361 = vld [vmem:[#allocation8 + $0x990] sm:$0xff]
    %v1362 = vld [vmem:[#allocation8 + $0x998] sm:$0xff]
    %v1363 = vld [vmem:[#allocation8 + $0x9a0] sm:$0xff]
    %v1364 = vld [vmem:[#allocation8 + $0x9a8] sm:$0xff]
    %v1365 = vld [vmem:[#allocation8 + $0x9b0] sm:$0xff]
    %v1366 = vld [vmem:[#allocation8 + $0x9b8] sm:$0xff]
    %v1367 = vld [vmem:[#allocation8 + $0x9c0] sm:$0xff]
    %v1368 = vld [vmem:[#allocation8 + $0x9c8] sm:$0xff]
    %v1369 = vld [vmem:[#allocation8 + $0x9d0] sm:$0xff]
    %v1370 = vld [vmem:[#allocation8 + $0x9d8] sm:$0xff]
    %v1371 = vld [vmem:[#allocation8 + $0x9e0] sm:$0xff]
    %v1372 = vld [vmem:[#allocation8 + $0x9e8] sm:$0xff]
    %v1373 = vld [vmem:[#allocation8 + $0x9f0] sm:$0xff]
    %v1374 = vld [vmem:[#allocation8 + $0x9f8] sm:$0xff]
    %v1375 = vld [vmem:[#allocation8 + $0xa00] sm:$0xff]
    %v1376 = vld [vmem:[#allocation8 + $0xa08] sm:$0xff]
    %v1377 = vld [vmem:[#allocation8 + $0xa10] sm:$0xff]
    %v1378 = vld [vmem:[#allocation8 + $0xa18] sm:$0xff]
    %v1379 = vld [vmem:[#allocation8 + $0xa20] sm:$0xff]
    %v1380 = vld [vmem:[#allocation8 + $0xa28] sm:$0xff]
    %v1381 = vld [vmem:[#allocation8 + $0xa30] sm:$0xff]
    %v1382 = vld [vmem:[#allocation8 + $0xa38] sm:$0xff]
    %v1383 = vld [vmem:[#allocation8 + $0xa40] sm:$0xff]
    %v1384 = vld [vmem:[#allocation8 + $0xa48] sm:$0xff]
    %v1385 = vld [vmem:[#allocation8 + $0xa50] sm:$0xff]
    %v1386 = vld [vmem:[#allocation8 + $0xa58] sm:$0xff]
    %v1387 = vld [vmem:[#allocation8 + $0xa60] sm:$0xff]
    %v1388 = vld [vmem:[#allocation8 + $0xa68] sm:$0xff]
    %v1389 = vld [vmem:[#allocation8 + $0xa70] sm:$0xff]
    %v1390 = vld [vmem:[#allocation8 + $0xa78] sm:$0xff]
    %v1391 = vld [vmem:[#allocation8 + $0xa80] sm:$0xff]
    %v1392 = vld [vmem:[#allocation8 + $0xa88] sm:$0xff]
    %v1393 = vld [vmem:[#allocation8 + $0xa90] sm:$0xff]
    %v1394 = vld [vmem:[#allocation8 + $0xa98] sm:$0xff]
    %v1395 = vld [vmem:[#allocation8 + $0xaa0] sm:$0xff]
    %v1396 = vld [vmem:[#allocation8 + $0xaa8] sm:$0xff]
    %v1397 = vld [vmem:[#allocation8 + $0xab0] sm:$0xff]
    %v1398 = vld [vmem:[#allocation8 + $0xab8] sm:$0xff]
    %v1399 = vld [vmem:[#allocation8 + $0xac0] sm:$0xff]
    %v1400 = vld [vmem:[#allocation8 + $0xac8] sm:$0xff]
    %v1401 = vld [vmem:[#allocation8 + $0xad0] sm:$0xff]
    %v1402 = vld [vmem:[#allocation8 + $0xad8] sm:$0xff]
    %v1403 = vld [vmem:[#allocation8 + $0xae0] sm:$0xff]
    %v1404 = vld [vmem:[#allocation8 + $0xae8] sm:$0xff]
    %v1405 = vld [vmem:[#allocation8 + $0xaf0] sm:$0xff]
    %v1406 = vld [vmem:[#allocation8 + $0xaf8] sm:$0xff]
    %v1407 = vld [vmem:[#allocation8 + $0xb00] sm:$0xff]
    %v1408 = vld [vmem:[#allocation8 + $0xb08] sm:$0xff]
    %v1409 = vld [vmem:[#allocation8 + $0xb10] sm:$0xff]
    %v1410 = vld [vmem:[#allocation8 + $0xb18] sm:$0xff]
    %v1411 = vld [vmem:[#allocation8 + $0xb20] sm:$0xff]
    %v1412 = vld [vmem:[#allocation8 + $0xb28] sm:$0xff]
    %v1413 = vld [vmem:[#allocation8 + $0xb30] sm:$0xff]
    %v1414 = vld [vmem:[#allocation8 + $0xb38] sm:$0xff]
    %v1415 = vld [vmem:[#allocation8 + $0xb40] sm:$0xff]
    %v1416 = vld [vmem:[#allocation8 + $0xb48] sm:$0xff]
    %v1417 = vld [vmem:[#allocation8 + $0xb50] sm:$0xff]
    %v1418 = vld [vmem:[#allocation8 + $0xb58] sm:$0xff]
    %v1419 = vld [vmem:[#allocation8 + $0xb60] sm:$0xff]
    %v1420 = vld [vmem:[#allocation8 + $0xb68] sm:$0xff]
    %v1421 = vld [vmem:[#allocation8 + $0xb70] sm:$0xff]
    %v1422 = vld [vmem:[#allocation8 + $0xb78] sm:$0xff]
    %v1423 = vld [vmem:[#allocation8 + $0xb80] sm:$0xff]
    %v1424 = vld [vmem:[#allocation8 + $0xb88] sm:$0xff]
    %v1425 = vld [vmem:[#allocation8 + $0xb90] sm:$0xff]
    %v1426 = vld [vmem:[#allocation8 + $0xb98] sm:$0xff]
    %v1427 = vld [vmem:[#allocation8 + $0xba0] sm:$0xff]
    %v1428 = vld [vmem:[#allocation8 + $0xba8] sm:$0xff]
    %v1429 = vld [vmem:[#allocation8 + $0xbb0] sm:$0xff]
    %v1430 = vld [vmem:[#allocation8 + $0xbb8] sm:$0xff]
    %v1431 = vld [vmem:[#allocation8 + $0xbc0] sm:$0xff]
    %v1432 = vld [vmem:[#allocation8 + $0xbc8] sm:$0xff]
    %v1433 = vld [vmem:[#allocation8 + $0xbd0] sm:$0xff]
    %v1434 = vld [vmem:[#allocation8 + $0xbd8] sm:$0xff]
    %v1435 = vld [vmem:[#allocation8 + $0xbe0] sm:$0xff]
    %v1436 = vld [vmem:[#allocation8 + $0xbe8] sm:$0xff]
    %v1437 = vld [vmem:[#allocation8 + $0xbf0] sm:$0xff]
    %v1438 = vld [vmem:[#allocation8 + $0xbf8] sm:$0xff]
    %v1439 = vld [vmem:[#allocation8 + $0xc00] sm:$0xff]
    %v1440 = vld [vmem:[#allocation8 + $0xc08] sm:$0xff]
    %v1441 = vld [vmem:[#allocation8 + $0xc10] sm:$0xff]
    %v1442 = vld [vmem:[#allocation8 + $0xc18] sm:$0xff]
    %v1443 = vld [vmem:[#allocation8 + $0xc20] sm:$0xff]
    %v1444 = vld [vmem:[#allocation8 + $0xc28] sm:$0xff]
    %v1445 = vld [vmem:[#allocation8 + $0xc30] sm:$0xff]
    %v1446 = vld [vmem:[#allocation8 + $0xc38] sm:$0xff]
    %v1447 = vld [vmem:[#allocation8 + $0xc40] sm:$0xff]
    %v1448 = vld [vmem:[#allocation8 + $0xc48] sm:$0xff]
    %v1449 = vld [vmem:[#allocation8 + $0xc50] sm:$0xff]
    %v1450 = vld [vmem:[#allocation8 + $0xc58] sm:$0xff]
    %v1451 = vld [vmem:[#allocation8 + $0xc60] sm:$0xff]
    %v1452 = vld [vmem:[#allocation8 + $0xc68] sm:$0xff]
    %v1453 = vld [vmem:[#allocation8 + $0xc70] sm:$0xff]
    %v1454 = vld [vmem:[#allocation8 + $0xc78] sm:$0xff]
    %v1455 = vld [vmem:[#allocation8 + $0xc80] sm:$0xff]
    %v1456 = vld [vmem:[#allocation8 + $0xc88] sm:$0xff]
    %v1457 = vld [vmem:[#allocation8 + $0xc90] sm:$0xff]
    %v1458 = vld [vmem:[#allocation8 + $0xc98] sm:$0xff]
    %v1459 = vld [vmem:[#allocation8 + $0xca0] sm:$0xff]
    %v1460 = vld [vmem:[#allocation8 + $0xca8] sm:$0xff]
    %v1461 = vld [vmem:[#allocation8 + $0xcb0] sm:$0xff]
    %v1462 = vld [vmem:[#allocation8 + $0xcb8] sm:$0xff]
    %v1463 = vld [vmem:[#allocation8 + $0xcc0] sm:$0xff]
    %v1464 = vld [vmem:[#allocation8 + $0xcc8] sm:$0xff]
    %v1465 = vld [vmem:[#allocation8 + $0xcd0] sm:$0xff]
    %v1466 = vld [vmem:[#allocation8 + $0xcd8] sm:$0xff]
    %v1467 = vld [vmem:[#allocation8 + $0xce0] sm:$0xff]
    %v1468 = vld [vmem:[#allocation8 + $0xce8] sm:$0xff]
    %v1469 = vld [vmem:[#allocation8 + $0xcf0] sm:$0xff]
    %v1470 = vld [vmem:[#allocation8 + $0xcf8] sm:$0xff]
    %v1471 = vld [vmem:[#allocation8 + $0xd00] sm:$0xff]
    %v1472 = vld [vmem:[#allocation8 + $0xd08] sm:$0xff]
    %v1473 = vld [vmem:[#allocation8 + $0xd10] sm:$0xff]
    %v1474 = vld [vmem:[#allocation8 + $0xd18] sm:$0xff]
    %v1475 = vld [vmem:[#allocation8 + $0xd20] sm:$0xff]
    %v1476 = vld [vmem:[#allocation8 + $0xd28] sm:$0xff]
    %v1477 = vld [vmem:[#allocation8 + $0xd30] sm:$0xff]
    %v1478 = vld [vmem:[#allocation8 + $0xd38] sm:$0xff]
    %v1479 = vld [vmem:[#allocation8 + $0xd40] sm:$0xff]
    %v1480 = vld [vmem:[#allocation8 + $0xd48] sm:$0xff]
    %v1481 = vld [vmem:[#allocation8 + $0xd50] sm:$0xff]
    %v1482 = vld [vmem:[#allocation8 + $0xd58] sm:$0xff]
    %v1483 = vld [vmem:[#allocation8 + $0xd60] sm:$0xff]
    %v1484 = vld [vmem:[#allocation8 + $0xd68] sm:$0xff]
    %v1485 = vld [vmem:[#allocation8 + $0xd70] sm:$0xff]
    %v1486 = vld [vmem:[#allocation8 + $0xd78] sm:$0xff]
    %v1487 = vld [vmem:[#allocation8 + $0xd80] sm:$0xff]
    %v1488 = vld [vmem:[#allocation8 + $0xd88] sm:$0xff]
    %v1489 = vld [vmem:[#allocation8 + $0xd90] sm:$0xff]
    %v1490 = vld [vmem:[#allocation8 + $0xd98] sm:$0xff]
    %v1491 = vld [vmem:[#allocation8 + $0xda0] sm:$0xff]
    %v1492 = vld [vmem:[#allocation8 + $0xda8] sm:$0xff]
    %v1493 = vld [vmem:[#allocation8 + $0xdb0] sm:$0xff]
    %v1494 = vld [vmem:[#allocation8 + $0xdb8] sm:$0xff]
    %v1495 = vld [vmem:[#allocation8 + $0xdc0] sm:$0xff]
    %v1496 = vld [vmem:[#allocation8 + $0xdc8] sm:$0xff]
    %v1497 = vld [vmem:[#allocation8 + $0xdd0] sm:$0xff]
    %v1498 = vld [vmem:[#allocation8 + $0xdd8] sm:$0xff]
    %v1499 = vld [vmem:[#allocation8 + $0xde0] sm:$0xff]
    %v1500 = vld [vmem:[#allocation8 + $0xde8] sm:$0xff]
    %v1501 = vld [vmem:[#allocation8 + $0xdf0] sm:$0xff]
    %v1502 = vld [vmem:[#allocation8 + $0xdf8] sm:$0xff]
    %v1503 = vld [vmem:[#allocation8 + $0xe00] sm:$0xff]
    %v1504 = vld [vmem:[#allocation8 + $0xe08] sm:$0xff]
    %v1505 = vld [vmem:[#allocation8 + $0xe10] sm:$0xff]
    %v1506 = vld [vmem:[#allocation8 + $0xe18] sm:$0xff]
    %v1507 = vld [vmem:[#allocation8 + $0xe20] sm:$0xff]
    %v1508 = vld [vmem:[#allocation8 + $0xe28] sm:$0xff]
    %v1509 = vld [vmem:[#allocation8 + $0xe30] sm:$0xff]
    %v1510 = vld [vmem:[#allocation8 + $0xe38] sm:$0xff]
    %v1511 = vld [vmem:[#allocation8 + $0xe40] sm:$0xff]
    %v1512 = vld [vmem:[#allocation8 + $0xe48] sm:$0xff]
    %v1513 = vld [vmem:[#allocation8 + $0xe50] sm:$0xff]
    %v1514 = vld [vmem:[#allocation8 + $0xe58] sm:$0xff]
    %v1515 = vld [vmem:[#allocation8 + $0xe60] sm:$0xff]
    %v1516 = vld [vmem:[#allocation8 + $0xe68] sm:$0xff]
    %v1517 = vld [vmem:[#allocation8 + $0xe70] sm:$0xff]
    %v1518 = vld [vmem:[#allocation8 + $0xe78] sm:$0xff]
    %v1519 = vld [vmem:[#allocation8 + $0xe80] sm:$0xff]
    %v1520 = vld [vmem:[#allocation8 + $0xe88] sm:$0xff]
    %v1521 = vld [vmem:[#allocation8 + $0xe90] sm:$0xff]
    %v1522 = vld [vmem:[#allocation8 + $0xe98] sm:$0xff]
    %v1523 = vld [vmem:[#allocation8 + $0xea0] sm:$0xff]
    %v1524 = vld [vmem:[#allocation8 + $0xea8] sm:$0xff]
    %v1525 = vld [vmem:[#allocation8 + $0xeb0] sm:$0xff]
    %v1526 = vld [vmem:[#allocation8 + $0xeb8] sm:$0xff]
    %v1527 = vld [vmem:[#allocation8 + $0xec0] sm:$0xff]
    %v1528 = vld [vmem:[#allocation8 + $0xec8] sm:$0xff]
    %v1529 = vld [vmem:[#allocation8 + $0xed0] sm:$0xff]
    %v1530 = vld [vmem:[#allocation8 + $0xed8] sm:$0xff]
    %v1531 = vld [vmem:[#allocation8 + $0xee0] sm:$0xff]
    %v1532 = vld [vmem:[#allocation8 + $0xee8] sm:$0xff]
    %v1533 = vld [vmem:[#allocation8 + $0xef0] sm:$0xff]
    %v1534 = vld [vmem:[#allocation8 + $0xef8] sm:$0xff]
    %v1535 = vld [vmem:[#allocation8 + $0xf00] sm:$0xff]
    %v1536 = vld [vmem:[#allocation8 + $0xf08] sm:$0xff]
    %v1537 = vld [vmem:[#allocation8 + $0xf10] sm:$0xff]
    %v1538 = vld [vmem:[#allocation8 + $0xf18] sm:$0xff]
    %v1539 = vld [vmem:[#allocation8 + $0xf20] sm:$0xff]
    %v1540 = vld [vmem:[#allocation8 + $0xf28] sm:$0xff]
    %v1541 = vld [vmem:[#allocation8 + $0xf30] sm:$0xff]
    %v1542 = vld [vmem:[#allocation8 + $0xf38] sm:$0xff]
    %v1543 = vld [vmem:[#allocation8 + $0xf40] sm:$0xff]
    %v1544 = vld [vmem:[#allocation8 + $0xf48] sm:$0xff]
    %v1545 = vld [vmem:[#allocation8 + $0xf50] sm:$0xff]
    %v1546 = vld [vmem:[#allocation8 + $0xf58] sm:$0xff]
    %v1547 = vld [vmem:[#allocation8 + $0xf60] sm:$0xff]
    %v1548 = vld [vmem:[#allocation8 + $0xf68] sm:$0xff]
    %v1549 = vld [vmem:[#allocation8 + $0xf70] sm:$0xff]
    %v1550 = vld [vmem:[#allocation8 + $0xf78] sm:$0xff]
    %v1551 = vld [vmem:[#allocation8 + $0xf80] sm:$0xff]
    %v1552 = vld [vmem:[#allocation8 + $0xf88] sm:$0xff]
    %v1553 = vld [vmem:[#allocation8 + $0xf90] sm:$0xff]
    %v1554 = vld [vmem:[#allocation8 + $0xf98] sm:$0xff]
    %v1555 = vld [vmem:[#allocation8 + $0xfa0] sm:$0xff]
    %v1556 = vld [vmem:[#allocation8 + $0xfa8] sm:$0xff]
    %v1557 = vld [vmem:[#allocation8 + $0xfb0] sm:$0xff]
    %v1558 = vld [vmem:[#allocation8 + $0xfb8] sm:$0xff]
    %v1559 = vld [vmem:[#allocation8 + $0xfc0] sm:$0xff]
    %v1560 = vld [vmem:[#allocation8 + $0xfc8] sm:$0xff]
    %v1561 = vld [vmem:[#allocation8 + $0xfd0] sm:$0xff]
    %v1562 = vld [vmem:[#allocation8 + $0xfd8] sm:$0xff]
    %v1563 = vld [vmem:[#allocation8 + $0xfe0] sm:$0xff]
    %v1564 = vld [vmem:[#allocation8 + $0xfe8] sm:$0xff]
    %v1565 = vld [vmem:[#allocation8 + $0xff0] sm:$0xff]
    %v1566 = vld [vmem:[#allocation8 + $0xff8] sm:$0xff]
    %v1567 = vld [vmem:[#allocation10] sm:$0xff]
    %v1568 = vld [vmem:[#allocation10 + $0x8] sm:$0xff]
    %v1569 = vld [vmem:[#allocation10 + $0x10] sm:$0xff]
    %v1570 = vld [vmem:[#allocation10 + $0x18] sm:$0xff]
    %v1575 = vperm.slane %v1567, 0
    %v1576 = vperm.slane %v1567, 1
    %v1577 = vperm.slane %v1567, 2
    %v1578 = vperm.slane %v1567, 3
    %v1579 = vperm.slane %v1567, 4
    %v1580 = vperm.slane %v1567, 5
    %v1581 = vperm.slane %v1567, 6
    %v1582 = vperm.slane %v1567, 7
    %v1583 = vperm.slane %v1568, 0
    %v1584 = vperm.slane %v1568, 1
    %v1585 = vperm.slane %v1568, 2
    %v1586 = vperm.slane %v1568, 3
    %v1587 = vperm.slane %v1568, 4
    %v1588 = vperm.slane %v1568, 5
    %v1589 = vperm.slane %v1568, 6
    %v1590 = vperm.slane %v1568, 7
    %v1591 = vperm.slane %v1569, 0
    %v1592 = vperm.slane %v1569, 1
    %v1593 = vperm.slane %v1569, 2
    %v1594 = vperm.slane %v1569, 3
    %v1595 = vperm.slane %v1569, 4
    %v1596 = vperm.slane %v1569, 5
    %v1597 = vperm.slane %v1569, 6
    %v1598 = vperm.slane %v1569, 7
    %v1599 = vperm.slane %v1570, 0
    %v1600 = vperm.slane %v1570, 1
    %v1601 = vperm.slane %v1570, 2
    %v1602 = vperm.slane %v1570, 3
    %v1603 = vperm.slane %v1570, 4
    %v1604 = vperm.slane %v1570, 5
    %v1605 = vperm.slane %v1570, 6
    %v1606 = vperm.slane %v1570, 7
    %v2151 = vunpack.c.l.b16 %v1055
    %v2152 = vunpack.c.h.b16 %v1055
    %v2153 = vunpack.c.l.b16 %v1056
    %v2154 = vunpack.c.h.b16 %v1056
    %v2155 = vunpack.c.l.b16 %v1057
    %v2156 = vunpack.c.h.b16 %v1057
    %v2157 = vunpack.c.l.b16 %v1058
    %v2158 = vunpack.c.h.b16 %v1058
    %v2159 = vunpack.c.l.b16 %v1059
    %v2160 = vunpack.c.h.b16 %v1059
    %v2161 = vunpack.c.l.b16 %v1060
    %v2162 = vunpack.c.h.b16 %v1060
    %v2163 = vunpack.c.l.b16 %v1061
    %v2164 = vunpack.c.h.b16 %v1061
    %v2165 = vunpack.c.l.b16 %v1062
    %v2166 = vunpack.c.h.b16 %v1062
    %v2167 = vunpack.c.l.b16 %v1063
    %v2168 = vunpack.c.h.b16 %v1063
    %v2169 = vunpack.c.l.b16 %v1064
    %v2170 = vunpack.c.h.b16 %v1064
    %v2171 = vunpack.c.l.b16 %v1065
    %v2172 = vunpack.c.h.b16 %v1065
    %v2173 = vunpack.c.l.b16 %v1066
    %v2174 = vunpack.c.h.b16 %v1066
    %v2175 = vunpack.c.l.b16 %v1067
    %v2176 = vunpack.c.h.b16 %v1067
    %v2177 = vunpack.c.l.b16 %v1068
    %v2178 = vunpack.c.h.b16 %v1068
    %v2179 = vunpack.c.l.b16 %v1069
    %v2180 = vunpack.c.h.b16 %v1069
    %v2181 = vunpack.c.l.b16 %v1070
    %v2182 = vunpack.c.h.b16 %v1070
    %v2183 = vunpack.c.l.b16 %v1071
    %v2184 = vunpack.c.h.b16 %v1071
    %v2185 = vunpack.c.l.b16 %v1072
    %v2186 = vunpack.c.h.b16 %v1072
    %v2187 = vunpack.c.l.b16 %v1073
    %v2188 = vunpack.c.h.b16 %v1073
    %v2189 = vunpack.c.l.b16 %v1074
    %v2190 = vunpack.c.h.b16 %v1074
    %v2191 = vunpack.c.l.b16 %v1075
    %v2192 = vunpack.c.h.b16 %v1075
    %v2193 = vunpack.c.l.b16 %v1076
    %v2194 = vunpack.c.h.b16 %v1076
    %v2195 = vunpack.c.l.b16 %v1077
    %v2196 = vunpack.c.h.b16 %v1077
    %v2197 = vunpack.c.l.b16 %v1078
    %v2198 = vunpack.c.h.b16 %v1078
    %v2199 = vunpack.c.l.b16 %v1079
    %v2200 = vunpack.c.h.b16 %v1079
    %v2201 = vunpack.c.l.b16 %v1080
    %v2202 = vunpack.c.h.b16 %v1080
    %v2203 = vunpack.c.l.b16 %v1081
    %v2204 = vunpack.c.h.b16 %v1081
    %v2205 = vunpack.c.l.b16 %v1082
    %v2206 = vunpack.c.h.b16 %v1082
    %v2207 = vunpack.c.l.b16 %v1083
    %v2208 = vunpack.c.h.b16 %v1083
    %v2209 = vunpack.c.l.b16 %v1084
    %v2210 = vunpack.c.h.b16 %v1084
    %v2211 = vunpack.c.l.b16 %v1085
    %v2212 = vunpack.c.h.b16 %v1085
    %v2213 = vunpack.c.l.b16 %v1086
    %v2214 = vunpack.c.h.b16 %v1086
    %v2215 = vunpack.c.l.b16 %v1087
    %v2216 = vunpack.c.h.b16 %v1087
    %v2217 = vunpack.c.l.b16 %v1088
    %v2218 = vunpack.c.h.b16 %v1088
    %v2219 = vunpack.c.l.b16 %v1089
    %v2220 = vunpack.c.h.b16 %v1089
    %v2221 = vunpack.c.l.b16 %v1090
    %v2222 = vunpack.c.h.b16 %v1090
    %v2223 = vunpack.c.l.b16 %v1091
    %v2224 = vunpack.c.h.b16 %v1091
    %v2225 = vunpack.c.l.b16 %v1092
    %v2226 = vunpack.c.h.b16 %v1092
    %v2227 = vunpack.c.l.b16 %v1093
    %v2228 = vunpack.c.h.b16 %v1093
    %v2229 = vunpack.c.l.b16 %v1094
    %v2230 = vunpack.c.h.b16 %v1094
    %v2231 = vunpack.c.l.b16 %v1095
    %v2232 = vunpack.c.h.b16 %v1095
    %v2233 = vunpack.c.l.b16 %v1096
    %v2234 = vunpack.c.h.b16 %v1096
    %v2235 = vunpack.c.l.b16 %v1097
    %v2236 = vunpack.c.h.b16 %v1097
    %v2237 = vunpack.c.l.b16 %v1098
    %v2238 = vunpack.c.h.b16 %v1098
    %v2239 = vunpack.c.l.b16 %v1099
    %v2240 = vunpack.c.h.b16 %v1099
    %v2241 = vunpack.c.l.b16 %v1100
    %v2242 = vunpack.c.h.b16 %v1100
    %v2243 = vunpack.c.l.b16 %v1101
    %v2244 = vunpack.c.h.b16 %v1101
    %v2245 = vunpack.c.l.b16 %v1102
    %v2246 = vunpack.c.h.b16 %v1102
    %v2247 = vunpack.c.l.b16 %v1103
    %v2248 = vunpack.c.h.b16 %v1103
    %v2249 = vunpack.c.l.b16 %v1104
    %v2250 = vunpack.c.h.b16 %v1104
    %v2251 = vunpack.c.l.b16 %v1105
    %v2252 = vunpack.c.h.b16 %v1105
    %v2253 = vunpack.c.l.b16 %v1106
    %v2254 = vunpack.c.h.b16 %v1106
    %v2255 = vunpack.c.l.b16 %v1107
    %v2256 = vunpack.c.h.b16 %v1107
    %v2257 = vunpack.c.l.b16 %v1108
    %v2258 = vunpack.c.h.b16 %v1108
    %v2259 = vunpack.c.l.b16 %v1109
    %v2260 = vunpack.c.h.b16 %v1109
    %v2261 = vunpack.c.l.b16 %v1110
    %v2262 = vunpack.c.h.b16 %v1110
    %v2263 = vunpack.c.l.b16 %v1111
    %v2264 = vunpack.c.h.b16 %v1111
    %v2265 = vunpack.c.l.b16 %v1112
    %v2266 = vunpack.c.h.b16 %v1112
    %v2267 = vunpack.c.l.b16 %v1113
    %v2268 = vunpack.c.h.b16 %v1113
    %v2269 = vunpack.c.l.b16 %v1114
    %v2270 = vunpack.c.h.b16 %v1114
    %v2271 = vunpack.c.l.b16 %v1115
    %v2272 = vunpack.c.h.b16 %v1115
    %v2273 = vunpack.c.l.b16 %v1116
    %v2274 = vunpack.c.h.b16 %v1116
    %v2275 = vunpack.c.l.b16 %v1117
    %v2276 = vunpack.c.h.b16 %v1117
    %v2277 = vunpack.c.l.b16 %v1118
    %v2278 = vunpack.c.h.b16 %v1118
    %v2279 = vunpack.c.l.b16 %v1119
    %v2280 = vunpack.c.h.b16 %v1119
    %v2281 = vunpack.c.l.b16 %v1120
    %v2282 = vunpack.c.h.b16 %v1120
    %v2283 = vunpack.c.l.b16 %v1121
    %v2284 = vunpack.c.h.b16 %v1121
    %v2285 = vunpack.c.l.b16 %v1122
    %v2286 = vunpack.c.h.b16 %v1122
    %v2287 = vunpack.c.l.b16 %v1123
    %v2288 = vunpack.c.h.b16 %v1123
    %v2289 = vunpack.c.l.b16 %v1124
    %v2290 = vunpack.c.h.b16 %v1124
    %v2291 = vunpack.c.l.b16 %v1125
    %v2292 = vunpack.c.h.b16 %v1125
    %v2293 = vunpack.c.l.b16 %v1126
    %v2294 = vunpack.c.h.b16 %v1126
    %v2295 = vunpack.c.l.b16 %v1127
    %v2296 = vunpack.c.h.b16 %v1127
    %v2297 = vunpack.c.l.b16 %v1128
    %v2298 = vunpack.c.h.b16 %v1128
    %v2299 = vunpack.c.l.b16 %v1129
    %v2300 = vunpack.c.h.b16 %v1129
    %v2301 = vunpack.c.l.b16 %v1130
    %v2302 = vunpack.c.h.b16 %v1130
    %v2303 = vunpack.c.l.b16 %v1131
    %v2304 = vunpack.c.h.b16 %v1131
    %v2305 = vunpack.c.l.b16 %v1132
    %v2306 = vunpack.c.h.b16 %v1132
    %v2307 = vunpack.c.l.b16 %v1133
    %v2308 = vunpack.c.h.b16 %v1133
    %v2309 = vunpack.c.l.b16 %v1134
    %v2310 = vunpack.c.h.b16 %v1134
    %v2311 = vunpack.c.l.b16 %v1135
    %v2312 = vunpack.c.h.b16 %v1135
    %v2313 = vunpack.c.l.b16 %v1136
    %v2314 = vunpack.c.h.b16 %v1136
    %v2315 = vunpack.c.l.b16 %v1137
    %v2316 = vunpack.c.h.b16 %v1137
    %v2317 = vunpack.c.l.b16 %v1138
    %v2318 = vunpack.c.h.b16 %v1138
    %v2319 = vunpack.c.l.b16 %v1139
    %v2320 = vunpack.c.h.b16 %v1139
    %v2321 = vunpack.c.l.b16 %v1140
    %v2322 = vunpack.c.h.b16 %v1140
    %v2323 = vunpack.c.l.b16 %v1141
    %v2324 = vunpack.c.h.b16 %v1141
    %v2325 = vunpack.c.l.b16 %v1142
    %v2326 = vunpack.c.h.b16 %v1142
    %v2327 = vunpack.c.l.b16 %v1143
    %v2328 = vunpack.c.h.b16 %v1143
    %v2329 = vunpack.c.l.b16 %v1144
    %v2330 = vunpack.c.h.b16 %v1144
    %v2331 = vunpack.c.l.b16 %v1145
    %v2332 = vunpack.c.h.b16 %v1145
    %v2333 = vunpack.c.l.b16 %v1146
    %v2334 = vunpack.c.h.b16 %v1146
    %v2335 = vunpack.c.l.b16 %v1147
    %v2336 = vunpack.c.h.b16 %v1147
    %v2337 = vunpack.c.l.b16 %v1148
    %v2338 = vunpack.c.h.b16 %v1148
    %v2339 = vunpack.c.l.b16 %v1149
    %v2340 = vunpack.c.h.b16 %v1149
    %v2341 = vunpack.c.l.b16 %v1150
    %v2342 = vunpack.c.h.b16 %v1150
    %v2343 = vunpack.c.l.b16 %v1151
    %v2344 = vunpack.c.h.b16 %v1151
    %v2345 = vunpack.c.l.b16 %v1152
    %v2346 = vunpack.c.h.b16 %v1152
    %v2347 = vunpack.c.l.b16 %v1153
    %v2348 = vunpack.c.h.b16 %v1153
    %v2349 = vunpack.c.l.b16 %v1154
    %v2350 = vunpack.c.h.b16 %v1154
    %v2351 = vunpack.c.l.b16 %v1155
    %v2352 = vunpack.c.h.b16 %v1155
    %v2353 = vunpack.c.l.b16 %v1156
    %v2354 = vunpack.c.h.b16 %v1156
    %v2355 = vunpack.c.l.b16 %v1157
    %v2356 = vunpack.c.h.b16 %v1157
    %v2357 = vunpack.c.l.b16 %v1158
    %v2358 = vunpack.c.h.b16 %v1158
    %v2359 = vunpack.c.l.b16 %v1159
    %v2360 = vunpack.c.h.b16 %v1159
    %v2361 = vunpack.c.l.b16 %v1160
    %v2362 = vunpack.c.h.b16 %v1160
    %v2363 = vunpack.c.l.b16 %v1161
    %v2364 = vunpack.c.h.b16 %v1161
    %v2365 = vunpack.c.l.b16 %v1162
    %v2366 = vunpack.c.h.b16 %v1162
    %v2367 = vunpack.c.l.b16 %v1163
    %v2368 = vunpack.c.h.b16 %v1163
    %v2369 = vunpack.c.l.b16 %v1164
    %v2370 = vunpack.c.h.b16 %v1164
    %v2371 = vunpack.c.l.b16 %v1165
    %v2372 = vunpack.c.h.b16 %v1165
    %v2373 = vunpack.c.l.b16 %v1166
    %v2374 = vunpack.c.h.b16 %v1166
    %v2375 = vunpack.c.l.b16 %v1167
    %v2376 = vunpack.c.h.b16 %v1167
    %v2377 = vunpack.c.l.b16 %v1168
    %v2378 = vunpack.c.h.b16 %v1168
    %v2379 = vunpack.c.l.b16 %v1169
    %v2380 = vunpack.c.h.b16 %v1169
    %v2381 = vunpack.c.l.b16 %v1170
    %v2382 = vunpack.c.h.b16 %v1170
    %v2383 = vunpack.c.l.b16 %v1171
    %v2384 = vunpack.c.h.b16 %v1171
    %v2385 = vunpack.c.l.b16 %v1172
    %v2386 = vunpack.c.h.b16 %v1172
    %v2387 = vunpack.c.l.b16 %v1173
    %v2388 = vunpack.c.h.b16 %v1173
    %v2389 = vunpack.c.l.b16 %v1174
    %v2390 = vunpack.c.h.b16 %v1174
    %v2391 = vunpack.c.l.b16 %v1175
    %v2392 = vunpack.c.h.b16 %v1175
    %v2393 = vunpack.c.l.b16 %v1176
    %v2394 = vunpack.c.h.b16 %v1176
    %v2395 = vunpack.c.l.b16 %v1177
    %v2396 = vunpack.c.h.b16 %v1177
    %v2397 = vunpack.c.l.b16 %v1178
    %v2398 = vunpack.c.h.b16 %v1178
    %v2399 = vunpack.c.l.b16 %v1179
    %v2400 = vunpack.c.h.b16 %v1179
    %v2401 = vunpack.c.l.b16 %v1180
    %v2402 = vunpack.c.h.b16 %v1180
    %v2403 = vunpack.c.l.b16 %v1181
    %v2404 = vunpack.c.h.b16 %v1181
    %v2405 = vunpack.c.l.b16 %v1182
    %v2406 = vunpack.c.h.b16 %v1182
    %v2407 = vunpack.c.l.b16 %v1183
    %v2408 = vunpack.c.h.b16 %v1183
    %v2409 = vunpack.c.l.b16 %v1184
    %v2410 = vunpack.c.h.b16 %v1184
    %v2411 = vunpack.c.l.b16 %v1185
    %v2412 = vunpack.c.h.b16 %v1185
    %v2413 = vunpack.c.l.b16 %v1186
    %v2414 = vunpack.c.h.b16 %v1186
    %v2415 = vunpack.c.l.b16 %v1187
    %v2416 = vunpack.c.h.b16 %v1187
    %v2417 = vunpack.c.l.b16 %v1188
    %v2418 = vunpack.c.h.b16 %v1188
    %v2419 = vunpack.c.l.b16 %v1189
    %v2420 = vunpack.c.h.b16 %v1189
    %v2421 = vunpack.c.l.b16 %v1190
    %v2422 = vunpack.c.h.b16 %v1190
    %v2423 = vunpack.c.l.b16 %v1191
    %v2424 = vunpack.c.h.b16 %v1191
    %v2425 = vunpack.c.l.b16 %v1192
    %v2426 = vunpack.c.h.b16 %v1192
    %v2427 = vunpack.c.l.b16 %v1193
    %v2428 = vunpack.c.h.b16 %v1193
    %v2429 = vunpack.c.l.b16 %v1194
    %v2430 = vunpack.c.h.b16 %v1194
    %v2431 = vunpack.c.l.b16 %v1195
    %v2432 = vunpack.c.h.b16 %v1195
    %v2433 = vunpack.c.l.b16 %v1196
    %v2434 = vunpack.c.h.b16 %v1196
    %v2435 = vunpack.c.l.b16 %v1197
    %v2436 = vunpack.c.h.b16 %v1197
    %v2437 = vunpack.c.l.b16 %v1198
    %v2438 = vunpack.c.h.b16 %v1198
    %v2439 = vunpack.c.l.b16 %v1199
    %v2440 = vunpack.c.h.b16 %v1199
    %v2441 = vunpack.c.l.b16 %v1200
    %v2442 = vunpack.c.h.b16 %v1200
    %v2443 = vunpack.c.l.b16 %v1201
    %v2444 = vunpack.c.h.b16 %v1201
    %v2445 = vunpack.c.l.b16 %v1202
    %v2446 = vunpack.c.h.b16 %v1202
    %v2447 = vunpack.c.l.b16 %v1203
    %v2448 = vunpack.c.h.b16 %v1203
    %v2449 = vunpack.c.l.b16 %v1204
    %v2450 = vunpack.c.h.b16 %v1204
    %v2451 = vunpack.c.l.b16 %v1205
    %v2452 = vunpack.c.h.b16 %v1205
    %v2453 = vunpack.c.l.b16 %v1206
    %v2454 = vunpack.c.h.b16 %v1206
    %v2455 = vunpack.c.l.b16 %v1207
    %v2456 = vunpack.c.h.b16 %v1207
    %v2457 = vunpack.c.l.b16 %v1208
    %v2458 = vunpack.c.h.b16 %v1208
    %v2459 = vunpack.c.l.b16 %v1209
    %v2460 = vunpack.c.h.b16 %v1209
    %v2461 = vunpack.c.l.b16 %v1210
    %v2462 = vunpack.c.h.b16 %v1210
    %v2463 = vunpack.c.l.b16 %v1211
    %v2464 = vunpack.c.h.b16 %v1211
    %v2465 = vunpack.c.l.b16 %v1212
    %v2466 = vunpack.c.h.b16 %v1212
    %v2467 = vunpack.c.l.b16 %v1213
    %v2468 = vunpack.c.h.b16 %v1213
    %v2469 = vunpack.c.l.b16 %v1214
    %v2470 = vunpack.c.h.b16 %v1214
    %v2471 = vunpack.c.l.b16 %v1215
    %v2472 = vunpack.c.h.b16 %v1215
    %v2473 = vunpack.c.l.b16 %v1216
    %v2474 = vunpack.c.h.b16 %v1216
    %v2475 = vunpack.c.l.b16 %v1217
    %v2476 = vunpack.c.h.b16 %v1217
    %v2477 = vunpack.c.l.b16 %v1218
    %v2478 = vunpack.c.h.b16 %v1218
    %v2479 = vunpack.c.l.b16 %v1219
    %v2480 = vunpack.c.h.b16 %v1219
    %v2481 = vunpack.c.l.b16 %v1220
    %v2482 = vunpack.c.h.b16 %v1220
    %v2483 = vunpack.c.l.b16 %v1221
    %v2484 = vunpack.c.h.b16 %v1221
    %v2485 = vunpack.c.l.b16 %v1222
    %v2486 = vunpack.c.h.b16 %v1222
    %v2487 = vunpack.c.l.b16 %v1223
    %v2488 = vunpack.c.h.b16 %v1223
    %v2489 = vunpack.c.l.b16 %v1224
    %v2490 = vunpack.c.h.b16 %v1224
    %v2491 = vunpack.c.l.b16 %v1225
    %v2492 = vunpack.c.h.b16 %v1225
    %v2493 = vunpack.c.l.b16 %v1226
    %v2494 = vunpack.c.h.b16 %v1226
    %v2495 = vunpack.c.l.b16 %v1227
    %v2496 = vunpack.c.h.b16 %v1227
    %v2497 = vunpack.c.l.b16 %v1228
    %v2498 = vunpack.c.h.b16 %v1228
    %v2499 = vunpack.c.l.b16 %v1229
    %v2500 = vunpack.c.h.b16 %v1229
    %v2501 = vunpack.c.l.b16 %v1230
    %v2502 = vunpack.c.h.b16 %v1230
    %v2503 = vunpack.c.l.b16 %v1231
    %v2504 = vunpack.c.h.b16 %v1231
    %v2505 = vunpack.c.l.b16 %v1232
    %v2506 = vunpack.c.h.b16 %v1232
    %v2507 = vunpack.c.l.b16 %v1233
    %v2508 = vunpack.c.h.b16 %v1233
    %v2509 = vunpack.c.l.b16 %v1234
    %v2510 = vunpack.c.h.b16 %v1234
    %v2511 = vunpack.c.l.b16 %v1235
    %v2512 = vunpack.c.h.b16 %v1235
    %v2513 = vunpack.c.l.b16 %v1236
    %v2514 = vunpack.c.h.b16 %v1236
    %v2515 = vunpack.c.l.b16 %v1237
    %v2516 = vunpack.c.h.b16 %v1237
    %v2517 = vunpack.c.l.b16 %v1238
    %v2518 = vunpack.c.h.b16 %v1238
    %v2519 = vunpack.c.l.b16 %v1239
    %v2520 = vunpack.c.h.b16 %v1239
    %v2521 = vunpack.c.l.b16 %v1240
    %v2522 = vunpack.c.h.b16 %v1240
    %v2523 = vunpack.c.l.b16 %v1241
    %v2524 = vunpack.c.h.b16 %v1241
    %v2525 = vunpack.c.l.b16 %v1242
    %v2526 = vunpack.c.h.b16 %v1242
    %v2527 = vunpack.c.l.b16 %v1243
    %v2528 = vunpack.c.h.b16 %v1243
    %v2529 = vunpack.c.l.b16 %v1244
    %v2530 = vunpack.c.h.b16 %v1244
    %v2531 = vunpack.c.l.b16 %v1245
    %v2532 = vunpack.c.h.b16 %v1245
    %v2533 = vunpack.c.l.b16 %v1246
    %v2534 = vunpack.c.h.b16 %v1246
    %v2535 = vunpack.c.l.b16 %v1247
    %v2536 = vunpack.c.h.b16 %v1247
    %v2537 = vunpack.c.l.b16 %v1248
    %v2538 = vunpack.c.h.b16 %v1248
    %v2539 = vunpack.c.l.b16 %v1249
    %v2540 = vunpack.c.h.b16 %v1249
    %v2541 = vunpack.c.l.b16 %v1250
    %v2542 = vunpack.c.h.b16 %v1250
    %v2543 = vunpack.c.l.b16 %v1251
    %v2544 = vunpack.c.h.b16 %v1251
    %v2545 = vunpack.c.l.b16 %v1252
    %v2546 = vunpack.c.h.b16 %v1252
    %v2547 = vunpack.c.l.b16 %v1253
    %v2548 = vunpack.c.h.b16 %v1253
    %v2549 = vunpack.c.l.b16 %v1254
    %v2550 = vunpack.c.h.b16 %v1254
    %v2551 = vunpack.c.l.b16 %v1255
    %v2552 = vunpack.c.h.b16 %v1255
    %v2553 = vunpack.c.l.b16 %v1256
    %v2554 = vunpack.c.h.b16 %v1256
    %v2555 = vunpack.c.l.b16 %v1257
    %v2556 = vunpack.c.h.b16 %v1257
    %v2557 = vunpack.c.l.b16 %v1258
    %v2558 = vunpack.c.h.b16 %v1258
    %v2559 = vunpack.c.l.b16 %v1259
    %v2560 = vunpack.c.h.b16 %v1259
    %v2561 = vunpack.c.l.b16 %v1260
    %v2562 = vunpack.c.h.b16 %v1260
    %v2563 = vunpack.c.l.b16 %v1261
    %v2564 = vunpack.c.h.b16 %v1261
    %v2565 = vunpack.c.l.b16 %v1262
    %v2566 = vunpack.c.h.b16 %v1262
    %v2567 = vunpack.c.l.b16 %v1263
    %v2568 = vunpack.c.h.b16 %v1263
    %v2569 = vunpack.c.l.b16 %v1264
    %v2570 = vunpack.c.h.b16 %v1264
    %v2571 = vunpack.c.l.b16 %v1265
    %v2572 = vunpack.c.h.b16 %v1265
    %v2573 = vunpack.c.l.b16 %v1266
    %v2574 = vunpack.c.h.b16 %v1266
    %v2575 = vunpack.c.l.b16 %v1267
    %v2576 = vunpack.c.h.b16 %v1267
    %v2577 = vunpack.c.l.b16 %v1268
    %v2578 = vunpack.c.h.b16 %v1268
    %v2579 = vunpack.c.l.b16 %v1269
    %v2580 = vunpack.c.h.b16 %v1269
    %v2581 = vunpack.c.l.b16 %v1270
    %v2582 = vunpack.c.h.b16 %v1270
    %v2583 = vunpack.c.l.b16 %v1271
    %v2584 = vunpack.c.h.b16 %v1271
    %v2585 = vunpack.c.l.b16 %v1272
    %v2586 = vunpack.c.h.b16 %v1272
    %v2587 = vunpack.c.l.b16 %v1273
    %v2588 = vunpack.c.h.b16 %v1273
    %v2589 = vunpack.c.l.b16 %v1274
    %v2590 = vunpack.c.h.b16 %v1274
    %v2591 = vunpack.c.l.b16 %v1275
    %v2592 = vunpack.c.h.b16 %v1275
    %v2593 = vunpack.c.l.b16 %v1276
    %v2594 = vunpack.c.h.b16 %v1276
    %v2595 = vunpack.c.l.b16 %v1277
    %v2596 = vunpack.c.h.b16 %v1277
    %v2597 = vunpack.c.l.b16 %v1278
    %v2598 = vunpack.c.h.b16 %v1278
    %v2599 = vunpack.c.l.b16 %v1279
    %v2600 = vunpack.c.h.b16 %v1279
    %v2601 = vunpack.c.l.b16 %v1280
    %v2602 = vunpack.c.h.b16 %v1280
    %v2603 = vunpack.c.l.b16 %v1281
    %v2604 = vunpack.c.h.b16 %v1281
    %v2605 = vunpack.c.l.b16 %v1282
    %v2606 = vunpack.c.h.b16 %v1282
    %v2607 = vunpack.c.l.b16 %v1283
    %v2608 = vunpack.c.h.b16 %v1283
    %v2609 = vunpack.c.l.b16 %v1284
    %v2610 = vunpack.c.h.b16 %v1284
    %v2611 = vunpack.c.l.b16 %v1285
    %v2612 = vunpack.c.h.b16 %v1285
    %v2613 = vunpack.c.l.b16 %v1286
    %v2614 = vunpack.c.h.b16 %v1286
    %v2615 = vunpack.c.l.b16 %v1287
    %v2616 = vunpack.c.h.b16 %v1287
    %v2617 = vunpack.c.l.b16 %v1288
    %v2618 = vunpack.c.h.b16 %v1288
    %v2619 = vunpack.c.l.b16 %v1289
    %v2620 = vunpack.c.h.b16 %v1289
    %v2621 = vunpack.c.l.b16 %v1290
    %v2622 = vunpack.c.h.b16 %v1290
    %v2623 = vunpack.c.l.b16 %v1291
    %v2624 = vunpack.c.h.b16 %v1291
    %v2625 = vunpack.c.l.b16 %v1292
    %v2626 = vunpack.c.h.b16 %v1292
    %v2627 = vunpack.c.l.b16 %v1293
    %v2628 = vunpack.c.h.b16 %v1293
    %v2629 = vunpack.c.l.b16 %v1294
    %v2630 = vunpack.c.h.b16 %v1294
    %v2631 = vunpack.c.l.b16 %v1295
    %v2632 = vunpack.c.h.b16 %v1295
    %v2633 = vunpack.c.l.b16 %v1296
    %v2634 = vunpack.c.h.b16 %v1296
    %v2635 = vunpack.c.l.b16 %v1297
    %v2636 = vunpack.c.h.b16 %v1297
    %v2637 = vunpack.c.l.b16 %v1298
    %v2638 = vunpack.c.h.b16 %v1298
    %v2639 = vunpack.c.l.b16 %v1299
    %v2640 = vunpack.c.h.b16 %v1299
    %v2641 = vunpack.c.l.b16 %v1300
    %v2642 = vunpack.c.h.b16 %v1300
    %v2643 = vunpack.c.l.b16 %v1301
    %v2644 = vunpack.c.h.b16 %v1301
    %v2645 = vunpack.c.l.b16 %v1302
    %v2646 = vunpack.c.h.b16 %v1302
    %v2647 = vunpack.c.l.b16 %v1303
    %v2648 = vunpack.c.h.b16 %v1303
    %v2649 = vunpack.c.l.b16 %v1304
    %v2650 = vunpack.c.h.b16 %v1304
    %v2651 = vunpack.c.l.b16 %v1305
    %v2652 = vunpack.c.h.b16 %v1305
    %v2653 = vunpack.c.l.b16 %v1306
    %v2654 = vunpack.c.h.b16 %v1306
    %v2655 = vunpack.c.l.b16 %v1307
    %v2656 = vunpack.c.h.b16 %v1307
    %v2657 = vunpack.c.l.b16 %v1308
    %v2658 = vunpack.c.h.b16 %v1308
    %v2659 = vunpack.c.l.b16 %v1309
    %v2660 = vunpack.c.h.b16 %v1309
    %v2661 = vunpack.c.l.b16 %v1310
    %v2662 = vunpack.c.h.b16 %v1310
    %v2663 = vunpack.c.l.b16 %v1311
    %v2664 = vunpack.c.h.b16 %v1311
    %v2665 = vunpack.c.l.b16 %v1312
    %v2666 = vunpack.c.h.b16 %v1312
    %v2667 = vunpack.c.l.b16 %v1313
    %v2668 = vunpack.c.h.b16 %v1313
    %v2669 = vunpack.c.l.b16 %v1314
    %v2670 = vunpack.c.h.b16 %v1314
    %v2671 = vunpack.c.l.b16 %v1315
    %v2672 = vunpack.c.h.b16 %v1315
    %v2673 = vunpack.c.l.b16 %v1316
    %v2674 = vunpack.c.h.b16 %v1316
    %v2675 = vunpack.c.l.b16 %v1317
    %v2676 = vunpack.c.h.b16 %v1317
    %v2677 = vunpack.c.l.b16 %v1318
    %v2678 = vunpack.c.h.b16 %v1318
    %v2679 = vunpack.c.l.b16 %v1319
    %v2680 = vunpack.c.h.b16 %v1319
    %v2681 = vunpack.c.l.b16 %v1320
    %v2682 = vunpack.c.h.b16 %v1320
    %v2683 = vunpack.c.l.b16 %v1321
    %v2684 = vunpack.c.h.b16 %v1321
    %v2685 = vunpack.c.l.b16 %v1322
    %v2686 = vunpack.c.h.b16 %v1322
    %v2687 = vunpack.c.l.b16 %v1323
    %v2688 = vunpack.c.h.b16 %v1323
    %v2689 = vunpack.c.l.b16 %v1324
    %v2690 = vunpack.c.h.b16 %v1324
    %v2691 = vunpack.c.l.b16 %v1325
    %v2692 = vunpack.c.h.b16 %v1325
    %v2693 = vunpack.c.l.b16 %v1326
    %v2694 = vunpack.c.h.b16 %v1326
    %v2695 = vunpack.c.l.b16 %v1327
    %v2696 = vunpack.c.h.b16 %v1327
    %v2697 = vunpack.c.l.b16 %v1328
    %v2698 = vunpack.c.h.b16 %v1328
    %v2699 = vunpack.c.l.b16 %v1329
    %v2700 = vunpack.c.h.b16 %v1329
    %v2701 = vunpack.c.l.b16 %v1330
    %v2702 = vunpack.c.h.b16 %v1330
    %v2703 = vunpack.c.l.b16 %v1331
    %v2704 = vunpack.c.h.b16 %v1331
    %v2705 = vunpack.c.l.b16 %v1332
    %v2706 = vunpack.c.h.b16 %v1332
    %v2707 = vunpack.c.l.b16 %v1333
    %v2708 = vunpack.c.h.b16 %v1333
    %v2709 = vunpack.c.l.b16 %v1334
    %v2710 = vunpack.c.h.b16 %v1334
    %v2711 = vunpack.c.l.b16 %v1335
    %v2712 = vunpack.c.h.b16 %v1335
    %v2713 = vunpack.c.l.b16 %v1336
    %v2714 = vunpack.c.h.b16 %v1336
    %v2715 = vunpack.c.l.b16 %v1337
    %v2716 = vunpack.c.h.b16 %v1337
    %v2717 = vunpack.c.l.b16 %v1338
    %v2718 = vunpack.c.h.b16 %v1338
    %v2719 = vunpack.c.l.b16 %v1339
    %v2720 = vunpack.c.h.b16 %v1339
    %v2721 = vunpack.c.l.b16 %v1340
    %v2722 = vunpack.c.h.b16 %v1340
    %v2723 = vunpack.c.l.b16 %v1341
    %v2724 = vunpack.c.h.b16 %v1341
    %v2725 = vunpack.c.l.b16 %v1342
    %v2726 = vunpack.c.h.b16 %v1342
    %v2727 = vunpack.c.l.b16 %v1343
    %v2728 = vunpack.c.h.b16 %v1343
    %v2729 = vunpack.c.l.b16 %v1344
    %v2730 = vunpack.c.h.b16 %v1344
    %v2731 = vunpack.c.l.b16 %v1345
    %v2732 = vunpack.c.h.b16 %v1345
    %v2733 = vunpack.c.l.b16 %v1346
    %v2734 = vunpack.c.h.b16 %v1346
    %v2735 = vunpack.c.l.b16 %v1347
    %v2736 = vunpack.c.h.b16 %v1347
    %v2737 = vunpack.c.l.b16 %v1348
    %v2738 = vunpack.c.h.b16 %v1348
    %v2739 = vunpack.c.l.b16 %v1349
    %v2740 = vunpack.c.h.b16 %v1349
    %v2741 = vunpack.c.l.b16 %v1350
    %v2742 = vunpack.c.h.b16 %v1350
    %v2743 = vunpack.c.l.b16 %v1351
    %v2744 = vunpack.c.h.b16 %v1351
    %v2745 = vunpack.c.l.b16 %v1352
    %v2746 = vunpack.c.h.b16 %v1352
    %v2747 = vunpack.c.l.b16 %v1353
    %v2748 = vunpack.c.h.b16 %v1353
    %v2749 = vunpack.c.l.b16 %v1354
    %v2750 = vunpack.c.h.b16 %v1354
    %v2751 = vunpack.c.l.b16 %v1355
    %v2752 = vunpack.c.h.b16 %v1355
    %v2753 = vunpack.c.l.b16 %v1356
    %v2754 = vunpack.c.h.b16 %v1356
    %v2755 = vunpack.c.l.b16 %v1357
    %v2756 = vunpack.c.h.b16 %v1357
    %v2757 = vunpack.c.l.b16 %v1358
    %v2758 = vunpack.c.h.b16 %v1358
    %v2759 = vunpack.c.l.b16 %v1359
    %v2760 = vunpack.c.h.b16 %v1359
    %v2761 = vunpack.c.l.b16 %v1360
    %v2762 = vunpack.c.h.b16 %v1360
    %v2763 = vunpack.c.l.b16 %v1361
    %v2764 = vunpack.c.h.b16 %v1361
    %v2765 = vunpack.c.l.b16 %v1362
    %v2766 = vunpack.c.h.b16 %v1362
    %v2767 = vunpack.c.l.b16 %v1363
    %v2768 = vunpack.c.h.b16 %v1363
    %v2769 = vunpack.c.l.b16 %v1364
    %v2770 = vunpack.c.h.b16 %v1364
    %v2771 = vunpack.c.l.b16 %v1365
    %v2772 = vunpack.c.h.b16 %v1365
    %v2773 = vunpack.c.l.b16 %v1366
    %v2774 = vunpack.c.h.b16 %v1366
    %v2775 = vunpack.c.l.b16 %v1367
    %v2776 = vunpack.c.h.b16 %v1367
    %v2777 = vunpack.c.l.b16 %v1368
    %v2778 = vunpack.c.h.b16 %v1368
    %v2779 = vunpack.c.l.b16 %v1369
    %v2780 = vunpack.c.h.b16 %v1369
    %v2781 = vunpack.c.l.b16 %v1370
    %v2782 = vunpack.c.h.b16 %v1370
    %v2783 = vunpack.c.l.b16 %v1371
    %v2784 = vunpack.c.h.b16 %v1371
    %v2785 = vunpack.c.l.b16 %v1372
    %v2786 = vunpack.c.h.b16 %v1372
    %v2787 = vunpack.c.l.b16 %v1373
    %v2788 = vunpack.c.h.b16 %v1373
    %v2789 = vunpack.c.l.b16 %v1374
    %v2790 = vunpack.c.h.b16 %v1374
    %v2791 = vunpack.c.l.b16 %v1375
    %v2792 = vunpack.c.h.b16 %v1375
    %v2793 = vunpack.c.l.b16 %v1376
    %v2794 = vunpack.c.h.b16 %v1376
    %v2795 = vunpack.c.l.b16 %v1377
    %v2796 = vunpack.c.h.b16 %v1377
    %v2797 = vunpack.c.l.b16 %v1378
    %v2798 = vunpack.c.h.b16 %v1378
    %v2799 = vunpack.c.l.b16 %v1379
    %v2800 = vunpack.c.h.b16 %v1379
    %v2801 = vunpack.c.l.b16 %v1380
    %v2802 = vunpack.c.h.b16 %v1380
    %v2803 = vunpack.c.l.b16 %v1381
    %v2804 = vunpack.c.h.b16 %v1381
    %v2805 = vunpack.c.l.b16 %v1382
    %v2806 = vunpack.c.h.b16 %v1382
    %v2807 = vunpack.c.l.b16 %v1383
    %v2808 = vunpack.c.h.b16 %v1383
    %v2809 = vunpack.c.l.b16 %v1384
    %v2810 = vunpack.c.h.b16 %v1384
    %v2811 = vunpack.c.l.b16 %v1385
    %v2812 = vunpack.c.h.b16 %v1385
    %v2813 = vunpack.c.l.b16 %v1386
    %v2814 = vunpack.c.h.b16 %v1386
    %v2815 = vunpack.c.l.b16 %v1387
    %v2816 = vunpack.c.h.b16 %v1387
    %v2817 = vunpack.c.l.b16 %v1388
    %v2818 = vunpack.c.h.b16 %v1388
    %v2819 = vunpack.c.l.b16 %v1389
    %v2820 = vunpack.c.h.b16 %v1389
    %v2821 = vunpack.c.l.b16 %v1390
    %v2822 = vunpack.c.h.b16 %v1390
    %v2823 = vunpack.c.l.b16 %v1391
    %v2824 = vunpack.c.h.b16 %v1391
    %v2825 = vunpack.c.l.b16 %v1392
    %v2826 = vunpack.c.h.b16 %v1392
    %v2827 = vunpack.c.l.b16 %v1393
    %v2828 = vunpack.c.h.b16 %v1393
    %v2829 = vunpack.c.l.b16 %v1394
    %v2830 = vunpack.c.h.b16 %v1394
    %v2831 = vunpack.c.l.b16 %v1395
    %v2832 = vunpack.c.h.b16 %v1395
    %v2833 = vunpack.c.l.b16 %v1396
    %v2834 = vunpack.c.h.b16 %v1396
    %v2835 = vunpack.c.l.b16 %v1397
    %v2836 = vunpack.c.h.b16 %v1397
    %v2837 = vunpack.c.l.b16 %v1398
    %v2838 = vunpack.c.h.b16 %v1398
    %v2839 = vunpack.c.l.b16 %v1399
    %v2840 = vunpack.c.h.b16 %v1399
    %v2841 = vunpack.c.l.b16 %v1400
    %v2842 = vunpack.c.h.b16 %v1400
    %v2843 = vunpack.c.l.b16 %v1401
    %v2844 = vunpack.c.h.b16 %v1401
    %v2845 = vunpack.c.l.b16 %v1402
    %v2846 = vunpack.c.h.b16 %v1402
    %v2847 = vunpack.c.l.b16 %v1403
    %v2848 = vunpack.c.h.b16 %v1403
    %v2849 = vunpack.c.l.b16 %v1404
    %v2850 = vunpack.c.h.b16 %v1404
    %v2851 = vunpack.c.l.b16 %v1405
    %v2852 = vunpack.c.h.b16 %v1405
    %v2853 = vunpack.c.l.b16 %v1406
    %v2854 = vunpack.c.h.b16 %v1406
    %v2855 = vunpack.c.l.b16 %v1407
    %v2856 = vunpack.c.h.b16 %v1407
    %v2857 = vunpack.c.l.b16 %v1408
    %v2858 = vunpack.c.h.b16 %v1408
    %v2859 = vunpack.c.l.b16 %v1409
    %v2860 = vunpack.c.h.b16 %v1409
    %v2861 = vunpack.c.l.b16 %v1410
    %v2862 = vunpack.c.h.b16 %v1410
    %v2863 = vunpack.c.l.b16 %v1411
    %v2864 = vunpack.c.h.b16 %v1411
    %v2865 = vunpack.c.l.b16 %v1412
    %v2866 = vunpack.c.h.b16 %v1412
    %v2867 = vunpack.c.l.b16 %v1413
    %v2868 = vunpack.c.h.b16 %v1413
    %v2869 = vunpack.c.l.b16 %v1414
    %v2870 = vunpack.c.h.b16 %v1414
    %v2871 = vunpack.c.l.b16 %v1415
    %v2872 = vunpack.c.h.b16 %v1415
    %v2873 = vunpack.c.l.b16 %v1416
    %v2874 = vunpack.c.h.b16 %v1416
    %v2875 = vunpack.c.l.b16 %v1417
    %v2876 = vunpack.c.h.b16 %v1417
    %v2877 = vunpack.c.l.b16 %v1418
    %v2878 = vunpack.c.h.b16 %v1418
    %v2879 = vunpack.c.l.b16 %v1419
    %v2880 = vunpack.c.h.b16 %v1419
    %v2881 = vunpack.c.l.b16 %v1420
    %v2882 = vunpack.c.h.b16 %v1420
    %v2883 = vunpack.c.l.b16 %v1421
    %v2884 = vunpack.c.h.b16 %v1421
    %v2885 = vunpack.c.l.b16 %v1422
    %v2886 = vunpack.c.h.b16 %v1422
    %v2887 = vunpack.c.l.b16 %v1423
    %v2888 = vunpack.c.h.b16 %v1423
    %v2889 = vunpack.c.l.b16 %v1424
    %v2890 = vunpack.c.h.b16 %v1424
    %v2891 = vunpack.c.l.b16 %v1425
    %v2892 = vunpack.c.h.b16 %v1425
    %v2893 = vunpack.c.l.b16 %v1426
    %v2894 = vunpack.c.h.b16 %v1426
    %v2895 = vunpack.c.l.b16 %v1427
    %v2896 = vunpack.c.h.b16 %v1427
    %v2897 = vunpack.c.l.b16 %v1428
    %v2898 = vunpack.c.h.b16 %v1428
    %v2899 = vunpack.c.l.b16 %v1429
    %v2900 = vunpack.c.h.b16 %v1429
    %v2901 = vunpack.c.l.b16 %v1430
    %v2902 = vunpack.c.h.b16 %v1430
    %v2903 = vunpack.c.l.b16 %v1431
    %v2904 = vunpack.c.h.b16 %v1431
    %v2905 = vunpack.c.l.b16 %v1432
    %v2906 = vunpack.c.h.b16 %v1432
    %v2907 = vunpack.c.l.b16 %v1433
    %v2908 = vunpack.c.h.b16 %v1433
    %v2909 = vunpack.c.l.b16 %v1434
    %v2910 = vunpack.c.h.b16 %v1434
    %v2911 = vunpack.c.l.b16 %v1435
    %v2912 = vunpack.c.h.b16 %v1435
    %v2913 = vunpack.c.l.b16 %v1436
    %v2914 = vunpack.c.h.b16 %v1436
    %v2915 = vunpack.c.l.b16 %v1437
    %v2916 = vunpack.c.h.b16 %v1437
    %v2917 = vunpack.c.l.b16 %v1438
    %v2918 = vunpack.c.h.b16 %v1438
    %v2919 = vunpack.c.l.b16 %v1439
    %v2920 = vunpack.c.h.b16 %v1439
    %v2921 = vunpack.c.l.b16 %v1440
    %v2922 = vunpack.c.h.b16 %v1440
    %v2923 = vunpack.c.l.b16 %v1441
    %v2924 = vunpack.c.h.b16 %v1441
    %v2925 = vunpack.c.l.b16 %v1442
    %v2926 = vunpack.c.h.b16 %v1442
    %v2927 = vunpack.c.l.b16 %v1443
    %v2928 = vunpack.c.h.b16 %v1443
    %v2929 = vunpack.c.l.b16 %v1444
    %v2930 = vunpack.c.h.b16 %v1444
    %v2931 = vunpack.c.l.b16 %v1445
    %v2932 = vunpack.c.h.b16 %v1445
    %v2933 = vunpack.c.l.b16 %v1446
    %v2934 = vunpack.c.h.b16 %v1446
    %v2935 = vunpack.c.l.b16 %v1447
    %v2936 = vunpack.c.h.b16 %v1447
    %v2937 = vunpack.c.l.b16 %v1448
    %v2938 = vunpack.c.h.b16 %v1448
    %v2939 = vunpack.c.l.b16 %v1449
    %v2940 = vunpack.c.h.b16 %v1449
    %v2941 = vunpack.c.l.b16 %v1450
    %v2942 = vunpack.c.h.b16 %v1450
    %v2943 = vunpack.c.l.b16 %v1451
    %v2944 = vunpack.c.h.b16 %v1451
    %v2945 = vunpack.c.l.b16 %v1452
    %v2946 = vunpack.c.h.b16 %v1452
    %v2947 = vunpack.c.l.b16 %v1453
    %v2948 = vunpack.c.h.b16 %v1453
    %v2949 = vunpack.c.l.b16 %v1454
    %v2950 = vunpack.c.h.b16 %v1454
    %v2951 = vunpack.c.l.b16 %v1455
    %v2952 = vunpack.c.h.b16 %v1455
    %v2953 = vunpack.c.l.b16 %v1456
    %v2954 = vunpack.c.h.b16 %v1456
    %v2955 = vunpack.c.l.b16 %v1457
    %v2956 = vunpack.c.h.b16 %v1457
    %v2957 = vunpack.c.l.b16 %v1458
    %v2958 = vunpack.c.h.b16 %v1458
    %v2959 = vunpack.c.l.b16 %v1459
    %v2960 = vunpack.c.h.b16 %v1459
    %v2961 = vunpack.c.l.b16 %v1460
    %v2962 = vunpack.c.h.b16 %v1460
    %v2963 = vunpack.c.l.b16 %v1461
    %v2964 = vunpack.c.h.b16 %v1461
    %v2965 = vunpack.c.l.b16 %v1462
    %v2966 = vunpack.c.h.b16 %v1462
    %v2967 = vunpack.c.l.b16 %v1463
    %v2968 = vunpack.c.h.b16 %v1463
    %v2969 = vunpack.c.l.b16 %v1464
    %v2970 = vunpack.c.h.b16 %v1464
    %v2971 = vunpack.c.l.b16 %v1465
    %v2972 = vunpack.c.h.b16 %v1465
    %v2973 = vunpack.c.l.b16 %v1466
    %v2974 = vunpack.c.h.b16 %v1466
    %v2975 = vunpack.c.l.b16 %v1467
    %v2976 = vunpack.c.h.b16 %v1467
    %v2977 = vunpack.c.l.b16 %v1468
    %v2978 = vunpack.c.h.b16 %v1468
    %v2979 = vunpack.c.l.b16 %v1469
    %v2980 = vunpack.c.h.b16 %v1469
    %v2981 = vunpack.c.l.b16 %v1470
    %v2982 = vunpack.c.h.b16 %v1470
    %v2983 = vunpack.c.l.b16 %v1471
    %v2984 = vunpack.c.h.b16 %v1471
    %v2985 = vunpack.c.l.b16 %v1472
    %v2986 = vunpack.c.h.b16 %v1472
    %v2987 = vunpack.c.l.b16 %v1473
    %v2988 = vunpack.c.h.b16 %v1473
    %v2989 = vunpack.c.l.b16 %v1474
    %v2990 = vunpack.c.h.b16 %v1474
    %v2991 = vunpack.c.l.b16 %v1475
    %v2992 = vunpack.c.h.b16 %v1475
    %v2993 = vunpack.c.l.b16 %v1476
    %v2994 = vunpack.c.h.b16 %v1476
    %v2995 = vunpack.c.l.b16 %v1477
    %v2996 = vunpack.c.h.b16 %v1477
    %v2997 = vunpack.c.l.b16 %v1478
    %v2998 = vunpack.c.h.b16 %v1478
    %v2999 = vunpack.c.l.b16 %v1479
    %v3000 = vunpack.c.h.b16 %v1479
    %v3001 = vunpack.c.l.b16 %v1480
    %v3002 = vunpack.c.h.b16 %v1480
    %v3003 = vunpack.c.l.b16 %v1481
    %v3004 = vunpack.c.h.b16 %v1481
    %v3005 = vunpack.c.l.b16 %v1482
    %v3006 = vunpack.c.h.b16 %v1482
    %v3007 = vunpack.c.l.b16 %v1483
    %v3008 = vunpack.c.h.b16 %v1483
    %v3009 = vunpack.c.l.b16 %v1484
    %v3010 = vunpack.c.h.b16 %v1484
    %v3011 = vunpack.c.l.b16 %v1485
    %v3012 = vunpack.c.h.b16 %v1485
    %v3013 = vunpack.c.l.b16 %v1486
    %v3014 = vunpack.c.h.b16 %v1486
    %v3015 = vunpack.c.l.b16 %v1487
    %v3016 = vunpack.c.h.b16 %v1487
    %v3017 = vunpack.c.l.b16 %v1488
    %v3018 = vunpack.c.h.b16 %v1488
    %v3019 = vunpack.c.l.b16 %v1489
    %v3020 = vunpack.c.h.b16 %v1489
    %v3021 = vunpack.c.l.b16 %v1490
    %v3022 = vunpack.c.h.b16 %v1490
    %v3023 = vunpack.c.l.b16 %v1491
    %v3024 = vunpack.c.h.b16 %v1491
    %v3025 = vunpack.c.l.b16 %v1492
    %v3026 = vunpack.c.h.b16 %v1492
    %v3027 = vunpack.c.l.b16 %v1493
    %v3028 = vunpack.c.h.b16 %v1493
    %v3029 = vunpack.c.l.b16 %v1494
    %v3030 = vunpack.c.h.b16 %v1494
    %v3031 = vunpack.c.l.b16 %v1495
    %v3032 = vunpack.c.h.b16 %v1495
    %v3033 = vunpack.c.l.b16 %v1496
    %v3034 = vunpack.c.h.b16 %v1496
    %v3035 = vunpack.c.l.b16 %v1497
    %v3036 = vunpack.c.h.b16 %v1497
    %v3037 = vunpack.c.l.b16 %v1498
    %v3038 = vunpack.c.h.b16 %v1498
    %v3039 = vunpack.c.l.b16 %v1499
    %v3040 = vunpack.c.h.b16 %v1499
    %v3041 = vunpack.c.l.b16 %v1500
    %v3042 = vunpack.c.h.b16 %v1500
    %v3043 = vunpack.c.l.b16 %v1501
    %v3044 = vunpack.c.h.b16 %v1501
    %v3045 = vunpack.c.l.b16 %v1502
    %v3046 = vunpack.c.h.b16 %v1502
    %v3047 = vunpack.c.l.b16 %v1503
    %v3048 = vunpack.c.h.b16 %v1503
    %v3049 = vunpack.c.l.b16 %v1504
    %v3050 = vunpack.c.h.b16 %v1504
    %v3051 = vunpack.c.l.b16 %v1505
    %v3052 = vunpack.c.h.b16 %v1505
    %v3053 = vunpack.c.l.b16 %v1506
    %v3054 = vunpack.c.h.b16 %v1506
    %v3055 = vunpack.c.l.b16 %v1507
    %v3056 = vunpack.c.h.b16 %v1507
    %v3057 = vunpack.c.l.b16 %v1508
    %v3058 = vunpack.c.h.b16 %v1508
    %v3059 = vunpack.c.l.b16 %v1509
    %v3060 = vunpack.c.h.b16 %v1509
    %v3061 = vunpack.c.l.b16 %v1510
    %v3062 = vunpack.c.h.b16 %v1510
    %v3063 = vunpack.c.l.b16 %v1511
    %v3064 = vunpack.c.h.b16 %v1511
    %v3065 = vunpack.c.l.b16 %v1512
    %v3066 = vunpack.c.h.b16 %v1512
    %v3067 = vunpack.c.l.b16 %v1513
    %v3068 = vunpack.c.h.b16 %v1513
    %v3069 = vunpack.c.l.b16 %v1514
    %v3070 = vunpack.c.h.b16 %v1514
    %v3071 = vunpack.c.l.b16 %v1515
    %v3072 = vunpack.c.h.b16 %v1515
    %v3073 = vunpack.c.l.b16 %v1516
    %v3074 = vunpack.c.h.b16 %v1516
    %v3075 = vunpack.c.l.b16 %v1517
    %v3076 = vunpack.c.h.b16 %v1517
    %v3077 = vunpack.c.l.b16 %v1518
    %v3078 = vunpack.c.h.b16 %v1518
    %v3079 = vunpack.c.l.b16 %v1519
    %v3080 = vunpack.c.h.b16 %v1519
    %v3081 = vunpack.c.l.b16 %v1520
    %v3082 = vunpack.c.h.b16 %v1520
    %v3083 = vunpack.c.l.b16 %v1521
    %v3084 = vunpack.c.h.b16 %v1521
    %v3085 = vunpack.c.l.b16 %v1522
    %v3086 = vunpack.c.h.b16 %v1522
    %v3087 = vunpack.c.l.b16 %v1523
    %v3088 = vunpack.c.h.b16 %v1523
    %v3089 = vunpack.c.l.b16 %v1524
    %v3090 = vunpack.c.h.b16 %v1524
    %v3091 = vunpack.c.l.b16 %v1525
    %v3092 = vunpack.c.h.b16 %v1525
    %v3093 = vunpack.c.l.b16 %v1526
    %v3094 = vunpack.c.h.b16 %v1526
    %v3095 = vunpack.c.l.b16 %v1527
    %v3096 = vunpack.c.h.b16 %v1527
    %v3097 = vunpack.c.l.b16 %v1528
    %v3098 = vunpack.c.h.b16 %v1528
    %v3099 = vunpack.c.l.b16 %v1529
    %v3100 = vunpack.c.h.b16 %v1529
    %v3101 = vunpack.c.l.b16 %v1530
    %v3102 = vunpack.c.h.b16 %v1530
    %v3103 = vunpack.c.l.b16 %v1531
    %v3104 = vunpack.c.h.b16 %v1531
    %v3105 = vunpack.c.l.b16 %v1532
    %v3106 = vunpack.c.h.b16 %v1532
    %v3107 = vunpack.c.l.b16 %v1533
    %v3108 = vunpack.c.h.b16 %v1533
    %v3109 = vunpack.c.l.b16 %v1534
    %v3110 = vunpack.c.h.b16 %v1534
    %v3111 = vunpack.c.l.b16 %v1535
    %v3112 = vunpack.c.h.b16 %v1535
    %v3113 = vunpack.c.l.b16 %v1536
    %v3114 = vunpack.c.h.b16 %v1536
    %v3115 = vunpack.c.l.b16 %v1537
    %v3116 = vunpack.c.h.b16 %v1537
    %v3117 = vunpack.c.l.b16 %v1538
    %v3118 = vunpack.c.h.b16 %v1538
    %v3119 = vunpack.c.l.b16 %v1539
    %v3120 = vunpack.c.h.b16 %v1539
    %v3121 = vunpack.c.l.b16 %v1540
    %v3122 = vunpack.c.h.b16 %v1540
    %v3123 = vunpack.c.l.b16 %v1541
    %v3124 = vunpack.c.h.b16 %v1541
    %v3125 = vunpack.c.l.b16 %v1542
    %v3126 = vunpack.c.h.b16 %v1542
    %v3127 = vunpack.c.l.b16 %v1543
    %v3128 = vunpack.c.h.b16 %v1543
    %v3129 = vunpack.c.l.b16 %v1544
    %v3130 = vunpack.c.h.b16 %v1544
    %v3131 = vunpack.c.l.b16 %v1545
    %v3132 = vunpack.c.h.b16 %v1545
    %v3133 = vunpack.c.l.b16 %v1546
    %v3134 = vunpack.c.h.b16 %v1546
    %v3135 = vunpack.c.l.b16 %v1547
    %v3136 = vunpack.c.h.b16 %v1547
    %v3137 = vunpack.c.l.b16 %v1548
    %v3138 = vunpack.c.h.b16 %v1548
    %v3139 = vunpack.c.l.b16 %v1549
    %v3140 = vunpack.c.h.b16 %v1549
    %v3141 = vunpack.c.l.b16 %v1550
    %v3142 = vunpack.c.h.b16 %v1550
    %v3143 = vunpack.c.l.b16 %v1551
    %v3144 = vunpack.c.h.b16 %v1551
    %v3145 = vunpack.c.l.b16 %v1552
    %v3146 = vunpack.c.h.b16 %v1552
    %v3147 = vunpack.c.l.b16 %v1553
    %v3148 = vunpack.c.h.b16 %v1553
    %v3149 = vunpack.c.l.b16 %v1554
    %v3150 = vunpack.c.h.b16 %v1554
    %v3151 = vunpack.c.l.b16 %v1555
    %v3152 = vunpack.c.h.b16 %v1555
    %v3153 = vunpack.c.l.b16 %v1556
    %v3154 = vunpack.c.h.b16 %v1556
    %v3155 = vunpack.c.l.b16 %v1557
    %v3156 = vunpack.c.h.b16 %v1557
    %v3157 = vunpack.c.l.b16 %v1558
    %v3158 = vunpack.c.h.b16 %v1558
    %v3159 = vunpack.c.l.b16 %v1559
    %v3160 = vunpack.c.h.b16 %v1559
    %v3161 = vunpack.c.l.b16 %v1560
    %v3162 = vunpack.c.h.b16 %v1560
    %v3163 = vunpack.c.l.b16 %v1561
    %v3164 = vunpack.c.h.b16 %v1561
    %v3165 = vunpack.c.l.b16 %v1562
    %v3166 = vunpack.c.h.b16 %v1562
    %v3167 = vunpack.c.l.b16 %v1563
    %v3168 = vunpack.c.h.b16 %v1563
    %v3169 = vunpack.c.l.b16 %v1564
    %v3170 = vunpack.c.h.b16 %v1564
    %v3171 = vunpack.c.l.b16 %v1565
    %v3172 = vunpack.c.h.b16 %v1565
    %v3173 = vunpack.c.l.b16 %v1566
    %v3174 = vunpack.c.h.b16 %v1566
    %v3175 = vpack.c.b16 %v2183, %v2151
    %v3176 = vpack.c.b16 %v2184, %v2152
    %v3177 = vpack.c.b16 %v2185, %v2153
    %v3178 = vpack.c.b16 %v2186, %v2154
    %v3179 = vpack.c.b16 %v2187, %v2155
    %v3180 = vpack.c.b16 %v2188, %v2156
    %v3181 = vpack.c.b16 %v2189, %v2157
    %v3182 = vpack.c.b16 %v2190, %v2158
    %v3183 = vpack.c.b16 %v2191, %v2159
    %v3184 = vpack.c.b16 %v2192, %v2160
    %v3185 = vpack.c.b16 %v2193, %v2161
    %v3186 = vpack.c.b16 %v2194, %v2162
    %v3187 = vpack.c.b16 %v2195, %v2163
    %v3188 = vpack.c.b16 %v2196, %v2164
    %v3189 = vpack.c.b16 %v2197, %v2165
    %v3190 = vpack.c.b16 %v2198, %v2166
    %v3191 = vpack.c.b16 %v2199, %v2167
    %v3192 = vpack.c.b16 %v2200, %v2168
    %v3193 = vpack.c.b16 %v2201, %v2169
    %v3194 = vpack.c.b16 %v2202, %v2170
    %v3195 = vpack.c.b16 %v2203, %v2171
    %v3196 = vpack.c.b16 %v2204, %v2172
    %v3197 = vpack.c.b16 %v2205, %v2173
    %v3198 = vpack.c.b16 %v2206, %v2174
    %v3199 = vpack.c.b16 %v2207, %v2175
    %v3200 = vpack.c.b16 %v2208, %v2176
    %v3201 = vpack.c.b16 %v2209, %v2177
    %v3202 = vpack.c.b16 %v2210, %v2178
    %v3203 = vpack.c.b16 %v2211, %v2179
    %v3204 = vpack.c.b16 %v2212, %v2180
    %v3205 = vpack.c.b16 %v2213, %v2181
    %v3206 = vpack.c.b16 %v2214, %v2182
    %v3207 = vpack.c.b16 %v2247, %v2215
    %v3208 = vpack.c.b16 %v2248, %v2216
    %v3209 = vpack.c.b16 %v2249, %v2217
    %v3210 = vpack.c.b16 %v2250, %v2218
    %v3211 = vpack.c.b16 %v2251, %v2219
    %v3212 = vpack.c.b16 %v2252, %v2220
    %v3213 = vpack.c.b16 %v2253, %v2221
    %v3214 = vpack.c.b16 %v2254, %v2222
    %v3215 = vpack.c.b16 %v2255, %v2223
    %v3216 = vpack.c.b16 %v2256, %v2224
    %v3217 = vpack.c.b16 %v2257, %v2225
    %v3218 = vpack.c.b16 %v2258, %v2226
    %v3219 = vpack.c.b16 %v2259, %v2227
    %v3220 = vpack.c.b16 %v2260, %v2228
    %v3221 = vpack.c.b16 %v2261, %v2229
    %v3222 = vpack.c.b16 %v2262, %v2230
    %v3223 = vpack.c.b16 %v2263, %v2231
    %v3224 = vpack.c.b16 %v2264, %v2232
    %v3225 = vpack.c.b16 %v2265, %v2233
    %v3226 = vpack.c.b16 %v2266, %v2234
    %v3227 = vpack.c.b16 %v2267, %v2235
    %v3228 = vpack.c.b16 %v2268, %v2236
    %v3229 = vpack.c.b16 %v2269, %v2237
    %v3230 = vpack.c.b16 %v2270, %v2238
    %v3231 = vpack.c.b16 %v2271, %v2239
    %v3232 = vpack.c.b16 %v2272, %v2240
    %v3233 = vpack.c.b16 %v2273, %v2241
    %v3234 = vpack.c.b16 %v2274, %v2242
    %v3235 = vpack.c.b16 %v2275, %v2243
    %v3236 = vpack.c.b16 %v2276, %v2244
    %v3237 = vpack.c.b16 %v2277, %v2245
    %v3238 = vpack.c.b16 %v2278, %v2246
    %v3239 = vpack.c.b16 %v2311, %v2279
    %v3240 = vpack.c.b16 %v2312, %v2280
    %v3241 = vpack.c.b16 %v2313, %v2281
    %v3242 = vpack.c.b16 %v2314, %v2282
    %v3243 = vpack.c.b16 %v2315, %v2283
    %v3244 = vpack.c.b16 %v2316, %v2284
    %v3245 = vpack.c.b16 %v2317, %v2285
    %v3246 = vpack.c.b16 %v2318, %v2286
    %v3247 = vpack.c.b16 %v2319, %v2287
    %v3248 = vpack.c.b16 %v2320, %v2288
    %v3249 = vpack.c.b16 %v2321, %v2289
    %v3250 = vpack.c.b16 %v2322, %v2290
    %v3251 = vpack.c.b16 %v2323, %v2291
    %v3252 = vpack.c.b16 %v2324, %v2292
    %v3253 = vpack.c.b16 %v2325, %v2293
    %v3254 = vpack.c.b16 %v2326, %v2294
    %v3255 = vpack.c.b16 %v2327, %v2295
    %v3256 = vpack.c.b16 %v2328, %v2296
    %v3257 = vpack.c.b16 %v2329, %v2297
    %v3258 = vpack.c.b16 %v2330, %v2298
    %v3259 = vpack.c.b16 %v2331, %v2299
    %v3260 = vpack.c.b16 %v2332, %v2300
    %v3261 = vpack.c.b16 %v2333, %v2301
    %v3262 = vpack.c.b16 %v2334, %v2302
    %v3263 = vpack.c.b16 %v2335, %v2303
    %v3264 = vpack.c.b16 %v2336, %v2304
    %v3265 = vpack.c.b16 %v2337, %v2305
    %v3266 = vpack.c.b16 %v2338, %v2306
    %v3267 = vpack.c.b16 %v2339, %v2307
    %v3268 = vpack.c.b16 %v2340, %v2308
    %v3269 = vpack.c.b16 %v2341, %v2309
    %v3270 = vpack.c.b16 %v2342, %v2310
    %v3271 = vpack.c.b16 %v2375, %v2343
    %v3272 = vpack.c.b16 %v2376, %v2344
    %v3273 = vpack.c.b16 %v2377, %v2345
    %v3274 = vpack.c.b16 %v2378, %v2346
    %v3275 = vpack.c.b16 %v2379, %v2347
    %v3276 = vpack.c.b16 %v2380, %v2348
    %v3277 = vpack.c.b16 %v2381, %v2349
    %v3278 = vpack.c.b16 %v2382, %v2350
    %v3279 = vpack.c.b16 %v2383, %v2351
    %v3280 = vpack.c.b16 %v2384, %v2352
    %v3281 = vpack.c.b16 %v2385, %v2353
    %v3282 = vpack.c.b16 %v2386, %v2354
    %v3283 = vpack.c.b16 %v2387, %v2355
    %v3284 = vpack.c.b16 %v2388, %v2356
    %v3285 = vpack.c.b16 %v2389, %v2357
    %v3286 = vpack.c.b16 %v2390, %v2358
    %v3287 = vpack.c.b16 %v2391, %v2359
    %v3288 = vpack.c.b16 %v2392, %v2360
    %v3289 = vpack.c.b16 %v2393, %v2361
    %v3290 = vpack.c.b16 %v2394, %v2362
    %v3291 = vpack.c.b16 %v2395, %v2363
    %v3292 = vpack.c.b16 %v2396, %v2364
    %v3293 = vpack.c.b16 %v2397, %v2365
    %v3294 = vpack.c.b16 %v2398, %v2366
    %v3295 = vpack.c.b16 %v2399, %v2367
    %v3296 = vpack.c.b16 %v2400, %v2368
    %v3297 = vpack.c.b16 %v2401, %v2369
    %v3298 = vpack.c.b16 %v2402, %v2370
    %v3299 = vpack.c.b16 %v2403, %v2371
    %v3300 = vpack.c.b16 %v2404, %v2372
    %v3301 = vpack.c.b16 %v2405, %v2373
    %v3302 = vpack.c.b16 %v2406, %v2374
    %v3303 = vpack.c.b16 %v2439, %v2407
    %v3304 = vpack.c.b16 %v2440, %v2408
    %v3305 = vpack.c.b16 %v2441, %v2409
    %v3306 = vpack.c.b16 %v2442, %v2410
    %v3307 = vpack.c.b16 %v2443, %v2411
    %v3308 = vpack.c.b16 %v2444, %v2412
    %v3309 = vpack.c.b16 %v2445, %v2413
    %v3310 = vpack.c.b16 %v2446, %v2414
    %v3311 = vpack.c.b16 %v2447, %v2415
    %v3312 = vpack.c.b16 %v2448, %v2416
    %v3313 = vpack.c.b16 %v2449, %v2417
    %v3314 = vpack.c.b16 %v2450, %v2418
    %v3315 = vpack.c.b16 %v2451, %v2419
    %v3316 = vpack.c.b16 %v2452, %v2420
    %v3317 = vpack.c.b16 %v2453, %v2421
    %v3318 = vpack.c.b16 %v2454, %v2422
    %v3319 = vpack.c.b16 %v2455, %v2423
    %v3320 = vpack.c.b16 %v2456, %v2424
    %v3321 = vpack.c.b16 %v2457, %v2425
    %v3322 = vpack.c.b16 %v2458, %v2426
    %v3323 = vpack.c.b16 %v2459, %v2427
    %v3324 = vpack.c.b16 %v2460, %v2428
    %v3325 = vpack.c.b16 %v2461, %v2429
    %v3326 = vpack.c.b16 %v2462, %v2430
    %v3327 = vpack.c.b16 %v2463, %v2431
    %v3328 = vpack.c.b16 %v2464, %v2432
    %v3329 = vpack.c.b16 %v2465, %v2433
    %v3330 = vpack.c.b16 %v2466, %v2434
    %v3331 = vpack.c.b16 %v2467, %v2435
    %v3332 = vpack.c.b16 %v2468, %v2436
    %v3333 = vpack.c.b16 %v2469, %v2437
    %v3334 = vpack.c.b16 %v2470, %v2438
    %v3335 = vpack.c.b16 %v2503, %v2471
    %v3336 = vpack.c.b16 %v2504, %v2472
    %v3337 = vpack.c.b16 %v2505, %v2473
    %v3338 = vpack.c.b16 %v2506, %v2474
    %v3339 = vpack.c.b16 %v2507, %v2475
    %v3340 = vpack.c.b16 %v2508, %v2476
    %v3341 = vpack.c.b16 %v2509, %v2477
    %v3342 = vpack.c.b16 %v2510, %v2478
    %v3343 = vpack.c.b16 %v2511, %v2479
    %v3344 = vpack.c.b16 %v2512, %v2480
    %v3345 = vpack.c.b16 %v2513, %v2481
    %v3346 = vpack.c.b16 %v2514, %v2482
    %v3347 = vpack.c.b16 %v2515, %v2483
    %v3348 = vpack.c.b16 %v2516, %v2484
    %v3349 = vpack.c.b16 %v2517, %v2485
    %v3350 = vpack.c.b16 %v2518, %v2486
    %v3351 = vpack.c.b16 %v2519, %v2487
    %v3352 = vpack.c.b16 %v2520, %v2488
    %v3353 = vpack.c.b16 %v2521, %v2489
    %v3354 = vpack.c.b16 %v2522, %v2490
    %v3355 = vpack.c.b16 %v2523, %v2491
    %v3356 = vpack.c.b16 %v2524, %v2492
    %v3357 = vpack.c.b16 %v2525, %v2493
    %v3358 = vpack.c.b16 %v2526, %v2494
    %v3359 = vpack.c.b16 %v2527, %v2495
    %v3360 = vpack.c.b16 %v2528, %v2496
    %v3361 = vpack.c.b16 %v2529, %v2497
    %v3362 = vpack.c.b16 %v2530, %v2498
    %v3363 = vpack.c.b16 %v2531, %v2499
    %v3364 = vpack.c.b16 %v2532, %v2500
    %v3365 = vpack.c.b16 %v2533, %v2501
    %v3366 = vpack.c.b16 %v2534, %v2502
    %v3367 = vpack.c.b16 %v2567, %v2535
    %v3368 = vpack.c.b16 %v2568, %v2536
    %v3369 = vpack.c.b16 %v2569, %v2537
    %v3370 = vpack.c.b16 %v2570, %v2538
    %v3371 = vpack.c.b16 %v2571, %v2539
    %v3372 = vpack.c.b16 %v2572, %v2540
    %v3373 = vpack.c.b16 %v2573, %v2541
    %v3374 = vpack.c.b16 %v2574, %v2542
    %v3375 = vpack.c.b16 %v2575, %v2543
    %v3376 = vpack.c.b16 %v2576, %v2544
    %v3377 = vpack.c.b16 %v2577, %v2545
    %v3378 = vpack.c.b16 %v2578, %v2546
    %v3379 = vpack.c.b16 %v2579, %v2547
    %v3380 = vpack.c.b16 %v2580, %v2548
    %v3381 = vpack.c.b16 %v2581, %v2549
    %v3382 = vpack.c.b16 %v2582, %v2550
    %v3383 = vpack.c.b16 %v2583, %v2551
    %v3384 = vpack.c.b16 %v2584, %v2552
    %v3385 = vpack.c.b16 %v2585, %v2553
    %v3386 = vpack.c.b16 %v2586, %v2554
    %v3387 = vpack.c.b16 %v2587, %v2555
    %v3388 = vpack.c.b16 %v2588, %v2556
    %v3389 = vpack.c.b16 %v2589, %v2557
    %v3390 = vpack.c.b16 %v2590, %v2558
    %v3391 = vpack.c.b16 %v2591, %v2559
    %v3392 = vpack.c.b16 %v2592, %v2560
    %v3393 = vpack.c.b16 %v2593, %v2561
    %v3394 = vpack.c.b16 %v2594, %v2562
    %v3395 = vpack.c.b16 %v2595, %v2563
    %v3396 = vpack.c.b16 %v2596, %v2564
    %v3397 = vpack.c.b16 %v2597, %v2565
    %v3398 = vpack.c.b16 %v2598, %v2566
    %v3399 = vpack.c.b16 %v2631, %v2599
    %v3400 = vpack.c.b16 %v2632, %v2600
    %v3401 = vpack.c.b16 %v2633, %v2601
    %v3402 = vpack.c.b16 %v2634, %v2602
    %v3403 = vpack.c.b16 %v2635, %v2603
    %v3404 = vpack.c.b16 %v2636, %v2604
    %v3405 = vpack.c.b16 %v2637, %v2605
    %v3406 = vpack.c.b16 %v2638, %v2606
    %v3407 = vpack.c.b16 %v2639, %v2607
    %v3408 = vpack.c.b16 %v2640, %v2608
    %v3409 = vpack.c.b16 %v2641, %v2609
    %v3410 = vpack.c.b16 %v2642, %v2610
    %v3411 = vpack.c.b16 %v2643, %v2611
    %v3412 = vpack.c.b16 %v2644, %v2612
    %v3413 = vpack.c.b16 %v2645, %v2613
    %v3414 = vpack.c.b16 %v2646, %v2614
    %v3415 = vpack.c.b16 %v2647, %v2615
    %v3416 = vpack.c.b16 %v2648, %v2616
    %v3417 = vpack.c.b16 %v2649, %v2617
    %v3418 = vpack.c.b16 %v2650, %v2618
    %v3419 = vpack.c.b16 %v2651, %v2619
    %v3420 = vpack.c.b16 %v2652, %v2620
    %v3421 = vpack.c.b16 %v2653, %v2621
    %v3422 = vpack.c.b16 %v2654, %v2622
    %v3423 = vpack.c.b16 %v2655, %v2623
    %v3424 = vpack.c.b16 %v2656, %v2624
    %v3425 = vpack.c.b16 %v2657, %v2625
    %v3426 = vpack.c.b16 %v2658, %v2626
    %v3427 = vpack.c.b16 %v2659, %v2627
    %v3428 = vpack.c.b16 %v2660, %v2628
    %v3429 = vpack.c.b16 %v2661, %v2629
    %v3430 = vpack.c.b16 %v2662, %v2630
    %v3431 = vpack.c.b16 %v2695, %v2663
    %v3432 = vpack.c.b16 %v2696, %v2664
    %v3433 = vpack.c.b16 %v2697, %v2665
    %v3434 = vpack.c.b16 %v2698, %v2666
    %v3435 = vpack.c.b16 %v2699, %v2667
    %v3436 = vpack.c.b16 %v2700, %v2668
    %v3437 = vpack.c.b16 %v2701, %v2669
    %v3438 = vpack.c.b16 %v2702, %v2670
    %v3439 = vpack.c.b16 %v2703, %v2671
    %v3440 = vpack.c.b16 %v2704, %v2672
    %v3441 = vpack.c.b16 %v2705, %v2673
    %v3442 = vpack.c.b16 %v2706, %v2674
    %v3443 = vpack.c.b16 %v2707, %v2675
    %v3444 = vpack.c.b16 %v2708, %v2676
    %v3445 = vpack.c.b16 %v2709, %v2677
    %v3446 = vpack.c.b16 %v2710, %v2678
    %v3447 = vpack.c.b16 %v2711, %v2679
    %v3448 = vpack.c.b16 %v2712, %v2680
    %v3449 = vpack.c.b16 %v2713, %v2681
    %v3450 = vpack.c.b16 %v2714, %v2682
    %v3451 = vpack.c.b16 %v2715, %v2683
    %v3452 = vpack.c.b16 %v2716, %v2684
    %v3453 = vpack.c.b16 %v2717, %v2685
    %v3454 = vpack.c.b16 %v2718, %v2686
    %v3455 = vpack.c.b16 %v2719, %v2687
    %v3456 = vpack.c.b16 %v2720, %v2688
    %v3457 = vpack.c.b16 %v2721, %v2689
    %v3458 = vpack.c.b16 %v2722, %v2690
    %v3459 = vpack.c.b16 %v2723, %v2691
    %v3460 = vpack.c.b16 %v2724, %v2692
    %v3461 = vpack.c.b16 %v2725, %v2693
    %v3462 = vpack.c.b16 %v2726, %v2694
    %v3463 = vpack.c.b16 %v2759, %v2727
    %v3464 = vpack.c.b16 %v2760, %v2728
    %v3465 = vpack.c.b16 %v2761, %v2729
    %v3466 = vpack.c.b16 %v2762, %v2730
    %v3467 = vpack.c.b16 %v2763, %v2731
    %v3468 = vpack.c.b16 %v2764, %v2732
    %v3469 = vpack.c.b16 %v2765, %v2733
    %v3470 = vpack.c.b16 %v2766, %v2734
    %v3471 = vpack.c.b16 %v2767, %v2735
    %v3472 = vpack.c.b16 %v2768, %v2736
    %v3473 = vpack.c.b16 %v2769, %v2737
    %v3474 = vpack.c.b16 %v2770, %v2738
    %v3475 = vpack.c.b16 %v2771, %v2739
    %v3476 = vpack.c.b16 %v2772, %v2740
    %v3477 = vpack.c.b16 %v2773, %v2741
    %v3478 = vpack.c.b16 %v2774, %v2742
    %v3479 = vpack.c.b16 %v2775, %v2743
    %v3480 = vpack.c.b16 %v2776, %v2744
    %v3481 = vpack.c.b16 %v2777, %v2745
    %v3482 = vpack.c.b16 %v2778, %v2746
    %v3483 = vpack.c.b16 %v2779, %v2747
    %v3484 = vpack.c.b16 %v2780, %v2748
    %v3485 = vpack.c.b16 %v2781, %v2749
    %v3486 = vpack.c.b16 %v2782, %v2750
    %v3487 = vpack.c.b16 %v2783, %v2751
    %v3488 = vpack.c.b16 %v2784, %v2752
    %v3489 = vpack.c.b16 %v2785, %v2753
    %v3490 = vpack.c.b16 %v2786, %v2754
    %v3491 = vpack.c.b16 %v2787, %v2755
    %v3492 = vpack.c.b16 %v2788, %v2756
    %v3493 = vpack.c.b16 %v2789, %v2757
    %v3494 = vpack.c.b16 %v2790, %v2758
    %v3495 = vpack.c.b16 %v2823, %v2791
    %v3496 = vpack.c.b16 %v2824, %v2792
    %v3497 = vpack.c.b16 %v2825, %v2793
    %v3498 = vpack.c.b16 %v2826, %v2794
    %v3499 = vpack.c.b16 %v2827, %v2795
    %v3500 = vpack.c.b16 %v2828, %v2796
    %v3501 = vpack.c.b16 %v2829, %v2797
    %v3502 = vpack.c.b16 %v2830, %v2798
    %v3503 = vpack.c.b16 %v2831, %v2799
    %v3504 = vpack.c.b16 %v2832, %v2800
    %v3505 = vpack.c.b16 %v2833, %v2801
    %v3506 = vpack.c.b16 %v2834, %v2802
    %v3507 = vpack.c.b16 %v2835, %v2803
    %v3508 = vpack.c.b16 %v2836, %v2804
    %v3509 = vpack.c.b16 %v2837, %v2805
    %v3510 = vpack.c.b16 %v2838, %v2806
    %v3511 = vpack.c.b16 %v2839, %v2807
    %v3512 = vpack.c.b16 %v2840, %v2808
    %v3513 = vpack.c.b16 %v2841, %v2809
    %v3514 = vpack.c.b16 %v2842, %v2810
    %v3515 = vpack.c.b16 %v2843, %v2811
    %v3516 = vpack.c.b16 %v2844, %v2812
    %v3517 = vpack.c.b16 %v2845, %v2813
    %v3518 = vpack.c.b16 %v2846, %v2814
    %v3519 = vpack.c.b16 %v2847, %v2815
    %v3520 = vpack.c.b16 %v2848, %v2816
    %v3521 = vpack.c.b16 %v2849, %v2817
    %v3522 = vpack.c.b16 %v2850, %v2818
    %v3523 = vpack.c.b16 %v2851, %v2819
    %v3524 = vpack.c.b16 %v2852, %v2820
    %v3525 = vpack.c.b16 %v2853, %v2821
    %v3526 = vpack.c.b16 %v2854, %v2822
    %v3527 = vpack.c.b16 %v2887, %v2855
    %v3528 = vpack.c.b16 %v2888, %v2856
    %v3529 = vpack.c.b16 %v2889, %v2857
    %v3530 = vpack.c.b16 %v2890, %v2858
    %v3531 = vpack.c.b16 %v2891, %v2859
    %v3532 = vpack.c.b16 %v2892, %v2860
    %v3533 = vpack.c.b16 %v2893, %v2861
    %v3534 = vpack.c.b16 %v2894, %v2862
    %v3535 = vpack.c.b16 %v2895, %v2863
    %v3536 = vpack.c.b16 %v2896, %v2864
    %v3537 = vpack.c.b16 %v2897, %v2865
    %v3538 = vpack.c.b16 %v2898, %v2866
    %v3539 = vpack.c.b16 %v2899, %v2867
    %v3540 = vpack.c.b16 %v2900, %v2868
    %v3541 = vpack.c.b16 %v2901, %v2869
    %v3542 = vpack.c.b16 %v2902, %v2870
    %v3543 = vpack.c.b16 %v2903, %v2871
    %v3544 = vpack.c.b16 %v2904, %v2872
    %v3545 = vpack.c.b16 %v2905, %v2873
    %v3546 = vpack.c.b16 %v2906, %v2874
    %v3547 = vpack.c.b16 %v2907, %v2875
    %v3548 = vpack.c.b16 %v2908, %v2876
    %v3549 = vpack.c.b16 %v2909, %v2877
    %v3550 = vpack.c.b16 %v2910, %v2878
    %v3551 = vpack.c.b16 %v2911, %v2879
    %v3552 = vpack.c.b16 %v2912, %v2880
    %v3553 = vpack.c.b16 %v2913, %v2881
    %v3554 = vpack.c.b16 %v2914, %v2882
    %v3555 = vpack.c.b16 %v2915, %v2883
    %v3556 = vpack.c.b16 %v2916, %v2884
    %v3557 = vpack.c.b16 %v2917, %v2885
    %v3558 = vpack.c.b16 %v2918, %v2886
    %v3559 = vpack.c.b16 %v2951, %v2919
    %v3560 = vpack.c.b16 %v2952, %v2920
    %v3561 = vpack.c.b16 %v2953, %v2921
    %v3562 = vpack.c.b16 %v2954, %v2922
    %v3563 = vpack.c.b16 %v2955, %v2923
    %v3564 = vpack.c.b16 %v2956, %v2924
    %v3565 = vpack.c.b16 %v2957, %v2925
    %v3566 = vpack.c.b16 %v2958, %v2926
    %v3567 = vpack.c.b16 %v2959, %v2927
    %v3568 = vpack.c.b16 %v2960, %v2928
    %v3569 = vpack.c.b16 %v2961, %v2929
    %v3570 = vpack.c.b16 %v2962, %v2930
    %v3571 = vpack.c.b16 %v2963, %v2931
    %v3572 = vpack.c.b16 %v2964, %v2932
    %v3573 = vpack.c.b16 %v2965, %v2933
    %v3574 = vpack.c.b16 %v2966, %v2934
    %v3575 = vpack.c.b16 %v2967, %v2935
    %v3576 = vpack.c.b16 %v2968, %v2936
    %v3577 = vpack.c.b16 %v2969, %v2937
    %v3578 = vpack.c.b16 %v2970, %v2938
    %v3579 = vpack.c.b16 %v2971, %v2939
    %v3580 = vpack.c.b16 %v2972, %v2940
    %v3581 = vpack.c.b16 %v2973, %v2941
    %v3582 = vpack.c.b16 %v2974, %v2942
    %v3583 = vpack.c.b16 %v2975, %v2943
    %v3584 = vpack.c.b16 %v2976, %v2944
    %v3585 = vpack.c.b16 %v2977, %v2945
    %v3586 = vpack.c.b16 %v2978, %v2946
    %v3587 = vpack.c.b16 %v2979, %v2947
    %v3588 = vpack.c.b16 %v2980, %v2948
    %v3589 = vpack.c.b16 %v2981, %v2949
    %v3590 = vpack.c.b16 %v2982, %v2950
    %v3591 = vpack.c.b16 %v3015, %v2983
    %v3592 = vpack.c.b16 %v3016, %v2984
    %v3593 = vpack.c.b16 %v3017, %v2985
    %v3594 = vpack.c.b16 %v3018, %v2986
    %v3595 = vpack.c.b16 %v3019, %v2987
    %v3596 = vpack.c.b16 %v3020, %v2988
    %v3597 = vpack.c.b16 %v3021, %v2989
    %v3598 = vpack.c.b16 %v3022, %v2990
    %v3599 = vpack.c.b16 %v3023, %v2991
    %v3600 = vpack.c.b16 %v3024, %v2992
    %v3601 = vpack.c.b16 %v3025, %v2993
    %v3602 = vpack.c.b16 %v3026, %v2994
    %v3603 = vpack.c.b16 %v3027, %v2995
    %v3604 = vpack.c.b16 %v3028, %v2996
    %v3605 = vpack.c.b16 %v3029, %v2997
    %v3606 = vpack.c.b16 %v3030, %v2998
    %v3607 = vpack.c.b16 %v3031, %v2999
    %v3608 = vpack.c.b16 %v3032, %v3000
    %v3609 = vpack.c.b16 %v3033, %v3001
    %v3610 = vpack.c.b16 %v3034, %v3002
    %v3611 = vpack.c.b16 %v3035, %v3003
    %v3612 = vpack.c.b16 %v3036, %v3004
    %v3613 = vpack.c.b16 %v3037, %v3005
    %v3614 = vpack.c.b16 %v3038, %v3006
    %v3615 = vpack.c.b16 %v3039, %v3007
    %v3616 = vpack.c.b16 %v3040, %v3008
    %v3617 = vpack.c.b16 %v3041, %v3009
    %v3618 = vpack.c.b16 %v3042, %v3010
    %v3619 = vpack.c.b16 %v3043, %v3011
    %v3620 = vpack.c.b16 %v3044, %v3012
    %v3621 = vpack.c.b16 %v3045, %v3013
    %v3622 = vpack.c.b16 %v3046, %v3014
    %v3623 = vpack.c.b16 %v3079, %v3047
    %v3624 = vpack.c.b16 %v3080, %v3048
    %v3625 = vpack.c.b16 %v3081, %v3049
    %v3626 = vpack.c.b16 %v3082, %v3050
    %v3627 = vpack.c.b16 %v3083, %v3051
    %v3628 = vpack.c.b16 %v3084, %v3052
    %v3629 = vpack.c.b16 %v3085, %v3053
    %v3630 = vpack.c.b16 %v3086, %v3054
    %v3631 = vpack.c.b16 %v3087, %v3055
    %v3632 = vpack.c.b16 %v3088, %v3056
    %v3633 = vpack.c.b16 %v3089, %v3057
    %v3634 = vpack.c.b16 %v3090, %v3058
    %v3635 = vpack.c.b16 %v3091, %v3059
    %v3636 = vpack.c.b16 %v3092, %v3060
    %v3637 = vpack.c.b16 %v3093, %v3061
    %v3638 = vpack.c.b16 %v3094, %v3062
    %v3639 = vpack.c.b16 %v3095, %v3063
    %v3640 = vpack.c.b16 %v3096, %v3064
    %v3641 = vpack.c.b16 %v3097, %v3065
    %v3642 = vpack.c.b16 %v3098, %v3066
    %v3643 = vpack.c.b16 %v3099, %v3067
    %v3644 = vpack.c.b16 %v3100, %v3068
    %v3645 = vpack.c.b16 %v3101, %v3069
    %v3646 = vpack.c.b16 %v3102, %v3070
    %v3647 = vpack.c.b16 %v3103, %v3071
    %v3648 = vpack.c.b16 %v3104, %v3072
    %v3649 = vpack.c.b16 %v3105, %v3073
    %v3650 = vpack.c.b16 %v3106, %v3074
    %v3651 = vpack.c.b16 %v3107, %v3075
    %v3652 = vpack.c.b16 %v3108, %v3076
    %v3653 = vpack.c.b16 %v3109, %v3077
    %v3654 = vpack.c.b16 %v3110, %v3078
    %v3655 = vpack.c.b16 %v3143, %v3111
    %v3656 = vpack.c.b16 %v3144, %v3112
    %v3657 = vpack.c.b16 %v3145, %v3113
    %v3658 = vpack.c.b16 %v3146, %v3114
    %v3659 = vpack.c.b16 %v3147, %v3115
    %v3660 = vpack.c.b16 %v3148, %v3116
    %v3661 = vpack.c.b16 %v3149, %v3117
    %v3662 = vpack.c.b16 %v3150, %v3118
    %v3663 = vpack.c.b16 %v3151, %v3119
    %v3664 = vpack.c.b16 %v3152, %v3120
    %v3665 = vpack.c.b16 %v3153, %v3121
    %v3666 = vpack.c.b16 %v3154, %v3122
    %v3667 = vpack.c.b16 %v3155, %v3123
    %v3668 = vpack.c.b16 %v3156, %v3124
    %v3669 = vpack.c.b16 %v3157, %v3125
    %v3670 = vpack.c.b16 %v3158, %v3126
    %v3671 = vpack.c.b16 %v3159, %v3127
    %v3672 = vpack.c.b16 %v3160, %v3128
    %v3673 = vpack.c.b16 %v3161, %v3129
    %v3674 = vpack.c.b16 %v3162, %v3130
    %v3675 = vpack.c.b16 %v3163, %v3131
    %v3676 = vpack.c.b16 %v3164, %v3132
    %v3677 = vpack.c.b16 %v3165, %v3133
    %v3678 = vpack.c.b16 %v3166, %v3134
    %v3679 = vpack.c.b16 %v3167, %v3135
    %v3680 = vpack.c.b16 %v3168, %v3136
    %v3681 = vpack.c.b16 %v3169, %v3137
    %v3682 = vpack.c.b16 %v3170, %v3138
    %v3683 = vpack.c.b16 %v3171, %v3139
    %v3684 = vpack.c.b16 %v3172, %v3140
    %v3685 = vpack.c.b16 %v3173, %v3141
    %v3686 = vpack.c.b16 %v3174, %v3142
    %4199 = vmatpush.bf16.msra.mxu0 %v3399
    %4200 = vmatpush.bf16.msra.mxu0 %v3367
    %4201 = vmatpush.bf16.msra.mxu0 %v3335
    %4202 = vmatpush.bf16.msra.mxu0 %v3303
    %4203 = vmatpush.bf16.msra.mxu0 %v3271
    %4204 = vmatpush.bf16.msra.mxu0 %v3239
    %4205 = vmatpush.bf16.msra.mxu0 %v3207
    %4206 = vmatpush.bf16.msra.mxu0 %v3175
    %4207 = vmatmul.bf16.gmra.mxu0 %v1039
    %v4208 = vpop.f32.mrf.mxu0
    %v4209 = vadd.f32 %v1575, %v4208
    %v4210 = vpop.f32.mrf.mxu0
    %4211 = vmatmul.bf16.gmra.mxu0 %v1041
    %v4212 = vpop.f32.mrf.mxu0
    %v4213 = vpop.f32.mrf.mxu0
    %4214 = vmatmul.bf16.gmra.mxu0 %v1043
    %v4215 = vpop.f32.mrf.mxu0
    %v4216 = vpop.f32.mrf.mxu0
    %4217 = vmatmul.bf16.gmra.mxu0 %v1045
    %v4218 = vpop.f32.mrf.mxu0
    %v4219 = vpop.f32.mrf.mxu0
    %4220 = vmatmul.bf16.gmra.mxu0 %v1047
    %v4221 = vpop.f32.mrf.mxu0
    %v4222 = vpop.f32.mrf.mxu0
    %4223 = vmatmul.bf16.gmra.mxu0 %v1049
    %v4224 = vpop.f32.mrf.mxu0
    %v4225 = vpop.f32.mrf.mxu0
    %4226 = vmatmul.bf16.gmra.mxu0 %v1051
    %v4227 = vpop.f32.mrf.mxu0
    %v4228 = vpop.f32.mrf.mxu0
    %4229 = vmatmul.bf16.gmra.mxu0 %v1053
    %v4230 = vpop.f32.mrf.mxu0
    %v4231 = vpop.f32.mrf.mxu0
    %4232 = vdwg.mxu0
    %4233 = vmatpush.bf16.msra.mxu0 %v3655
    %4234 = vmatpush.bf16.msra.mxu0 %v3623
    %4235 = vmatpush.bf16.msra.mxu0 %v3591
    %4236 = vmatpush.bf16.msra.mxu0 %v3559
    %4237 = vmatpush.bf16.msra.mxu0 %v3527
    %4238 = vmatpush.bf16.msra.mxu0 %v3495
    %4239 = vmatpush.bf16.msra.mxu0 %v3463
    %4240 = vmatpush.bf16.msra.mxu0 %v3431
    %4241 = vmatmul.bf16.gmra.mxu0 %v1040
    %v4242 = vpop.f32.mrf.mxu0
    %v4243 = vadd.f32 %v4209, %v4242
    %v4244 = vpop.f32.mrf.mxu0
    %4245 = vmatmul.bf16.gmra.mxu0 %v1042
    %v4246 = vpop.f32.mrf.mxu0
    %v4247 = vpop.f32.mrf.mxu0
    %4248 = vmatmul.bf16.gmra.mxu0 %v1044
    %v4249 = vpop.f32.mrf.mxu0
    %v4250 = vpop.f32.mrf.mxu0
    %4251 = vmatmul.bf16.gmra.mxu0 %v1046
    %v4252 = vpop.f32.mrf.mxu0
    %v4253 = vpop.f32.mrf.mxu0
    %4254 = vmatmul.bf16.gmra.mxu0 %v1048
    %v4255 = vpop.f32.mrf.mxu0
    %v4256 = vpop.f32.mrf.mxu0
    %4257 = vmatmul.bf16.gmra.mxu0 %v1050
    %v4258 = vpop.f32.mrf.mxu0
    %v4259 = vpop.f32.mrf.mxu0
    %4260 = vmatmul.bf16.gmra.mxu0 %v1052
    %v4261 = vpop.f32.mrf.mxu0
    %v4262 = vpop.f32.mrf.mxu0
    %4263 = vmatmul.bf16.gmra.mxu0 %v1054
    %v4264 = vpop.f32.mrf.mxu0
    %v4265 = vpop.f32.mrf.mxu0
    %4266 = vdwg.mxu0
    %4267 = vmatpush.bf16.msra.mxu0 %v3400
    %4268 = vmatpush.bf16.msra.mxu0 %v3368
    %4269 = vmatpush.bf16.msra.mxu0 %v3336
    %4270 = vmatpush.bf16.msra.mxu0 %v3304
    %4271 = vmatpush.bf16.msra.mxu0 %v3272
    %4272 = vmatpush.bf16.msra.mxu0 %v3240
    %4273 = vmatpush.bf16.msra.mxu0 %v3208
    %4274 = vmatpush.bf16.msra.mxu0 %v3176
    %4275 = vmatmul.bf16.gmra.mxu0 %v1039
    %v4276 = vpop.f32.mrf.mxu0
    %v4277 = vadd.f32 %v1576, %v4276
    %v4278 = vpop.f32.mrf.mxu0
    %4279 = vmatmul.bf16.gmra.mxu0 %v1041
    %v4280 = vpop.f32.mrf.mxu0
    %v4281 = vpop.f32.mrf.mxu0
    %4282 = vmatmul.bf16.gmra.mxu0 %v1043
    %v4283 = vpop.f32.mrf.mxu0
    %v4284 = vpop.f32.mrf.mxu0
    %4285 = vmatmul.bf16.gmra.mxu0 %v1045
    %v4286 = vpop.f32.mrf.mxu0
    %v4287 = vpop.f32.mrf.mxu0
    %4288 = vmatmul.bf16.gmra.mxu0 %v1047
    %v4289 = vpop.f32.mrf.mxu0
    %v4290 = vpop.f32.mrf.mxu0
    %4291 = vmatmul.bf16.gmra.mxu0 %v1049
    %v4292 = vpop.f32.mrf.mxu0
    %v4293 = vpop.f32.mrf.mxu0
    %4294 = vmatmul.bf16.gmra.mxu0 %v1051
    %v4295 = vpop.f32.mrf.mxu0
    %v4296 = vpop.f32.mrf.mxu0
    %4297 = vmatmul.bf16.gmra.mxu0 %v1053
    %v4298 = vpop.f32.mrf.mxu0
    %v4299 = vpop.f32.mrf.mxu0
    %4300 = vdwg.mxu0
    %4301 = vmatpush.bf16.msra.mxu0 %v3656
    %4302 = vmatpush.bf16.msra.mxu0 %v3624
    %4303 = vmatpush.bf16.msra.mxu0 %v3592
    %4304 = vmatpush.bf16.msra.mxu0 %v3560
    %4305 = vmatpush.bf16.msra.mxu0 %v3528
    %4306 = vmatpush.bf16.msra.mxu0 %v3496
    %4307 = vmatpush.bf16.msra.mxu0 %v3464
    %4308 = vmatpush.bf16.msra.mxu0 %v3432
    %4309 = vmatmul.bf16.gmra.mxu0 %v1040
    %v4310 = vpop.f32.mrf.mxu0
    %v4311 = vadd.f32 %v4277, %v4310
    %v4312 = vpop.f32.mrf.mxu0
    %4313 = vmatmul.bf16.gmra.mxu0 %v1042
    %v4314 = vpop.f32.mrf.mxu0
    %v4315 = vpop.f32.mrf.mxu0
    %4316 = vmatmul.bf16.gmra.mxu0 %v1044
    %v4317 = vpop.f32.mrf.mxu0
    %v4318 = vpop.f32.mrf.mxu0
    %4319 = vmatmul.bf16.gmra.mxu0 %v1046
    %v4320 = vpop.f32.mrf.mxu0
    %v4321 = vpop.f32.mrf.mxu0
    %4322 = vmatmul.bf16.gmra.mxu0 %v1048
    %v4323 = vpop.f32.mrf.mxu0
    %v4324 = vpop.f32.mrf.mxu0
    %4325 = vmatmul.bf16.gmra.mxu0 %v1050
    %v4326 = vpop.f32.mrf.mxu0
    %v4327 = vpop.f32.mrf.mxu0
    %4328 = vmatmul.bf16.gmra.mxu0 %v1052
    %v4329 = vpop.f32.mrf.mxu0
    %v4330 = vpop.f32.mrf.mxu0
    %4331 = vmatmul.bf16.gmra.mxu0 %v1054
    %v4332 = vpop.f32.mrf.mxu0
    %v4333 = vpop.f32.mrf.mxu0
    %4334 = vdwg.mxu0
    %4335 = vmatpush.bf16.msra.mxu0 %v3401
    %4336 = vmatpush.bf16.msra.mxu0 %v3369
    %4337 = vmatpush.bf16.msra.mxu0 %v3337
    %4338 = vmatpush.bf16.msra.mxu0 %v3305
    %4339 = vmatpush.bf16.msra.mxu0 %v3273
    %4340 = vmatpush.bf16.msra.mxu0 %v3241
    %4341 = vmatpush.bf16.msra.mxu0 %v3209
    %4342 = vmatpush.bf16.msra.mxu0 %v3177
    %4343 = vmatmul.bf16.gmra.mxu0 %v1039
    %v4344 = vpop.f32.mrf.mxu0
    %v4345 = vpop.f32.mrf.mxu0
    %v4346 = vadd.f32 %v1577, %v4345
    %4347 = vmatmul.bf16.gmra.mxu0 %v1041
    %v4348 = vpop.f32.mrf.mxu0
    %v4349 = vpop.f32.mrf.mxu0
    %4350 = vmatmul.bf16.gmra.mxu0 %v1043
    %v4351 = vpop.f32.mrf.mxu0
    %v4352 = vpop.f32.mrf.mxu0
    %4353 = vmatmul.bf16.gmra.mxu0 %v1045
    %v4354 = vpop.f32.mrf.mxu0
    %v4355 = vpop.f32.mrf.mxu0
    %4356 = vmatmul.bf16.gmra.mxu0 %v1047
    %v4357 = vpop.f32.mrf.mxu0
    %v4358 = vpop.f32.mrf.mxu0
    %4359 = vmatmul.bf16.gmra.mxu0 %v1049
    %v4360 = vpop.f32.mrf.mxu0
    %v4361 = vpop.f32.mrf.mxu0
    %4362 = vmatmul.bf16.gmra.mxu0 %v1051
    %v4363 = vpop.f32.mrf.mxu0
    %v4364 = vpop.f32.mrf.mxu0
    %4365 = vmatmul.bf16.gmra.mxu0 %v1053
    %v4366 = vpop.f32.mrf.mxu0
    %v4367 = vpop.f32.mrf.mxu0
    %4368 = vdwg.mxu0
    %4369 = vmatpush.bf16.msra.mxu0 %v3657
    %4370 = vmatpush.bf16.msra.mxu0 %v3625
    %4371 = vmatpush.bf16.msra.mxu0 %v3593
    %4372 = vmatpush.bf16.msra.mxu0 %v3561
    %4373 = vmatpush.bf16.msra.mxu0 %v3529
    %4374 = vmatpush.bf16.msra.mxu0 %v3497
    %4375 = vmatpush.bf16.msra.mxu0 %v3465
    %4376 = vmatpush.bf16.msra.mxu0 %v3433
    %4377 = vmatmul.bf16.gmra.mxu0 %v1040
    %v4378 = vpop.f32.mrf.mxu0
    %v4379 = vpop.f32.mrf.mxu0
    %v4380 = vadd.f32 %v4346, %v4379
    %4381 = vmatmul.bf16.gmra.mxu0 %v1042
    %v4382 = vpop.f32.mrf.mxu0
    %v4383 = vpop.f32.mrf.mxu0
    %4384 = vmatmul.bf16.gmra.mxu0 %v1044
    %v4385 = vpop.f32.mrf.mxu0
    %v4386 = vpop.f32.mrf.mxu0
    %4387 = vmatmul.bf16.gmra.mxu0 %v1046
    %v4388 = vpop.f32.mrf.mxu0
    %v4389 = vpop.f32.mrf.mxu0
    %4390 = vmatmul.bf16.gmra.mxu0 %v1048
    %v4391 = vpop.f32.mrf.mxu0
    %v4392 = vpop.f32.mrf.mxu0
    %4393 = vmatmul.bf16.gmra.mxu0 %v1050
    %v4394 = vpop.f32.mrf.mxu0
    %v4395 = vpop.f32.mrf.mxu0
    %4396 = vmatmul.bf16.gmra.mxu0 %v1052
    %v4397 = vpop.f32.mrf.mxu0
    %v4398 = vpop.f32.mrf.mxu0
    %4399 = vmatmul.bf16.gmra.mxu0 %v1054
    %v4400 = vpop.f32.mrf.mxu0
    %v4401 = vpop.f32.mrf.mxu0
    %4402 = vdwg.mxu0
    %4403 = vmatpush.bf16.msra.mxu0 %v3402
    %4404 = vmatpush.bf16.msra.mxu0 %v3370
    %4405 = vmatpush.bf16.msra.mxu0 %v3338
    %4406 = vmatpush.bf16.msra.mxu0 %v3306
    %4407 = vmatpush.bf16.msra.mxu0 %v3274
    %4408 = vmatpush.bf16.msra.mxu0 %v3242
    %4409 = vmatpush.bf16.msra.mxu0 %v3210
    %4410 = vmatpush.bf16.msra.mxu0 %v3178
    %4411 = vmatmul.bf16.gmra.mxu0 %v1039
    %v4412 = vpop.f32.mrf.mxu0
    %v4413 = vpop.f32.mrf.mxu0
    %v4414 = vadd.f32 %v1578, %v4413
    %4415 = vmatmul.bf16.gmra.mxu0 %v1041
    %v4416 = vpop.f32.mrf.mxu0
    %v4417 = vpop.f32.mrf.mxu0
    %4418 = vmatmul.bf16.gmra.mxu0 %v1043
    %v4419 = vpop.f32.mrf.mxu0
    %v4420 = vpop.f32.mrf.mxu0
    %4421 = vmatmul.bf16.gmra.mxu0 %v1045
    %v4422 = vpop.f32.mrf.mxu0
    %v4423 = vpop.f32.mrf.mxu0
    %4424 = vmatmul.bf16.gmra.mxu0 %v1047
    %v4425 = vpop.f32.mrf.mxu0
    %v4426 = vpop.f32.mrf.mxu0
    %4427 = vmatmul.bf16.gmra.mxu0 %v1049
    %v4428 = vpop.f32.mrf.mxu0
    %v4429 = vpop.f32.mrf.mxu0
    %4430 = vmatmul.bf16.gmra.mxu0 %v1051
    %v4431 = vpop.f32.mrf.mxu0
    %v4432 = vpop.f32.mrf.mxu0
    %4433 = vmatmul.bf16.gmra.mxu0 %v1053
    %v4434 = vpop.f32.mrf.mxu0
    %v4435 = vpop.f32.mrf.mxu0
    %4436 = vdwg.mxu0
    %4437 = vmatpush.bf16.msra.mxu0 %v3658
    %4438 = vmatpush.bf16.msra.mxu0 %v3626
    %4439 = vmatpush.bf16.msra.mxu0 %v3594
    %4440 = vmatpush.bf16.msra.mxu0 %v3562
    %4441 = vmatpush.bf16.msra.mxu0 %v3530
    %4442 = vmatpush.bf16.msra.mxu0 %v3498
    %4443 = vmatpush.bf16.msra.mxu0 %v3466
    %4444 = vmatpush.bf16.msra.mxu0 %v3434
    %4445 = vmatmul.bf16.gmra.mxu0 %v1040
    %v4446 = vpop.f32.mrf.mxu0
    %v4447 = vpop.f32.mrf.mxu0
    %v4448 = vadd.f32 %v4414, %v4447
    %4449 = vmatmul.bf16.gmra.mxu0 %v1042
    %v4450 = vpop.f32.mrf.mxu0
    %v4451 = vpop.f32.mrf.mxu0
    %4452 = vmatmul.bf16.gmra.mxu0 %v1044
    %v4453 = vpop.f32.mrf.mxu0
    %v4454 = vpop.f32.mrf.mxu0
    %4455 = vmatmul.bf16.gmra.mxu0 %v1046
    %v4456 = vpop.f32.mrf.mxu0
    %v4457 = vpop.f32.mrf.mxu0
    %4458 = vmatmul.bf16.gmra.mxu0 %v1048
    %v4459 = vpop.f32.mrf.mxu0
    %v4460 = vpop.f32.mrf.mxu0
    %4461 = vmatmul.bf16.gmra.mxu0 %v1050
    %v4462 = vpop.f32.mrf.mxu0
    %v4463 = vpop.f32.mrf.mxu0
    %4464 = vmatmul.bf16.gmra.mxu0 %v1052
    %v4465 = vpop.f32.mrf.mxu0
    %v4466 = vpop.f32.mrf.mxu0
    %4467 = vmatmul.bf16.gmra.mxu0 %v1054
    %v4468 = vpop.f32.mrf.mxu0
    %v4469 = vpop.f32.mrf.mxu0
    %4470 = vdwg.mxu0
    %4471 = vmatpush.bf16.msra.mxu0 %v3403
    %4472 = vmatpush.bf16.msra.mxu0 %v3371
    %4473 = vmatpush.bf16.msra.mxu0 %v3339
    %4474 = vmatpush.bf16.msra.mxu0 %v3307
    %4475 = vmatpush.bf16.msra.mxu0 %v3275
    %4476 = vmatpush.bf16.msra.mxu0 %v3243
    %4477 = vmatpush.bf16.msra.mxu0 %v3211
    %4478 = vmatpush.bf16.msra.mxu0 %v3179
    %4479 = vmatmul.bf16.gmra.mxu0 %v1039
    %v4480 = vpop.f32.mrf.mxu0
    %v4481 = vpop.f32.mrf.mxu0
    %4482 = vmatmul.bf16.gmra.mxu0 %v1041
    %v4483 = vpop.f32.mrf.mxu0
    %v4484 = vadd.f32 %v1579, %v4483
    %v4485 = vpop.f32.mrf.mxu0
    %4486 = vmatmul.bf16.gmra.mxu0 %v1043
    %v4487 = vpop.f32.mrf.mxu0
    %v4488 = vpop.f32.mrf.mxu0
    %4489 = vmatmul.bf16.gmra.mxu0 %v1045
    %v4490 = vpop.f32.mrf.mxu0
    %v4491 = vpop.f32.mrf.mxu0
    %4492 = vmatmul.bf16.gmra.mxu0 %v1047
    %v4493 = vpop.f32.mrf.mxu0
    %v4494 = vpop.f32.mrf.mxu0
    %4495 = vmatmul.bf16.gmra.mxu0 %v1049
    %v4496 = vpop.f32.mrf.mxu0
    %v4497 = vpop.f32.mrf.mxu0
    %4498 = vmatmul.bf16.gmra.mxu0 %v1051
    %v4499 = vpop.f32.mrf.mxu0
    %v4500 = vpop.f32.mrf.mxu0
    %4501 = vmatmul.bf16.gmra.mxu0 %v1053
    %v4502 = vpop.f32.mrf.mxu0
    %v4503 = vpop.f32.mrf.mxu0
    %4504 = vdwg.mxu0
    %4505 = vmatpush.bf16.msra.mxu0 %v3659
    %4506 = vmatpush.bf16.msra.mxu0 %v3627
    %4507 = vmatpush.bf16.msra.mxu0 %v3595
    %4508 = vmatpush.bf16.msra.mxu0 %v3563
    %4509 = vmatpush.bf16.msra.mxu0 %v3531
    %4510 = vmatpush.bf16.msra.mxu0 %v3499
    %4511 = vmatpush.bf16.msra.mxu0 %v3467
    %4512 = vmatpush.bf16.msra.mxu0 %v3435
    %4513 = vmatmul.bf16.gmra.mxu0 %v1040
    %v4514 = vpop.f32.mrf.mxu0
    %v4515 = vpop.f32.mrf.mxu0
    %4516 = vmatmul.bf16.gmra.mxu0 %v1042
    %v4517 = vpop.f32.mrf.mxu0
    %v4518 = vadd.f32 %v4484, %v4517
    %v4519 = vpop.f32.mrf.mxu0
    %4520 = vmatmul.bf16.gmra.mxu0 %v1044
    %v4521 = vpop.f32.mrf.mxu0
    %v4522 = vpop.f32.mrf.mxu0
    %4523 = vmatmul.bf16.gmra.mxu0 %v1046
    %v4524 = vpop.f32.mrf.mxu0
    %v4525 = vpop.f32.mrf.mxu0
    %4526 = vmatmul.bf16.gmra.mxu0 %v1048
    %v4527 = vpop.f32.mrf.mxu0
    %v4528 = vpop.f32.mrf.mxu0
    %4529 = vmatmul.bf16.gmra.mxu0 %v1050
    %v4530 = vpop.f32.mrf.mxu0
    %v4531 = vpop.f32.mrf.mxu0
    %4532 = vmatmul.bf16.gmra.mxu0 %v1052
    %v4533 = vpop.f32.mrf.mxu0
    %v4534 = vpop.f32.mrf.mxu0
    %4535 = vmatmul.bf16.gmra.mxu0 %v1054
    %v4536 = vpop.f32.mrf.mxu0
    %v4537 = vpop.f32.mrf.mxu0
    %4538 = vdwg.mxu0
    %4539 = vmatpush.bf16.msra.mxu0 %v3404
    %4540 = vmatpush.bf16.msra.mxu0 %v3372
    %4541 = vmatpush.bf16.msra.mxu0 %v3340
    %4542 = vmatpush.bf16.msra.mxu0 %v3308
    %4543 = vmatpush.bf16.msra.mxu0 %v3276
    %4544 = vmatpush.bf16.msra.mxu0 %v3244
    %4545 = vmatpush.bf16.msra.mxu0 %v3212
    %4546 = vmatpush.bf16.msra.mxu0 %v3180
    %4547 = vmatmul.bf16.gmra.mxu0 %v1039
    %v4548 = vpop.f32.mrf.mxu0
    %v4549 = vpop.f32.mrf.mxu0
    %4550 = vmatmul.bf16.gmra.mxu0 %v1041
    %v4551 = vpop.f32.mrf.mxu0
    %v4552 = vadd.f32 %v1580, %v4551
    %v4553 = vpop.f32.mrf.mxu0
    %4554 = vmatmul.bf16.gmra.mxu0 %v1043
    %v4555 = vpop.f32.mrf.mxu0
    %v4556 = vpop.f32.mrf.mxu0
    %4557 = vmatmul.bf16.gmra.mxu0 %v1045
    %v4558 = vpop.f32.mrf.mxu0
    %v4559 = vpop.f32.mrf.mxu0
    %4560 = vmatmul.bf16.gmra.mxu0 %v1047
    %v4561 = vpop.f32.mrf.mxu0
    %v4562 = vpop.f32.mrf.mxu0
    %4563 = vmatmul.bf16.gmra.mxu0 %v1049
    %v4564 = vpop.f32.mrf.mxu0
    %v4565 = vpop.f32.mrf.mxu0
    %4566 = vmatmul.bf16.gmra.mxu0 %v1051
    %v4567 = vpop.f32.mrf.mxu0
    %v4568 = vpop.f32.mrf.mxu0
    %4569 = vmatmul.bf16.gmra.mxu0 %v1053
    %v4570 = vpop.f32.mrf.mxu0
    %v4571 = vpop.f32.mrf.mxu0
    %4572 = vdwg.mxu0
    %4573 = vmatpush.bf16.msra.mxu0 %v3660
    %4574 = vmatpush.bf16.msra.mxu0 %v3628
    %4575 = vmatpush.bf16.msra.mxu0 %v3596
    %4576 = vmatpush.bf16.msra.mxu0 %v3564
    %4577 = vmatpush.bf16.msra.mxu0 %v3532
    %4578 = vmatpush.bf16.msra.mxu0 %v3500
    %4579 = vmatpush.bf16.msra.mxu0 %v3468
    %4580 = vmatpush.bf16.msra.mxu0 %v3436
    %4581 = vmatmul.bf16.gmra.mxu0 %v1040
    %v4582 = vpop.f32.mrf.mxu0
    %v4583 = vpop.f32.mrf.mxu0
    %4584 = vmatmul.bf16.gmra.mxu0 %v1042
    %v4585 = vpop.f32.mrf.mxu0
    %v4586 = vadd.f32 %v4552, %v4585
    %v4587 = vpop.f32.mrf.mxu0
    %4588 = vmatmul.bf16.gmra.mxu0 %v1044
    %v4589 = vpop.f32.mrf.mxu0
    %v4590 = vpop.f32.mrf.mxu0
    %4591 = vmatmul.bf16.gmra.mxu0 %v1046
    %v4592 = vpop.f32.mrf.mxu0
    %v4593 = vpop.f32.mrf.mxu0
    %4594 = vmatmul.bf16.gmra.mxu0 %v1048
    %v4595 = vpop.f32.mrf.mxu0
    %v4596 = vpop.f32.mrf.mxu0
    %4597 = vmatmul.bf16.gmra.mxu0 %v1050
    %v4598 = vpop.f32.mrf.mxu0
    %v4599 = vpop.f32.mrf.mxu0
    %4600 = vmatmul.bf16.gmra.mxu0 %v1052
    %v4601 = vpop.f32.mrf.mxu0
    %v4602 = vpop.f32.mrf.mxu0
    %4603 = vmatmul.bf16.gmra.mxu0 %v1054
    %v4604 = vpop.f32.mrf.mxu0
    %v4605 = vpop.f32.mrf.mxu0
    %4606 = vdwg.mxu0
    %4607 = vmatpush.bf16.msra.mxu0 %v3405
    %4608 = vmatpush.bf16.msra.mxu0 %v3373
    %4609 = vmatpush.bf16.msra.mxu0 %v3341
    %4610 = vmatpush.bf16.msra.mxu0 %v3309
    %4611 = vmatpush.bf16.msra.mxu0 %v3277
    %4612 = vmatpush.bf16.msra.mxu0 %v3245
    %4613 = vmatpush.bf16.msra.mxu0 %v3213
    %4614 = vmatpush.bf16.msra.mxu0 %v3181
    %4615 = vmatmul.bf16.gmra.mxu0 %v1039
    %v4616 = vpop.f32.mrf.mxu0
    %v4617 = vpop.f32.mrf.mxu0
    %4618 = vmatmul.bf16.gmra.mxu0 %v1041
    %v4619 = vpop.f32.mrf.mxu0
    %v4620 = vpop.f32.mrf.mxu0
    %v4621 = vadd.f32 %v1581, %v4620
    %4622 = vmatmul.bf16.gmra.mxu0 %v1043
    %v4623 = vpop.f32.mrf.mxu0
    %v4624 = vpop.f32.mrf.mxu0
    %4625 = vmatmul.bf16.gmra.mxu0 %v1045
    %v4626 = vpop.f32.mrf.mxu0
    %v4627 = vpop.f32.mrf.mxu0
    %4628 = vmatmul.bf16.gmra.mxu0 %v1047
    %v4629 = vpop.f32.mrf.mxu0
    %v4630 = vpop.f32.mrf.mxu0
    %4631 = vmatmul.bf16.gmra.mxu0 %v1049
    %v4632 = vpop.f32.mrf.mxu0
    %v4633 = vpop.f32.mrf.mxu0
    %4634 = vmatmul.bf16.gmra.mxu0 %v1051
    %v4635 = vpop.f32.mrf.mxu0
    %v4636 = vpop.f32.mrf.mxu0
    %4637 = vmatmul.bf16.gmra.mxu0 %v1053
    %v4638 = vpop.f32.mrf.mxu0
    %v4639 = vpop.f32.mrf.mxu0
    %4640 = vdwg.mxu0
    %4641 = vmatpush.bf16.msra.mxu0 %v3661
    %4642 = vmatpush.bf16.msra.mxu0 %v3629
    %4643 = vmatpush.bf16.msra.mxu0 %v3597
    %4644 = vmatpush.bf16.msra.mxu0 %v3565
    %4645 = vmatpush.bf16.msra.mxu0 %v3533
    %4646 = vmatpush.bf16.msra.mxu0 %v3501
    %4647 = vmatpush.bf16.msra.mxu0 %v3469
    %4648 = vmatpush.bf16.msra.mxu0 %v3437
    %4649 = vmatmul.bf16.gmra.mxu0 %v1040
    %v4650 = vpop.f32.mrf.mxu0
    %v4651 = vpop.f32.mrf.mxu0
    %4652 = vmatmul.bf16.gmra.mxu0 %v1042
    %v4653 = vpop.f32.mrf.mxu0
    %v4654 = vpop.f32.mrf.mxu0
    %v4655 = vadd.f32 %v4621, %v4654
    %4656 = vmatmul.bf16.gmra.mxu0 %v1044
    %v4657 = vpop.f32.mrf.mxu0
    %v4658 = vpop.f32.mrf.mxu0
    %4659 = vmatmul.bf16.gmra.mxu0 %v1046
    %v4660 = vpop.f32.mrf.mxu0
    %v4661 = vpop.f32.mrf.mxu0
    %4662 = vmatmul.bf16.gmra.mxu0 %v1048
    %v4663 = vpop.f32.mrf.mxu0
    %v4664 = vpop.f32.mrf.mxu0
    %4665 = vmatmul.bf16.gmra.mxu0 %v1050
    %v4666 = vpop.f32.mrf.mxu0
    %v4667 = vpop.f32.mrf.mxu0
    %4668 = vmatmul.bf16.gmra.mxu0 %v1052
    %v4669 = vpop.f32.mrf.mxu0
    %v4670 = vpop.f32.mrf.mxu0
    %4671 = vmatmul.bf16.gmra.mxu0 %v1054
    %v4672 = vpop.f32.mrf.mxu0
    %v4673 = vpop.f32.mrf.mxu0
    %4674 = vdwg.mxu0
    %4675 = vmatpush.bf16.msra.mxu0 %v3406
    %4676 = vmatpush.bf16.msra.mxu0 %v3374
    %4677 = vmatpush.bf16.msra.mxu0 %v3342
    %4678 = vmatpush.bf16.msra.mxu0 %v3310
    %4679 = vmatpush.bf16.msra.mxu0 %v3278
    %4680 = vmatpush.bf16.msra.mxu0 %v3246
    %4681 = vmatpush.bf16.msra.mxu0 %v3214
    %4682 = vmatpush.bf16.msra.mxu0 %v3182
    %4683 = vmatmul.bf16.gmra.mxu0 %v1039
    %v4684 = vpop.f32.mrf.mxu0
    %v4685 = vpop.f32.mrf.mxu0
    %4686 = vmatmul.bf16.gmra.mxu0 %v1041
    %v4687 = vpop.f32.mrf.mxu0
    %v4688 = vpop.f32.mrf.mxu0
    %v4689 = vadd.f32 %v1582, %v4688
    %4690 = vmatmul.bf16.gmra.mxu0 %v1043
    %v4691 = vpop.f32.mrf.mxu0
    %v4692 = vpop.f32.mrf.mxu0
    %4693 = vmatmul.bf16.gmra.mxu0 %v1045
    %v4694 = vpop.f32.mrf.mxu0
    %v4695 = vpop.f32.mrf.mxu0
    %4696 = vmatmul.bf16.gmra.mxu0 %v1047
    %v4697 = vpop.f32.mrf.mxu0
    %v4698 = vpop.f32.mrf.mxu0
    %4699 = vmatmul.bf16.gmra.mxu0 %v1049
    %v4700 = vpop.f32.mrf.mxu0
    %v4701 = vpop.f32.mrf.mxu0
    %4702 = vmatmul.bf16.gmra.mxu0 %v1051
    %v4703 = vpop.f32.mrf.mxu0
    %v4704 = vpop.f32.mrf.mxu0
    %4705 = vmatmul.bf16.gmra.mxu0 %v1053
    %v4706 = vpop.f32.mrf.mxu0
    %v4707 = vpop.f32.mrf.mxu0
    %4708 = vdwg.mxu0
    %4709 = vmatpush.bf16.msra.mxu0 %v3662
    %4710 = vmatpush.bf16.msra.mxu0 %v3630
    %4711 = vmatpush.bf16.msra.mxu0 %v3598
    %4712 = vmatpush.bf16.msra.mxu0 %v3566
    %4713 = vmatpush.bf16.msra.mxu0 %v3534
    %4714 = vmatpush.bf16.msra.mxu0 %v3502
    %4715 = vmatpush.bf16.msra.mxu0 %v3470
    %4716 = vmatpush.bf16.msra.mxu0 %v3438
    %4717 = vmatmul.bf16.gmra.mxu0 %v1040
    %v4718 = vpop.f32.mrf.mxu0
    %v4719 = vpop.f32.mrf.mxu0
    %4720 = vmatmul.bf16.gmra.mxu0 %v1042
    %v4721 = vpop.f32.mrf.mxu0
    %v4722 = vpop.f32.mrf.mxu0
    %v4723 = vadd.f32 %v4689, %v4722
    %4724 = vmatmul.bf16.gmra.mxu0 %v1044
    %v4725 = vpop.f32.mrf.mxu0
    %v4726 = vpop.f32.mrf.mxu0
    %4727 = vmatmul.bf16.gmra.mxu0 %v1046
    %v4728 = vpop.f32.mrf.mxu0
    %v4729 = vpop.f32.mrf.mxu0
    %4730 = vmatmul.bf16.gmra.mxu0 %v1048
    %v4731 = vpop.f32.mrf.mxu0
    %v4732 = vpop.f32.mrf.mxu0
    %4733 = vmatmul.bf16.gmra.mxu0 %v1050
    %v4734 = vpop.f32.mrf.mxu0
    %v4735 = vpop.f32.mrf.mxu0
    %4736 = vmatmul.bf16.gmra.mxu0 %v1052
    %v4737 = vpop.f32.mrf.mxu0
    %v4738 = vpop.f32.mrf.mxu0
    %4739 = vmatmul.bf16.gmra.mxu0 %v1054
    %v4740 = vpop.f32.mrf.mxu0
    %v4741 = vpop.f32.mrf.mxu0
    %4742 = vdwg.mxu0
    %4743 = vmatpush.bf16.msra.mxu0 %v3407
    %4744 = vmatpush.bf16.msra.mxu0 %v3375
    %4745 = vmatpush.bf16.msra.mxu0 %v3343
    %4746 = vmatpush.bf16.msra.mxu0 %v3311
    %4747 = vmatpush.bf16.msra.mxu0 %v3279
    %4748 = vmatpush.bf16.msra.mxu0 %v3247
    %4749 = vmatpush.bf16.msra.mxu0 %v3215
    %4750 = vmatpush.bf16.msra.mxu0 %v3183
    %4751 = vmatmul.bf16.gmra.mxu0 %v1039
    %v4752 = vpop.f32.mrf.mxu0
    %v4753 = vpop.f32.mrf.mxu0
    %4754 = vmatmul.bf16.gmra.mxu0 %v1041
    %v4755 = vpop.f32.mrf.mxu0
    %v4756 = vpop.f32.mrf.mxu0
    %4757 = vmatmul.bf16.gmra.mxu0 %v1043
    %v4758 = vpop.f32.mrf.mxu0
    %v4759 = vadd.f32 %v1583, %v4758
    %v4760 = vpop.f32.mrf.mxu0
    %4761 = vmatmul.bf16.gmra.mxu0 %v1045
    %v4762 = vpop.f32.mrf.mxu0
    %v4763 = vpop.f32.mrf.mxu0
    %4764 = vmatmul.bf16.gmra.mxu0 %v1047
    %v4765 = vpop.f32.mrf.mxu0
    %v4766 = vpop.f32.mrf.mxu0
    %4767 = vmatmul.bf16.gmra.mxu0 %v1049
    %v4768 = vpop.f32.mrf.mxu0
    %v4769 = vpop.f32.mrf.mxu0
    %4770 = vmatmul.bf16.gmra.mxu0 %v1051
    %v4771 = vpop.f32.mrf.mxu0
    %v4772 = vpop.f32.mrf.mxu0
    %4773 = vmatmul.bf16.gmra.mxu0 %v1053
    %v4774 = vpop.f32.mrf.mxu0
    %v4775 = vpop.f32.mrf.mxu0
    %4776 = vdwg.mxu0
    %4777 = vmatpush.bf16.msra.mxu0 %v3663
    %4778 = vmatpush.bf16.msra.mxu0 %v3631
    %4779 = vmatpush.bf16.msra.mxu0 %v3599
    %4780 = vmatpush.bf16.msra.mxu0 %v3567
    %4781 = vmatpush.bf16.msra.mxu0 %v3535
    %4782 = vmatpush.bf16.msra.mxu0 %v3503
    %4783 = vmatpush.bf16.msra.mxu0 %v3471
    %4784 = vmatpush.bf16.msra.mxu0 %v3439
    %4785 = vmatmul.bf16.gmra.mxu0 %v1040
    %v4786 = vpop.f32.mrf.mxu0
    %v4787 = vpop.f32.mrf.mxu0
    %4788 = vmatmul.bf16.gmra.mxu0 %v1042
    %v4789 = vpop.f32.mrf.mxu0
    %v4790 = vpop.f32.mrf.mxu0
    %4791 = vmatmul.bf16.gmra.mxu0 %v1044
    %v4792 = vpop.f32.mrf.mxu0
    %v4793 = vadd.f32 %v4759, %v4792
    %v4794 = vpop.f32.mrf.mxu0
    %4795 = vmatmul.bf16.gmra.mxu0 %v1046
    %v4796 = vpop.f32.mrf.mxu0
    %v4797 = vpop.f32.mrf.mxu0
    %4798 = vmatmul.bf16.gmra.mxu0 %v1048
    %v4799 = vpop.f32.mrf.mxu0
    %v4800 = vpop.f32.mrf.mxu0
    %4801 = vmatmul.bf16.gmra.mxu0 %v1050
    %v4802 = vpop.f32.mrf.mxu0
    %v4803 = vpop.f32.mrf.mxu0
    %4804 = vmatmul.bf16.gmra.mxu0 %v1052
    %v4805 = vpop.f32.mrf.mxu0
    %v4806 = vpop.f32.mrf.mxu0
    %4807 = vmatmul.bf16.gmra.mxu0 %v1054
    %v4808 = vpop.f32.mrf.mxu0
    %v4809 = vpop.f32.mrf.mxu0
    %4810 = vdwg.mxu0
    %4811 = vmatpush.bf16.msra.mxu0 %v3408
    %4812 = vmatpush.bf16.msra.mxu0 %v3376
    %4813 = vmatpush.bf16.msra.mxu0 %v3344
    %4814 = vmatpush.bf16.msra.mxu0 %v3312
    %4815 = vmatpush.bf16.msra.mxu0 %v3280
    %4816 = vmatpush.bf16.msra.mxu0 %v3248
    %4817 = vmatpush.bf16.msra.mxu0 %v3216
    %4818 = vmatpush.bf16.msra.mxu0 %v3184
    %4819 = vmatmul.bf16.gmra.mxu0 %v1039
    %v4820 = vpop.f32.mrf.mxu0
    %v4821 = vpop.f32.mrf.mxu0
    %4822 = vmatmul.bf16.gmra.mxu0 %v1041
    %v4823 = vpop.f32.mrf.mxu0
    %v4824 = vpop.f32.mrf.mxu0
    %4825 = vmatmul.bf16.gmra.mxu0 %v1043
    %v4826 = vpop.f32.mrf.mxu0
    %v4827 = vadd.f32 %v1584, %v4826
    %v4828 = vpop.f32.mrf.mxu0
    %4829 = vmatmul.bf16.gmra.mxu0 %v1045
    %v4830 = vpop.f32.mrf.mxu0
    %v4831 = vpop.f32.mrf.mxu0
    %4832 = vmatmul.bf16.gmra.mxu0 %v1047
    %v4833 = vpop.f32.mrf.mxu0
    %v4834 = vpop.f32.mrf.mxu0
    %4835 = vmatmul.bf16.gmra.mxu0 %v1049
    %v4836 = vpop.f32.mrf.mxu0
    %v4837 = vpop.f32.mrf.mxu0
    %4838 = vmatmul.bf16.gmra.mxu0 %v1051
    %v4839 = vpop.f32.mrf.mxu0
    %v4840 = vpop.f32.mrf.mxu0
    %4841 = vmatmul.bf16.gmra.mxu0 %v1053
    %v4842 = vpop.f32.mrf.mxu0
    %v4843 = vpop.f32.mrf.mxu0
    %4844 = vdwg.mxu0
    %4845 = vmatpush.bf16.msra.mxu0 %v3664
    %4846 = vmatpush.bf16.msra.mxu0 %v3632
    %4847 = vmatpush.bf16.msra.mxu0 %v3600
    %4848 = vmatpush.bf16.msra.mxu0 %v3568
    %4849 = vmatpush.bf16.msra.mxu0 %v3536
    %4850 = vmatpush.bf16.msra.mxu0 %v3504
    %4851 = vmatpush.bf16.msra.mxu0 %v3472
    %4852 = vmatpush.bf16.msra.mxu0 %v3440
    %4853 = vmatmul.bf16.gmra.mxu0 %v1040
    %v4854 = vpop.f32.mrf.mxu0
    %v4855 = vpop.f32.mrf.mxu0
    %4856 = vmatmul.bf16.gmra.mxu0 %v1042
    %v4857 = vpop.f32.mrf.mxu0
    %v4858 = vpop.f32.mrf.mxu0
    %4859 = vmatmul.bf16.gmra.mxu0 %v1044
    %v4860 = vpop.f32.mrf.mxu0
    %v4861 = vadd.f32 %v4827, %v4860
    %v4862 = vpop.f32.mrf.mxu0
    %4863 = vmatmul.bf16.gmra.mxu0 %v1046
    %v4864 = vpop.f32.mrf.mxu0
    %v4865 = vpop.f32.mrf.mxu0
    %4866 = vmatmul.bf16.gmra.mxu0 %v1048
    %v4867 = vpop.f32.mrf.mxu0
    %v4868 = vpop.f32.mrf.mxu0
    %4869 = vmatmul.bf16.gmra.mxu0 %v1050
    %v4870 = vpop.f32.mrf.mxu0
    %v4871 = vpop.f32.mrf.mxu0
    %4872 = vmatmul.bf16.gmra.mxu0 %v1052
    %v4873 = vpop.f32.mrf.mxu0
    %v4874 = vpop.f32.mrf.mxu0
    %4875 = vmatmul.bf16.gmra.mxu0 %v1054
    %v4876 = vpop.f32.mrf.mxu0
    %v4877 = vpop.f32.mrf.mxu0
    %4878 = vdwg.mxu0
    %4879 = vmatpush.bf16.msra.mxu0 %v3409
    %4880 = vmatpush.bf16.msra.mxu0 %v3377
    %4881 = vmatpush.bf16.msra.mxu0 %v3345
    %4882 = vmatpush.bf16.msra.mxu0 %v3313
    %4883 = vmatpush.bf16.msra.mxu0 %v3281
    %4884 = vmatpush.bf16.msra.mxu0 %v3249
    %4885 = vmatpush.bf16.msra.mxu0 %v3217
    %4886 = vmatpush.bf16.msra.mxu0 %v3185
    %4887 = vmatmul.bf16.gmra.mxu0 %v1039
    %v4888 = vpop.f32.mrf.mxu0
    %v4889 = vpop.f32.mrf.mxu0
    %4890 = vmatmul.bf16.gmra.mxu0 %v1041
    %v4891 = vpop.f32.mrf.mxu0
    %v4892 = vpop.f32.mrf.mxu0
    %4893 = vmatmul.bf16.gmra.mxu0 %v1043
    %v4894 = vpop.f32.mrf.mxu0
    %v4895 = vpop.f32.mrf.mxu0
    %v4896 = vadd.f32 %v1585, %v4895
    %4897 = vmatmul.bf16.gmra.mxu0 %v1045
    %v4898 = vpop.f32.mrf.mxu0
    %v4899 = vpop.f32.mrf.mxu0
    %4900 = vmatmul.bf16.gmra.mxu0 %v1047
    %v4901 = vpop.f32.mrf.mxu0
    %v4902 = vpop.f32.mrf.mxu0
    %4903 = vmatmul.bf16.gmra.mxu0 %v1049
    %v4904 = vpop.f32.mrf.mxu0
    %v4905 = vpop.f32.mrf.mxu0
    %4906 = vmatmul.bf16.gmra.mxu0 %v1051
    %v4907 = vpop.f32.mrf.mxu0
    %v4908 = vpop.f32.mrf.mxu0
    %4909 = vmatmul.bf16.gmra.mxu0 %v1053
    %v4910 = vpop.f32.mrf.mxu0
    %v4911 = vpop.f32.mrf.mxu0
    %4912 = vdwg.mxu0
    %4913 = vmatpush.bf16.msra.mxu0 %v3665
    %4914 = vmatpush.bf16.msra.mxu0 %v3633
    %4915 = vmatpush.bf16.msra.mxu0 %v3601
    %4916 = vmatpush.bf16.msra.mxu0 %v3569
    %4917 = vmatpush.bf16.msra.mxu0 %v3537
    %4918 = vmatpush.bf16.msra.mxu0 %v3505
    %4919 = vmatpush.bf16.msra.mxu0 %v3473
    %4920 = vmatpush.bf16.msra.mxu0 %v3441
    %4921 = vmatmul.bf16.gmra.mxu0 %v1040
    %v4922 = vpop.f32.mrf.mxu0
    %v4923 = vpop.f32.mrf.mxu0
    %4924 = vmatmul.bf16.gmra.mxu0 %v1042
    %v4925 = vpop.f32.mrf.mxu0
    %v4926 = vpop.f32.mrf.mxu0
    %4927 = vmatmul.bf16.gmra.mxu0 %v1044
    %v4928 = vpop.f32.mrf.mxu0
    %v4929 = vpop.f32.mrf.mxu0
    %v4930 = vadd.f32 %v4896, %v4929
    %4931 = vmatmul.bf16.gmra.mxu0 %v1046
    %v4932 = vpop.f32.mrf.mxu0
    %v4933 = vpop.f32.mrf.mxu0
    %4934 = vmatmul.bf16.gmra.mxu0 %v1048
    %v4935 = vpop.f32.mrf.mxu0
    %v4936 = vpop.f32.mrf.mxu0
    %4937 = vmatmul.bf16.gmra.mxu0 %v1050
    %v4938 = vpop.f32.mrf.mxu0
    %v4939 = vpop.f32.mrf.mxu0
    %4940 = vmatmul.bf16.gmra.mxu0 %v1052
    %v4941 = vpop.f32.mrf.mxu0
    %v4942 = vpop.f32.mrf.mxu0
    %4943 = vmatmul.bf16.gmra.mxu0 %v1054
    %v4944 = vpop.f32.mrf.mxu0
    %v4945 = vpop.f32.mrf.mxu0
    %4946 = vdwg.mxu0
    %4947 = vmatpush.bf16.msra.mxu0 %v3410
    %4948 = vmatpush.bf16.msra.mxu0 %v3378
    %4949 = vmatpush.bf16.msra.mxu0 %v3346
    %4950 = vmatpush.bf16.msra.mxu0 %v3314
    %4951 = vmatpush.bf16.msra.mxu0 %v3282
    %4952 = vmatpush.bf16.msra.mxu0 %v3250
    %4953 = vmatpush.bf16.msra.mxu0 %v3218
    %4954 = vmatpush.bf16.msra.mxu0 %v3186
    %4955 = vmatmul.bf16.gmra.mxu0 %v1039
    %v4956 = vpop.f32.mrf.mxu0
    %v4957 = vpop.f32.mrf.mxu0
    %4958 = vmatmul.bf16.gmra.mxu0 %v1041
    %v4959 = vpop.f32.mrf.mxu0
    %v4960 = vpop.f32.mrf.mxu0
    %4961 = vmatmul.bf16.gmra.mxu0 %v1043
    %v4962 = vpop.f32.mrf.mxu0
    %v4963 = vpop.f32.mrf.mxu0
    %v4964 = vadd.f32 %v1586, %v4963
    %4965 = vmatmul.bf16.gmra.mxu0 %v1045
    %v4966 = vpop.f32.mrf.mxu0
    %v4967 = vpop.f32.mrf.mxu0
    %4968 = vmatmul.bf16.gmra.mxu0 %v1047
    %v4969 = vpop.f32.mrf.mxu0
    %v4970 = vpop.f32.mrf.mxu0
    %4971 = vmatmul.bf16.gmra.mxu0 %v1049
    %v4972 = vpop.f32.mrf.mxu0
    %v4973 = vpop.f32.mrf.mxu0
    %4974 = vmatmul.bf16.gmra.mxu0 %v1051
    %v4975 = vpop.f32.mrf.mxu0
    %v4976 = vpop.f32.mrf.mxu0
    %4977 = vmatmul.bf16.gmra.mxu0 %v1053
    %v4978 = vpop.f32.mrf.mxu0
    %v4979 = vpop.f32.mrf.mxu0
    %4980 = vdwg.mxu0
    %4981 = vmatpush.bf16.msra.mxu0 %v3666
    %4982 = vmatpush.bf16.msra.mxu0 %v3634
    %4983 = vmatpush.bf16.msra.mxu0 %v3602
    %4984 = vmatpush.bf16.msra.mxu0 %v3570
    %4985 = vmatpush.bf16.msra.mxu0 %v3538
    %4986 = vmatpush.bf16.msra.mxu0 %v3506
    %4987 = vmatpush.bf16.msra.mxu0 %v3474
    %4988 = vmatpush.bf16.msra.mxu0 %v3442
    %4989 = vmatmul.bf16.gmra.mxu0 %v1040
    %v4990 = vpop.f32.mrf.mxu0
    %v4991 = vpop.f32.mrf.mxu0
    %4992 = vmatmul.bf16.gmra.mxu0 %v1042
    %v4993 = vpop.f32.mrf.mxu0
    %v4994 = vpop.f32.mrf.mxu0
    %4995 = vmatmul.bf16.gmra.mxu0 %v1044
    %v4996 = vpop.f32.mrf.mxu0
    %v4997 = vpop.f32.mrf.mxu0
    %v4998 = vadd.f32 %v4964, %v4997
    %4999 = vmatmul.bf16.gmra.mxu0 %v1046
    %v5000 = vpop.f32.mrf.mxu0
    %v5001 = vpop.f32.mrf.mxu0
    %5002 = vmatmul.bf16.gmra.mxu0 %v1048
    %v5003 = vpop.f32.mrf.mxu0
    %v5004 = vpop.f32.mrf.mxu0
    %5005 = vmatmul.bf16.gmra.mxu0 %v1050
    %v5006 = vpop.f32.mrf.mxu0
    %v5007 = vpop.f32.mrf.mxu0
    %5008 = vmatmul.bf16.gmra.mxu0 %v1052
    %v5009 = vpop.f32.mrf.mxu0
    %v5010 = vpop.f32.mrf.mxu0
    %5011 = vmatmul.bf16.gmra.mxu0 %v1054
    %v5012 = vpop.f32.mrf.mxu0
    %v5013 = vpop.f32.mrf.mxu0
    %5014 = vdwg.mxu0
    %5015 = vmatpush.bf16.msra.mxu0 %v3411
    %5016 = vmatpush.bf16.msra.mxu0 %v3379
    %5017 = vmatpush.bf16.msra.mxu0 %v3347
    %5018 = vmatpush.bf16.msra.mxu0 %v3315
    %5019 = vmatpush.bf16.msra.mxu0 %v3283
    %5020 = vmatpush.bf16.msra.mxu0 %v3251
    %5021 = vmatpush.bf16.msra.mxu0 %v3219
    %5022 = vmatpush.bf16.msra.mxu0 %v3187
    %5023 = vmatmul.bf16.gmra.mxu0 %v1039
    %v5024 = vpop.f32.mrf.mxu0
    %v5025 = vpop.f32.mrf.mxu0
    %5026 = vmatmul.bf16.gmra.mxu0 %v1041
    %v5027 = vpop.f32.mrf.mxu0
    %v5028 = vpop.f32.mrf.mxu0
    %5029 = vmatmul.bf16.gmra.mxu0 %v1043
    %v5030 = vpop.f32.mrf.mxu0
    %v5031 = vpop.f32.mrf.mxu0
    %5032 = vmatmul.bf16.gmra.mxu0 %v1045
    %v5033 = vpop.f32.mrf.mxu0
    %v5034 = vadd.f32 %v1587, %v5033
    %v5035 = vpop.f32.mrf.mxu0
    %5036 = vmatmul.bf16.gmra.mxu0 %v1047
    %v5037 = vpop.f32.mrf.mxu0
    %v5038 = vpop.f32.mrf.mxu0
    %5039 = vmatmul.bf16.gmra.mxu0 %v1049
    %v5040 = vpop.f32.mrf.mxu0
    %v5041 = vpop.f32.mrf.mxu0
    %5042 = vmatmul.bf16.gmra.mxu0 %v1051
    %v5043 = vpop.f32.mrf.mxu0
    %v5044 = vpop.f32.mrf.mxu0
    %5045 = vmatmul.bf16.gmra.mxu0 %v1053
    %v5046 = vpop.f32.mrf.mxu0
    %v5047 = vpop.f32.mrf.mxu0
    %5048 = vdwg.mxu0
    %5049 = vmatpush.bf16.msra.mxu0 %v3667
    %5050 = vmatpush.bf16.msra.mxu0 %v3635
    %5051 = vmatpush.bf16.msra.mxu0 %v3603
    %5052 = vmatpush.bf16.msra.mxu0 %v3571
    %5053 = vmatpush.bf16.msra.mxu0 %v3539
    %5054 = vmatpush.bf16.msra.mxu0 %v3507
    %5055 = vmatpush.bf16.msra.mxu0 %v3475
    %5056 = vmatpush.bf16.msra.mxu0 %v3443
    %5057 = vmatmul.bf16.gmra.mxu0 %v1040
    %v5058 = vpop.f32.mrf.mxu0
    %v5059 = vpop.f32.mrf.mxu0
    %5060 = vmatmul.bf16.gmra.mxu0 %v1042
    %v5061 = vpop.f32.mrf.mxu0
    %v5062 = vpop.f32.mrf.mxu0
    %5063 = vmatmul.bf16.gmra.mxu0 %v1044
    %v5064 = vpop.f32.mrf.mxu0
    %v5065 = vpop.f32.mrf.mxu0
    %5066 = vmatmul.bf16.gmra.mxu0 %v1046
    %v5067 = vpop.f32.mrf.mxu0
    %v5068 = vadd.f32 %v5034, %v5067
    %v5069 = vpop.f32.mrf.mxu0
    %5070 = vmatmul.bf16.gmra.mxu0 %v1048
    %v5071 = vpop.f32.mrf.mxu0
    %v5072 = vpop.f32.mrf.mxu0
    %5073 = vmatmul.bf16.gmra.mxu0 %v1050
    %v5074 = vpop.f32.mrf.mxu0
    %v5075 = vpop.f32.mrf.mxu0
    %5076 = vmatmul.bf16.gmra.mxu0 %v1052
    %v5077 = vpop.f32.mrf.mxu0
    %v5078 = vpop.f32.mrf.mxu0
    %5079 = vmatmul.bf16.gmra.mxu0 %v1054
    %v5080 = vpop.f32.mrf.mxu0
    %v5081 = vpop.f32.mrf.mxu0
    %5082 = vdwg.mxu0
    %5083 = vmatpush.bf16.msra.mxu0 %v3412
    %5084 = vmatpush.bf16.msra.mxu0 %v3380
    %5085 = vmatpush.bf16.msra.mxu0 %v3348
    %5086 = vmatpush.bf16.msra.mxu0 %v3316
    %5087 = vmatpush.bf16.msra.mxu0 %v3284
    %5088 = vmatpush.bf16.msra.mxu0 %v3252
    %5089 = vmatpush.bf16.msra.mxu0 %v3220
    %5090 = vmatpush.bf16.msra.mxu0 %v3188
    %5091 = vmatmul.bf16.gmra.mxu0 %v1039
    %v5092 = vpop.f32.mrf.mxu0
    %v5093 = vpop.f32.mrf.mxu0
    %5094 = vmatmul.bf16.gmra.mxu0 %v1041
    %v5095 = vpop.f32.mrf.mxu0
    %v5096 = vpop.f32.mrf.mxu0
    %5097 = vmatmul.bf16.gmra.mxu0 %v1043
    %v5098 = vpop.f32.mrf.mxu0
    %v5099 = vpop.f32.mrf.mxu0
    %5100 = vmatmul.bf16.gmra.mxu0 %v1045
    %v5101 = vpop.f32.mrf.mxu0
    %v5102 = vadd.f32 %v1588, %v5101
    %v5103 = vpop.f32.mrf.mxu0
    %5104 = vmatmul.bf16.gmra.mxu0 %v1047
    %v5105 = vpop.f32.mrf.mxu0
    %v5106 = vpop.f32.mrf.mxu0
    %5107 = vmatmul.bf16.gmra.mxu0 %v1049
    %v5108 = vpop.f32.mrf.mxu0
    %v5109 = vpop.f32.mrf.mxu0
    %5110 = vmatmul.bf16.gmra.mxu0 %v1051
    %v5111 = vpop.f32.mrf.mxu0
    %v5112 = vpop.f32.mrf.mxu0
    %5113 = vmatmul.bf16.gmra.mxu0 %v1053
    %v5114 = vpop.f32.mrf.mxu0
    %v5115 = vpop.f32.mrf.mxu0
    %5116 = vdwg.mxu0
    %5117 = vmatpush.bf16.msra.mxu0 %v3668
    %5118 = vmatpush.bf16.msra.mxu0 %v3636
    %5119 = vmatpush.bf16.msra.mxu0 %v3604
    %5120 = vmatpush.bf16.msra.mxu0 %v3572
    %5121 = vmatpush.bf16.msra.mxu0 %v3540
    %5122 = vmatpush.bf16.msra.mxu0 %v3508
    %5123 = vmatpush.bf16.msra.mxu0 %v3476
    %5124 = vmatpush.bf16.msra.mxu0 %v3444
    %5125 = vmatmul.bf16.gmra.mxu0 %v1040
    %v5126 = vpop.f32.mrf.mxu0
    %v5127 = vpop.f32.mrf.mxu0
    %5128 = vmatmul.bf16.gmra.mxu0 %v1042
    %v5129 = vpop.f32.mrf.mxu0
    %v5130 = vpop.f32.mrf.mxu0
    %5131 = vmatmul.bf16.gmra.mxu0 %v1044
    %v5132 = vpop.f32.mrf.mxu0
    %v5133 = vpop.f32.mrf.mxu0
    %5134 = vmatmul.bf16.gmra.mxu0 %v1046
    %v5135 = vpop.f32.mrf.mxu0
    %v5136 = vadd.f32 %v5102, %v5135
    %v5137 = vpop.f32.mrf.mxu0
    %5138 = vmatmul.bf16.gmra.mxu0 %v1048
    %v5139 = vpop.f32.mrf.mxu0
    %v5140 = vpop.f32.mrf.mxu0
    %5141 = vmatmul.bf16.gmra.mxu0 %v1050
    %v5142 = vpop.f32.mrf.mxu0
    %v5143 = vpop.f32.mrf.mxu0
    %5144 = vmatmul.bf16.gmra.mxu0 %v1052
    %v5145 = vpop.f32.mrf.mxu0
    %v5146 = vpop.f32.mrf.mxu0
    %5147 = vmatmul.bf16.gmra.mxu0 %v1054
    %v5148 = vpop.f32.mrf.mxu0
    %v5149 = vpop.f32.mrf.mxu0
    %5150 = vdwg.mxu0
    %5151 = vmatpush.bf16.msra.mxu0 %v3413
    %5152 = vmatpush.bf16.msra.mxu0 %v3381
    %5153 = vmatpush.bf16.msra.mxu0 %v3349
    %5154 = vmatpush.bf16.msra.mxu0 %v3317
    %5155 = vmatpush.bf16.msra.mxu0 %v3285
    %5156 = vmatpush.bf16.msra.mxu0 %v3253
    %5157 = vmatpush.bf16.msra.mxu0 %v3221
    %5158 = vmatpush.bf16.msra.mxu0 %v3189
    %5159 = vmatmul.bf16.gmra.mxu0 %v1039
    %v5160 = vpop.f32.mrf.mxu0
    %v5161 = vpop.f32.mrf.mxu0
    %5162 = vmatmul.bf16.gmra.mxu0 %v1041
    %v5163 = vpop.f32.mrf.mxu0
    %v5164 = vpop.f32.mrf.mxu0
    %5165 = vmatmul.bf16.gmra.mxu0 %v1043
    %v5166 = vpop.f32.mrf.mxu0
    %v5167 = vpop.f32.mrf.mxu0
    %5168 = vmatmul.bf16.gmra.mxu0 %v1045
    %v5169 = vpop.f32.mrf.mxu0
    %v5170 = vpop.f32.mrf.mxu0
    %v5171 = vadd.f32 %v1589, %v5170
    %5172 = vmatmul.bf16.gmra.mxu0 %v1047
    %v5173 = vpop.f32.mrf.mxu0
    %v5174 = vpop.f32.mrf.mxu0
    %5175 = vmatmul.bf16.gmra.mxu0 %v1049
    %v5176 = vpop.f32.mrf.mxu0
    %v5177 = vpop.f32.mrf.mxu0
    %5178 = vmatmul.bf16.gmra.mxu0 %v1051
    %v5179 = vpop.f32.mrf.mxu0
    %v5180 = vpop.f32.mrf.mxu0
    %5181 = vmatmul.bf16.gmra.mxu0 %v1053
    %v5182 = vpop.f32.mrf.mxu0
    %v5183 = vpop.f32.mrf.mxu0
    %5184 = vdwg.mxu0
    %5185 = vmatpush.bf16.msra.mxu0 %v3669
    %5186 = vmatpush.bf16.msra.mxu0 %v3637
    %5187 = vmatpush.bf16.msra.mxu0 %v3605
    %5188 = vmatpush.bf16.msra.mxu0 %v3573
    %5189 = vmatpush.bf16.msra.mxu0 %v3541
    %5190 = vmatpush.bf16.msra.mxu0 %v3509
    %5191 = vmatpush.bf16.msra.mxu0 %v3477
    %5192 = vmatpush.bf16.msra.mxu0 %v3445
    %5193 = vmatmul.bf16.gmra.mxu0 %v1040
    %v5194 = vpop.f32.mrf.mxu0
    %v5195 = vpop.f32.mrf.mxu0
    %5196 = vmatmul.bf16.gmra.mxu0 %v1042
    %v5197 = vpop.f32.mrf.mxu0
    %v5198 = vpop.f32.mrf.mxu0
    %5199 = vmatmul.bf16.gmra.mxu0 %v1044
    %v5200 = vpop.f32.mrf.mxu0
    %v5201 = vpop.f32.mrf.mxu0
    %5202 = vmatmul.bf16.gmra.mxu0 %v1046
    %v5203 = vpop.f32.mrf.mxu0
    %v5204 = vpop.f32.mrf.mxu0
    %v5205 = vadd.f32 %v5171, %v5204
    %5206 = vmatmul.bf16.gmra.mxu0 %v1048
    %v5207 = vpop.f32.mrf.mxu0
    %v5208 = vpop.f32.mrf.mxu0
    %5209 = vmatmul.bf16.gmra.mxu0 %v1050
    %v5210 = vpop.f32.mrf.mxu0
    %v5211 = vpop.f32.mrf.mxu0
    %5212 = vmatmul.bf16.gmra.mxu0 %v1052
    %v5213 = vpop.f32.mrf.mxu0
    %v5214 = vpop.f32.mrf.mxu0
    %5215 = vmatmul.bf16.gmra.mxu0 %v1054
    %v5216 = vpop.f32.mrf.mxu0
    %v5217 = vpop.f32.mrf.mxu0
    %5218 = vdwg.mxu0
    %5219 = vmatpush.bf16.msra.mxu0 %v3414
    %5220 = vmatpush.bf16.msra.mxu0 %v3382
    %5221 = vmatpush.bf16.msra.mxu0 %v3350
    %5222 = vmatpush.bf16.msra.mxu0 %v3318
    %5223 = vmatpush.bf16.msra.mxu0 %v3286
    %5224 = vmatpush.bf16.msra.mxu0 %v3254
    %5225 = vmatpush.bf16.msra.mxu0 %v3222
    %5226 = vmatpush.bf16.msra.mxu0 %v3190
    %5227 = vmatmul.bf16.gmra.mxu0 %v1039
    %v5228 = vpop.f32.mrf.mxu0
    %v5229 = vpop.f32.mrf.mxu0
    %5230 = vmatmul.bf16.gmra.mxu0 %v1041
    %v5231 = vpop.f32.mrf.mxu0
    %v5232 = vpop.f32.mrf.mxu0
    %5233 = vmatmul.bf16.gmra.mxu0 %v1043
    %v5234 = vpop.f32.mrf.mxu0
    %v5235 = vpop.f32.mrf.mxu0
    %5236 = vmatmul.bf16.gmra.mxu0 %v1045
    %v5237 = vpop.f32.mrf.mxu0
    %v5238 = vpop.f32.mrf.mxu0
    %v5239 = vadd.f32 %v1590, %v5238
    %5240 = vmatmul.bf16.gmra.mxu0 %v1047
    %v5241 = vpop.f32.mrf.mxu0
    %v5242 = vpop.f32.mrf.mxu0
    %5243 = vmatmul.bf16.gmra.mxu0 %v1049
    %v5244 = vpop.f32.mrf.mxu0
    %v5245 = vpop.f32.mrf.mxu0
    %5246 = vmatmul.bf16.gmra.mxu0 %v1051
    %v5247 = vpop.f32.mrf.mxu0
    %v5248 = vpop.f32.mrf.mxu0
    %5249 = vmatmul.bf16.gmra.mxu0 %v1053
    %v5250 = vpop.f32.mrf.mxu0
    %v5251 = vpop.f32.mrf.mxu0
    %5252 = vdwg.mxu0
    %5253 = vmatpush.bf16.msra.mxu0 %v3670
    %5254 = vmatpush.bf16.msra.mxu0 %v3638
    %5255 = vmatpush.bf16.msra.mxu0 %v3606
    %5256 = vmatpush.bf16.msra.mxu0 %v3574
    %5257 = vmatpush.bf16.msra.mxu0 %v3542
    %5258 = vmatpush.bf16.msra.mxu0 %v3510
    %5259 = vmatpush.bf16.msra.mxu0 %v3478
    %5260 = vmatpush.bf16.msra.mxu0 %v3446
    %5261 = vmatmul.bf16.gmra.mxu0 %v1040
    %v5262 = vpop.f32.mrf.mxu0
    %v5263 = vpop.f32.mrf.mxu0
    %5264 = vmatmul.bf16.gmra.mxu0 %v1042
    %v5265 = vpop.f32.mrf.mxu0
    %v5266 = vpop.f32.mrf.mxu0
    %5267 = vmatmul.bf16.gmra.mxu0 %v1044
    %v5268 = vpop.f32.mrf.mxu0
    %v5269 = vpop.f32.mrf.mxu0
    %5270 = vmatmul.bf16.gmra.mxu0 %v1046
    %v5271 = vpop.f32.mrf.mxu0
    %v5272 = vpop.f32.mrf.mxu0
    %v5273 = vadd.f32 %v5239, %v5272
    %5274 = vmatmul.bf16.gmra.mxu0 %v1048
    %v5275 = vpop.f32.mrf.mxu0
    %v5276 = vpop.f32.mrf.mxu0
    %5277 = vmatmul.bf16.gmra.mxu0 %v1050
    %v5278 = vpop.f32.mrf.mxu0
    %v5279 = vpop.f32.mrf.mxu0
    %5280 = vmatmul.bf16.gmra.mxu0 %v1052
    %v5281 = vpop.f32.mrf.mxu0
    %v5282 = vpop.f32.mrf.mxu0
    %5283 = vmatmul.bf16.gmra.mxu0 %v1054
    %v5284 = vpop.f32.mrf.mxu0
    %v5285 = vpop.f32.mrf.mxu0
    %5286 = vdwg.mxu0
    %5287 = vmatpush.bf16.msra.mxu0 %v3415
    %5288 = vmatpush.bf16.msra.mxu0 %v3383
    %5289 = vmatpush.bf16.msra.mxu0 %v3351
    %5290 = vmatpush.bf16.msra.mxu0 %v3319
    %5291 = vmatpush.bf16.msra.mxu0 %v3287
    %5292 = vmatpush.bf16.msra.mxu0 %v3255
    %5293 = vmatpush.bf16.msra.mxu0 %v3223
    %5294 = vmatpush.bf16.msra.mxu0 %v3191
    %5295 = vmatmul.bf16.gmra.mxu0 %v1039
    %v5296 = vpop.f32.mrf.mxu0
    %v5297 = vpop.f32.mrf.mxu0
    %5298 = vmatmul.bf16.gmra.mxu0 %v1041
    %v5299 = vpop.f32.mrf.mxu0
    %v5300 = vpop.f32.mrf.mxu0
    %5301 = vmatmul.bf16.gmra.mxu0 %v1043
    %v5302 = vpop.f32.mrf.mxu0
    %v5303 = vpop.f32.mrf.mxu0
    %5304 = vmatmul.bf16.gmra.mxu0 %v1045
    %v5305 = vpop.f32.mrf.mxu0
    %v5306 = vpop.f32.mrf.mxu0
    %5307 = vmatmul.bf16.gmra.mxu0 %v1047
    %v5308 = vpop.f32.mrf.mxu0
    %v5309 = vadd.f32 %v1591, %v5308
    %v5310 = vpop.f32.mrf.mxu0
    %5311 = vmatmul.bf16.gmra.mxu0 %v1049
    %v5312 = vpop.f32.mrf.mxu0
    %v5313 = vpop.f32.mrf.mxu0
    %5314 = vmatmul.bf16.gmra.mxu0 %v1051
    %v5315 = vpop.f32.mrf.mxu0
    %v5316 = vpop.f32.mrf.mxu0
    %5317 = vmatmul.bf16.gmra.mxu0 %v1053
    %v5318 = vpop.f32.mrf.mxu0
    %v5319 = vpop.f32.mrf.mxu0
    %5320 = vdwg.mxu0
    %5321 = vmatpush.bf16.msra.mxu0 %v3671
    %5322 = vmatpush.bf16.msra.mxu0 %v3639
    %5323 = vmatpush.bf16.msra.mxu0 %v3607
    %5324 = vmatpush.bf16.msra.mxu0 %v3575
    %5325 = vmatpush.bf16.msra.mxu0 %v3543
    %5326 = vmatpush.bf16.msra.mxu0 %v3511
    %5327 = vmatpush.bf16.msra.mxu0 %v3479
    %5328 = vmatpush.bf16.msra.mxu0 %v3447
    %5329 = vmatmul.bf16.gmra.mxu0 %v1040
    %v5330 = vpop.f32.mrf.mxu0
    %v5331 = vpop.f32.mrf.mxu0
    %5332 = vmatmul.bf16.gmra.mxu0 %v1042
    %v5333 = vpop.f32.mrf.mxu0
    %v5334 = vpop.f32.mrf.mxu0
    %5335 = vmatmul.bf16.gmra.mxu0 %v1044
    %v5336 = vpop.f32.mrf.mxu0
    %v5337 = vpop.f32.mrf.mxu0
    %5338 = vmatmul.bf16.gmra.mxu0 %v1046
    %v5339 = vpop.f32.mrf.mxu0
    %v5340 = vpop.f32.mrf.mxu0
    %5341 = vmatmul.bf16.gmra.mxu0 %v1048
    %v5342 = vpop.f32.mrf.mxu0
    %v5343 = vadd.f32 %v5309, %v5342
    %v5344 = vpop.f32.mrf.mxu0
    %5345 = vmatmul.bf16.gmra.mxu0 %v1050
    %v5346 = vpop.f32.mrf.mxu0
    %v5347 = vpop.f32.mrf.mxu0
    %5348 = vmatmul.bf16.gmra.mxu0 %v1052
    %v5349 = vpop.f32.mrf.mxu0
    %v5350 = vpop.f32.mrf.mxu0
    %5351 = vmatmul.bf16.gmra.mxu0 %v1054
    %v5352 = vpop.f32.mrf.mxu0
    %v5353 = vpop.f32.mrf.mxu0
    %5354 = vdwg.mxu0
    %5355 = vmatpush.bf16.msra.mxu0 %v3416
    %5356 = vmatpush.bf16.msra.mxu0 %v3384
    %5357 = vmatpush.bf16.msra.mxu0 %v3352
    %5358 = vmatpush.bf16.msra.mxu0 %v3320
    %5359 = vmatpush.bf16.msra.mxu0 %v3288
    %5360 = vmatpush.bf16.msra.mxu0 %v3256
    %5361 = vmatpush.bf16.msra.mxu0 %v3224
    %5362 = vmatpush.bf16.msra.mxu0 %v3192
    %5363 = vmatmul.bf16.gmra.mxu0 %v1039
    %v5364 = vpop.f32.mrf.mxu0
    %v5365 = vpop.f32.mrf.mxu0
    %5366 = vmatmul.bf16.gmra.mxu0 %v1041
    %v5367 = vpop.f32.mrf.mxu0
    %v5368 = vpop.f32.mrf.mxu0
    %5369 = vmatmul.bf16.gmra.mxu0 %v1043
    %v5370 = vpop.f32.mrf.mxu0
    %v5371 = vpop.f32.mrf.mxu0
    %5372 = vmatmul.bf16.gmra.mxu0 %v1045
    %v5373 = vpop.f32.mrf.mxu0
    %v5374 = vpop.f32.mrf.mxu0
    %5375 = vmatmul.bf16.gmra.mxu0 %v1047
    %v5376 = vpop.f32.mrf.mxu0
    %v5377 = vadd.f32 %v1592, %v5376
    %v5378 = vpop.f32.mrf.mxu0
    %5379 = vmatmul.bf16.gmra.mxu0 %v1049
    %v5380 = vpop.f32.mrf.mxu0
    %v5381 = vpop.f32.mrf.mxu0
    %5382 = vmatmul.bf16.gmra.mxu0 %v1051
    %v5383 = vpop.f32.mrf.mxu0
    %v5384 = vpop.f32.mrf.mxu0
    %5385 = vmatmul.bf16.gmra.mxu0 %v1053
    %v5386 = vpop.f32.mrf.mxu0
    %v5387 = vpop.f32.mrf.mxu0
    %5388 = vdwg.mxu0
    %5389 = vmatpush.bf16.msra.mxu0 %v3672
    %5390 = vmatpush.bf16.msra.mxu0 %v3640
    %5391 = vmatpush.bf16.msra.mxu0 %v3608
    %5392 = vmatpush.bf16.msra.mxu0 %v3576
    %5393 = vmatpush.bf16.msra.mxu0 %v3544
    %5394 = vmatpush.bf16.msra.mxu0 %v3512
    %5395 = vmatpush.bf16.msra.mxu0 %v3480
    %5396 = vmatpush.bf16.msra.mxu0 %v3448
    %5397 = vmatmul.bf16.gmra.mxu0 %v1040
    %v5398 = vpop.f32.mrf.mxu0
    %v5399 = vpop.f32.mrf.mxu0
    %5400 = vmatmul.bf16.gmra.mxu0 %v1042
    %v5401 = vpop.f32.mrf.mxu0
    %v5402 = vpop.f32.mrf.mxu0
    %5403 = vmatmul.bf16.gmra.mxu0 %v1044
    %v5404 = vpop.f32.mrf.mxu0
    %v5405 = vpop.f32.mrf.mxu0
    %5406 = vmatmul.bf16.gmra.mxu0 %v1046
    %v5407 = vpop.f32.mrf.mxu0
    %v5408 = vpop.f32.mrf.mxu0
    %5409 = vmatmul.bf16.gmra.mxu0 %v1048
    %v5410 = vpop.f32.mrf.mxu0
    %v5411 = vadd.f32 %v5377, %v5410
    %v5412 = vpop.f32.mrf.mxu0
    %5413 = vmatmul.bf16.gmra.mxu0 %v1050
    %v5414 = vpop.f32.mrf.mxu0
    %v5415 = vpop.f32.mrf.mxu0
    %5416 = vmatmul.bf16.gmra.mxu0 %v1052
    %v5417 = vpop.f32.mrf.mxu0
    %v5418 = vpop.f32.mrf.mxu0
    %5419 = vmatmul.bf16.gmra.mxu0 %v1054
    %v5420 = vpop.f32.mrf.mxu0
    %v5421 = vpop.f32.mrf.mxu0
    %5422 = vdwg.mxu0
    %5423 = vmatpush.bf16.msra.mxu0 %v3417
    %5424 = vmatpush.bf16.msra.mxu0 %v3385
    %5425 = vmatpush.bf16.msra.mxu0 %v3353
    %5426 = vmatpush.bf16.msra.mxu0 %v3321
    %5427 = vmatpush.bf16.msra.mxu0 %v3289
    %5428 = vmatpush.bf16.msra.mxu0 %v3257
    %5429 = vmatpush.bf16.msra.mxu0 %v3225
    %5430 = vmatpush.bf16.msra.mxu0 %v3193
    %5431 = vmatmul.bf16.gmra.mxu0 %v1039
    %v5432 = vpop.f32.mrf.mxu0
    %v5433 = vpop.f32.mrf.mxu0
    %5434 = vmatmul.bf16.gmra.mxu0 %v1041
    %v5435 = vpop.f32.mrf.mxu0
    %v5436 = vpop.f32.mrf.mxu0
    %5437 = vmatmul.bf16.gmra.mxu0 %v1043
    %v5438 = vpop.f32.mrf.mxu0
    %v5439 = vpop.f32.mrf.mxu0
    %5440 = vmatmul.bf16.gmra.mxu0 %v1045
    %v5441 = vpop.f32.mrf.mxu0
    %v5442 = vpop.f32.mrf.mxu0
    %5443 = vmatmul.bf16.gmra.mxu0 %v1047
    %v5444 = vpop.f32.mrf.mxu0
    %v5445 = vpop.f32.mrf.mxu0
    %v5446 = vadd.f32 %v1593, %v5445
    %5447 = vmatmul.bf16.gmra.mxu0 %v1049
    %v5448 = vpop.f32.mrf.mxu0
    %v5449 = vpop.f32.mrf.mxu0
    %5450 = vmatmul.bf16.gmra.mxu0 %v1051
    %v5451 = vpop.f32.mrf.mxu0
    %v5452 = vpop.f32.mrf.mxu0
    %5453 = vmatmul.bf16.gmra.mxu0 %v1053
    %v5454 = vpop.f32.mrf.mxu0
    %v5455 = vpop.f32.mrf.mxu0
    %5456 = vdwg.mxu0
    %5457 = vmatpush.bf16.msra.mxu0 %v3673
    %5458 = vmatpush.bf16.msra.mxu0 %v3641
    %5459 = vmatpush.bf16.msra.mxu0 %v3609
    %5460 = vmatpush.bf16.msra.mxu0 %v3577
    %5461 = vmatpush.bf16.msra.mxu0 %v3545
    %5462 = vmatpush.bf16.msra.mxu0 %v3513
    %5463 = vmatpush.bf16.msra.mxu0 %v3481
    %5464 = vmatpush.bf16.msra.mxu0 %v3449
    %5465 = vmatmul.bf16.gmra.mxu0 %v1040
    %v5466 = vpop.f32.mrf.mxu0
    %v5467 = vpop.f32.mrf.mxu0
    %5468 = vmatmul.bf16.gmra.mxu0 %v1042
    %v5469 = vpop.f32.mrf.mxu0
    %v5470 = vpop.f32.mrf.mxu0
    %5471 = vmatmul.bf16.gmra.mxu0 %v1044
    %v5472 = vpop.f32.mrf.mxu0
    %v5473 = vpop.f32.mrf.mxu0
    %5474 = vmatmul.bf16.gmra.mxu0 %v1046
    %v5475 = vpop.f32.mrf.mxu0
    %v5476 = vpop.f32.mrf.mxu0
    %5477 = vmatmul.bf16.gmra.mxu0 %v1048
    %v5478 = vpop.f32.mrf.mxu0
    %v5479 = vpop.f32.mrf.mxu0
    %v5480 = vadd.f32 %v5446, %v5479
    %5481 = vmatmul.bf16.gmra.mxu0 %v1050
    %v5482 = vpop.f32.mrf.mxu0
    %v5483 = vpop.f32.mrf.mxu0
    %5484 = vmatmul.bf16.gmra.mxu0 %v1052
    %v5485 = vpop.f32.mrf.mxu0
    %v5486 = vpop.f32.mrf.mxu0
    %5487 = vmatmul.bf16.gmra.mxu0 %v1054
    %v5488 = vpop.f32.mrf.mxu0
    %v5489 = vpop.f32.mrf.mxu0
    %5490 = vdwg.mxu0
    %5491 = vmatpush.bf16.msra.mxu0 %v3418
    %5492 = vmatpush.bf16.msra.mxu0 %v3386
    %5493 = vmatpush.bf16.msra.mxu0 %v3354
    %5494 = vmatpush.bf16.msra.mxu0 %v3322
    %5495 = vmatpush.bf16.msra.mxu0 %v3290
    %5496 = vmatpush.bf16.msra.mxu0 %v3258
    %5497 = vmatpush.bf16.msra.mxu0 %v3226
    %5498 = vmatpush.bf16.msra.mxu0 %v3194
    %5499 = vmatmul.bf16.gmra.mxu0 %v1039
    %v5500 = vpop.f32.mrf.mxu0
    %v5501 = vpop.f32.mrf.mxu0
    %5502 = vmatmul.bf16.gmra.mxu0 %v1041
    %v5503 = vpop.f32.mrf.mxu0
    %v5504 = vpop.f32.mrf.mxu0
    %5505 = vmatmul.bf16.gmra.mxu0 %v1043
    %v5506 = vpop.f32.mrf.mxu0
    %v5507 = vpop.f32.mrf.mxu0
    %5508 = vmatmul.bf16.gmra.mxu0 %v1045
    %v5509 = vpop.f32.mrf.mxu0
    %v5510 = vpop.f32.mrf.mxu0
    %5511 = vmatmul.bf16.gmra.mxu0 %v1047
    %v5512 = vpop.f32.mrf.mxu0
    %v5513 = vpop.f32.mrf.mxu0
    %v5514 = vadd.f32 %v1594, %v5513
    %5515 = vmatmul.bf16.gmra.mxu0 %v1049
    %v5516 = vpop.f32.mrf.mxu0
    %v5517 = vpop.f32.mrf.mxu0
    %5518 = vmatmul.bf16.gmra.mxu0 %v1051
    %v5519 = vpop.f32.mrf.mxu0
    %v5520 = vpop.f32.mrf.mxu0
    %5521 = vmatmul.bf16.gmra.mxu0 %v1053
    %v5522 = vpop.f32.mrf.mxu0
    %v5523 = vpop.f32.mrf.mxu0
    %5524 = vdwg.mxu0
    %5525 = vmatpush.bf16.msra.mxu0 %v3674
    %5526 = vmatpush.bf16.msra.mxu0 %v3642
    %5527 = vmatpush.bf16.msra.mxu0 %v3610
    %5528 = vmatpush.bf16.msra.mxu0 %v3578
    %5529 = vmatpush.bf16.msra.mxu0 %v3546
    %5530 = vmatpush.bf16.msra.mxu0 %v3514
    %5531 = vmatpush.bf16.msra.mxu0 %v3482
    %5532 = vmatpush.bf16.msra.mxu0 %v3450
    %5533 = vmatmul.bf16.gmra.mxu0 %v1040
    %v5534 = vpop.f32.mrf.mxu0
    %v5535 = vpop.f32.mrf.mxu0
    %5536 = vmatmul.bf16.gmra.mxu0 %v1042
    %v5537 = vpop.f32.mrf.mxu0
    %v5538 = vpop.f32.mrf.mxu0
    %5539 = vmatmul.bf16.gmra.mxu0 %v1044
    %v5540 = vpop.f32.mrf.mxu0
    %v5541 = vpop.f32.mrf.mxu0
    %5542 = vmatmul.bf16.gmra.mxu0 %v1046
    %v5543 = vpop.f32.mrf.mxu0
    %v5544 = vpop.f32.mrf.mxu0
    %5545 = vmatmul.bf16.gmra.mxu0 %v1048
    %v5546 = vpop.f32.mrf.mxu0
    %v5547 = vpop.f32.mrf.mxu0
    %v5548 = vadd.f32 %v5514, %v5547
    %5549 = vmatmul.bf16.gmra.mxu0 %v1050
    %v5550 = vpop.f32.mrf.mxu0
    %v5551 = vpop.f32.mrf.mxu0
    %5552 = vmatmul.bf16.gmra.mxu0 %v1052
    %v5553 = vpop.f32.mrf.mxu0
    %v5554 = vpop.f32.mrf.mxu0
    %5555 = vmatmul.bf16.gmra.mxu0 %v1054
    %v5556 = vpop.f32.mrf.mxu0
    %v5557 = vpop.f32.mrf.mxu0
    %5558 = vdwg.mxu0
    %5559 = vmatpush.bf16.msra.mxu0 %v3419
    %5560 = vmatpush.bf16.msra.mxu0 %v3387
    %5561 = vmatpush.bf16.msra.mxu0 %v3355
    %5562 = vmatpush.bf16.msra.mxu0 %v3323
    %5563 = vmatpush.bf16.msra.mxu0 %v3291
    %5564 = vmatpush.bf16.msra.mxu0 %v3259
    %5565 = vmatpush.bf16.msra.mxu0 %v3227
    %5566 = vmatpush.bf16.msra.mxu0 %v3195
    %5567 = vmatmul.bf16.gmra.mxu0 %v1039
    %v5568 = vpop.f32.mrf.mxu0
    %v5569 = vpop.f32.mrf.mxu0
    %5570 = vmatmul.bf16.gmra.mxu0 %v1041
    %v5571 = vpop.f32.mrf.mxu0
    %v5572 = vpop.f32.mrf.mxu0
    %5573 = vmatmul.bf16.gmra.mxu0 %v1043
    %v5574 = vpop.f32.mrf.mxu0
    %v5575 = vpop.f32.mrf.mxu0
    %5576 = vmatmul.bf16.gmra.mxu0 %v1045
    %v5577 = vpop.f32.mrf.mxu0
    %v5578 = vpop.f32.mrf.mxu0
    %5579 = vmatmul.bf16.gmra.mxu0 %v1047
    %v5580 = vpop.f32.mrf.mxu0
    %v5581 = vpop.f32.mrf.mxu0
    %5582 = vmatmul.bf16.gmra.mxu0 %v1049
    %v5583 = vpop.f32.mrf.mxu0
    %v5584 = vadd.f32 %v1595, %v5583
    %v5585 = vpop.f32.mrf.mxu0
    %5586 = vmatmul.bf16.gmra.mxu0 %v1051
    %v5587 = vpop.f32.mrf.mxu0
    %v5588 = vpop.f32.mrf.mxu0
    %5589 = vmatmul.bf16.gmra.mxu0 %v1053
    %v5590 = vpop.f32.mrf.mxu0
    %v5591 = vpop.f32.mrf.mxu0
    %5592 = vdwg.mxu0
    %5593 = vmatpush.bf16.msra.mxu0 %v3675
    %5594 = vmatpush.bf16.msra.mxu0 %v3643
    %5595 = vmatpush.bf16.msra.mxu0 %v3611
    %5596 = vmatpush.bf16.msra.mxu0 %v3579
    %5597 = vmatpush.bf16.msra.mxu0 %v3547
    %5598 = vmatpush.bf16.msra.mxu0 %v3515
    %5599 = vmatpush.bf16.msra.mxu0 %v3483
    %5600 = vmatpush.bf16.msra.mxu0 %v3451
    %5601 = vmatmul.bf16.gmra.mxu0 %v1040
    %v5602 = vpop.f32.mrf.mxu0
    %v5603 = vpop.f32.mrf.mxu0
    %5604 = vmatmul.bf16.gmra.mxu0 %v1042
    %v5605 = vpop.f32.mrf.mxu0
    %v5606 = vpop.f32.mrf.mxu0
    %5607 = vmatmul.bf16.gmra.mxu0 %v1044
    %v5608 = vpop.f32.mrf.mxu0
    %v5609 = vpop.f32.mrf.mxu0
    %5610 = vmatmul.bf16.gmra.mxu0 %v1046
    %v5611 = vpop.f32.mrf.mxu0
    %v5612 = vpop.f32.mrf.mxu0
    %5613 = vmatmul.bf16.gmra.mxu0 %v1048
    %v5614 = vpop.f32.mrf.mxu0
    %v5615 = vpop.f32.mrf.mxu0
    %5616 = vmatmul.bf16.gmra.mxu0 %v1050
    %v5617 = vpop.f32.mrf.mxu0
    %v5618 = vadd.f32 %v5584, %v5617
    %v5619 = vpop.f32.mrf.mxu0
    %5620 = vmatmul.bf16.gmra.mxu0 %v1052
    %v5621 = vpop.f32.mrf.mxu0
    %v5622 = vpop.f32.mrf.mxu0
    %5623 = vmatmul.bf16.gmra.mxu0 %v1054
    %v5624 = vpop.f32.mrf.mxu0
    %v5625 = vpop.f32.mrf.mxu0
    %5626 = vdwg.mxu0
    %5627 = vmatpush.bf16.msra.mxu0 %v3420
    %5628 = vmatpush.bf16.msra.mxu0 %v3388
    %5629 = vmatpush.bf16.msra.mxu0 %v3356
    %5630 = vmatpush.bf16.msra.mxu0 %v3324
    %5631 = vmatpush.bf16.msra.mxu0 %v3292
    %5632 = vmatpush.bf16.msra.mxu0 %v3260
    %5633 = vmatpush.bf16.msra.mxu0 %v3228
    %5634 = vmatpush.bf16.msra.mxu0 %v3196
    %5635 = vmatmul.bf16.gmra.mxu0 %v1039
    %v5636 = vpop.f32.mrf.mxu0
    %v5637 = vpop.f32.mrf.mxu0
    %5638 = vmatmul.bf16.gmra.mxu0 %v1041
    %v5639 = vpop.f32.mrf.mxu0
    %v5640 = vpop.f32.mrf.mxu0
    %5641 = vmatmul.bf16.gmra.mxu0 %v1043
    %v5642 = vpop.f32.mrf.mxu0
    %v5643 = vpop.f32.mrf.mxu0
    %5644 = vmatmul.bf16.gmra.mxu0 %v1045
    %v5645 = vpop.f32.mrf.mxu0
    %v5646 = vpop.f32.mrf.mxu0
    %5647 = vmatmul.bf16.gmra.mxu0 %v1047
    %v5648 = vpop.f32.mrf.mxu0
    %v5649 = vpop.f32.mrf.mxu0
    %5650 = vmatmul.bf16.gmra.mxu0 %v1049
    %v5651 = vpop.f32.mrf.mxu0
    %v5652 = vadd.f32 %v1596, %v5651
    %v5653 = vpop.f32.mrf.mxu0
    %5654 = vmatmul.bf16.gmra.mxu0 %v1051
    %v5655 = vpop.f32.mrf.mxu0
    %v5656 = vpop.f32.mrf.mxu0
    %5657 = vmatmul.bf16.gmra.mxu0 %v1053
    %v5658 = vpop.f32.mrf.mxu0
    %v5659 = vpop.f32.mrf.mxu0
    %5660 = vdwg.mxu0
    %5661 = vmatpush.bf16.msra.mxu0 %v3676
    %5662 = vmatpush.bf16.msra.mxu0 %v3644
    %5663 = vmatpush.bf16.msra.mxu0 %v3612
    %5664 = vmatpush.bf16.msra.mxu0 %v3580
    %5665 = vmatpush.bf16.msra.mxu0 %v3548
    %5666 = vmatpush.bf16.msra.mxu0 %v3516
    %5667 = vmatpush.bf16.msra.mxu0 %v3484
    %5668 = vmatpush.bf16.msra.mxu0 %v3452
    %5669 = vmatmul.bf16.gmra.mxu0 %v1040
    %v5670 = vpop.f32.mrf.mxu0
    %v5671 = vpop.f32.mrf.mxu0
    %5672 = vmatmul.bf16.gmra.mxu0 %v1042
    %v5673 = vpop.f32.mrf.mxu0
    %v5674 = vpop.f32.mrf.mxu0
    %5675 = vmatmul.bf16.gmra.mxu0 %v1044
    %v5676 = vpop.f32.mrf.mxu0
    %v5677 = vpop.f32.mrf.mxu0
    %5678 = vmatmul.bf16.gmra.mxu0 %v1046
    %v5679 = vpop.f32.mrf.mxu0
    %v5680 = vpop.f32.mrf.mxu0
    %5681 = vmatmul.bf16.gmra.mxu0 %v1048
    %v5682 = vpop.f32.mrf.mxu0
    %v5683 = vpop.f32.mrf.mxu0
    %5684 = vmatmul.bf16.gmra.mxu0 %v1050
    %v5685 = vpop.f32.mrf.mxu0
    %v5686 = vadd.f32 %v5652, %v5685
    %v5687 = vpop.f32.mrf.mxu0
    %5688 = vmatmul.bf16.gmra.mxu0 %v1052
    %v5689 = vpop.f32.mrf.mxu0
    %v5690 = vpop.f32.mrf.mxu0
    %5691 = vmatmul.bf16.gmra.mxu0 %v1054
    %v5692 = vpop.f32.mrf.mxu0
    %v5693 = vpop.f32.mrf.mxu0
    %5694 = vdwg.mxu0
    %5695 = vmatpush.bf16.msra.mxu0 %v3421
    %5696 = vmatpush.bf16.msra.mxu0 %v3389
    %5697 = vmatpush.bf16.msra.mxu0 %v3357
    %5698 = vmatpush.bf16.msra.mxu0 %v3325
    %5699 = vmatpush.bf16.msra.mxu0 %v3293
    %5700 = vmatpush.bf16.msra.mxu0 %v3261
    %5701 = vmatpush.bf16.msra.mxu0 %v3229
    %5702 = vmatpush.bf16.msra.mxu0 %v3197
    %5703 = vmatmul.bf16.gmra.mxu0 %v1039
    %v5704 = vpop.f32.mrf.mxu0
    %v5705 = vpop.f32.mrf.mxu0
    %5706 = vmatmul.bf16.gmra.mxu0 %v1041
    %v5707 = vpop.f32.mrf.mxu0
    %v5708 = vpop.f32.mrf.mxu0
    %5709 = vmatmul.bf16.gmra.mxu0 %v1043
    %v5710 = vpop.f32.mrf.mxu0
    %v5711 = vpop.f32.mrf.mxu0
    %5712 = vmatmul.bf16.gmra.mxu0 %v1045
    %v5713 = vpop.f32.mrf.mxu0
    %v5714 = vpop.f32.mrf.mxu0
    %5715 = vmatmul.bf16.gmra.mxu0 %v1047
    %v5716 = vpop.f32.mrf.mxu0
    %v5717 = vpop.f32.mrf.mxu0
    %5718 = vmatmul.bf16.gmra.mxu0 %v1049
    %v5719 = vpop.f32.mrf.mxu0
    %v5720 = vpop.f32.mrf.mxu0
    %v5721 = vadd.f32 %v1597, %v5720
    %5722 = vmatmul.bf16.gmra.mxu0 %v1051
    %v5723 = vpop.f32.mrf.mxu0
    %v5724 = vpop.f32.mrf.mxu0
    %5725 = vmatmul.bf16.gmra.mxu0 %v1053
    %v5726 = vpop.f32.mrf.mxu0
    %v5727 = vpop.f32.mrf.mxu0
    %5728 = vdwg.mxu0
    %5729 = vmatpush.bf16.msra.mxu0 %v3677
    %5730 = vmatpush.bf16.msra.mxu0 %v3645
    %5731 = vmatpush.bf16.msra.mxu0 %v3613
    %5732 = vmatpush.bf16.msra.mxu0 %v3581
    %5733 = vmatpush.bf16.msra.mxu0 %v3549
    %5734 = vmatpush.bf16.msra.mxu0 %v3517
    %5735 = vmatpush.bf16.msra.mxu0 %v3485
    %5736 = vmatpush.bf16.msra.mxu0 %v3453
    %5737 = vmatmul.bf16.gmra.mxu0 %v1040
    %v5738 = vpop.f32.mrf.mxu0
    %v5739 = vpop.f32.mrf.mxu0
    %5740 = vmatmul.bf16.gmra.mxu0 %v1042
    %v5741 = vpop.f32.mrf.mxu0
    %v5742 = vpop.f32.mrf.mxu0
    %5743 = vmatmul.bf16.gmra.mxu0 %v1044
    %v5744 = vpop.f32.mrf.mxu0
    %v5745 = vpop.f32.mrf.mxu0
    %5746 = vmatmul.bf16.gmra.mxu0 %v1046
    %v5747 = vpop.f32.mrf.mxu0
    %v5748 = vpop.f32.mrf.mxu0
    %5749 = vmatmul.bf16.gmra.mxu0 %v1048
    %v5750 = vpop.f32.mrf.mxu0
    %v5751 = vpop.f32.mrf.mxu0
    %5752 = vmatmul.bf16.gmra.mxu0 %v1050
    %v5753 = vpop.f32.mrf.mxu0
    %v5754 = vpop.f32.mrf.mxu0
    %v5755 = vadd.f32 %v5721, %v5754
    %5756 = vmatmul.bf16.gmra.mxu0 %v1052
    %v5757 = vpop.f32.mrf.mxu0
    %v5758 = vpop.f32.mrf.mxu0
    %5759 = vmatmul.bf16.gmra.mxu0 %v1054
    %v5760 = vpop.f32.mrf.mxu0
    %v5761 = vpop.f32.mrf.mxu0
    %5762 = vdwg.mxu0
    %5763 = vmatpush.bf16.msra.mxu0 %v3422
    %5764 = vmatpush.bf16.msra.mxu0 %v3390
    %5765 = vmatpush.bf16.msra.mxu0 %v3358
    %5766 = vmatpush.bf16.msra.mxu0 %v3326
    %5767 = vmatpush.bf16.msra.mxu0 %v3294
    %5768 = vmatpush.bf16.msra.mxu0 %v3262
    %5769 = vmatpush.bf16.msra.mxu0 %v3230
    %5770 = vmatpush.bf16.msra.mxu0 %v3198
    %5771 = vmatmul.bf16.gmra.mxu0 %v1039
    %v5772 = vpop.f32.mrf.mxu0
    %v5773 = vpop.f32.mrf.mxu0
    %5774 = vmatmul.bf16.gmra.mxu0 %v1041
    %v5775 = vpop.f32.mrf.mxu0
    %v5776 = vpop.f32.mrf.mxu0
    %5777 = vmatmul.bf16.gmra.mxu0 %v1043
    %v5778 = vpop.f32.mrf.mxu0
    %v5779 = vpop.f32.mrf.mxu0
    %5780 = vmatmul.bf16.gmra.mxu0 %v1045
    %v5781 = vpop.f32.mrf.mxu0
    %v5782 = vpop.f32.mrf.mxu0
    %5783 = vmatmul.bf16.gmra.mxu0 %v1047
    %v5784 = vpop.f32.mrf.mxu0
    %v5785 = vpop.f32.mrf.mxu0
    %5786 = vmatmul.bf16.gmra.mxu0 %v1049
    %v5787 = vpop.f32.mrf.mxu0
    %v5788 = vpop.f32.mrf.mxu0
    %v5789 = vadd.f32 %v1598, %v5788
    %5790 = vmatmul.bf16.gmra.mxu0 %v1051
    %v5791 = vpop.f32.mrf.mxu0
    %v5792 = vpop.f32.mrf.mxu0
    %5793 = vmatmul.bf16.gmra.mxu0 %v1053
    %v5794 = vpop.f32.mrf.mxu0
    %v5795 = vpop.f32.mrf.mxu0
    %5796 = vdwg.mxu0
    %5797 = vmatpush.bf16.msra.mxu0 %v3678
    %5798 = vmatpush.bf16.msra.mxu0 %v3646
    %5799 = vmatpush.bf16.msra.mxu0 %v3614
    %5800 = vmatpush.bf16.msra.mxu0 %v3582
    %5801 = vmatpush.bf16.msra.mxu0 %v3550
    %5802 = vmatpush.bf16.msra.mxu0 %v3518
    %5803 = vmatpush.bf16.msra.mxu0 %v3486
    %5804 = vmatpush.bf16.msra.mxu0 %v3454
    %5805 = vmatmul.bf16.gmra.mxu0 %v1040
    %v5806 = vpop.f32.mrf.mxu0
    %v5807 = vpop.f32.mrf.mxu0
    %5808 = vmatmul.bf16.gmra.mxu0 %v1042
    %v5809 = vpop.f32.mrf.mxu0
    %v5810 = vpop.f32.mrf.mxu0
    %5811 = vmatmul.bf16.gmra.mxu0 %v1044
    %v5812 = vpop.f32.mrf.mxu0
    %v5813 = vpop.f32.mrf.mxu0
    %5814 = vmatmul.bf16.gmra.mxu0 %v1046
    %v5815 = vpop.f32.mrf.mxu0
    %v5816 = vpop.f32.mrf.mxu0
    %5817 = vmatmul.bf16.gmra.mxu0 %v1048
    %v5818 = vpop.f32.mrf.mxu0
    %v5819 = vpop.f32.mrf.mxu0
    %5820 = vmatmul.bf16.gmra.mxu0 %v1050
    %v5821 = vpop.f32.mrf.mxu0
    %v5822 = vpop.f32.mrf.mxu0
    %v5823 = vadd.f32 %v5789, %v5822
    %5824 = vmatmul.bf16.gmra.mxu0 %v1052
    %v5825 = vpop.f32.mrf.mxu0
    %v5826 = vpop.f32.mrf.mxu0
    %5827 = vmatmul.bf16.gmra.mxu0 %v1054
    %v5828 = vpop.f32.mrf.mxu0
    %v5829 = vpop.f32.mrf.mxu0
    %5830 = vdwg.mxu0
    %5831 = vmatpush.bf16.msra.mxu0 %v3423
    %5832 = vmatpush.bf16.msra.mxu0 %v3391
    %5833 = vmatpush.bf16.msra.mxu0 %v3359
    %5834 = vmatpush.bf16.msra.mxu0 %v3327
    %5835 = vmatpush.bf16.msra.mxu0 %v3295
    %5836 = vmatpush.bf16.msra.mxu0 %v3263
    %5837 = vmatpush.bf16.msra.mxu0 %v3231
    %5838 = vmatpush.bf16.msra.mxu0 %v3199
    %5839 = vmatmul.bf16.gmra.mxu0 %v1039
    %v5840 = vpop.f32.mrf.mxu0
    %v5841 = vpop.f32.mrf.mxu0
    %5842 = vmatmul.bf16.gmra.mxu0 %v1041
    %v5843 = vpop.f32.mrf.mxu0
    %v5844 = vpop.f32.mrf.mxu0
    %5845 = vmatmul.bf16.gmra.mxu0 %v1043
    %v5846 = vpop.f32.mrf.mxu0
    %v5847 = vpop.f32.mrf.mxu0
    %5848 = vmatmul.bf16.gmra.mxu0 %v1045
    %v5849 = vpop.f32.mrf.mxu0
    %v5850 = vpop.f32.mrf.mxu0
    %5851 = vmatmul.bf16.gmra.mxu0 %v1047
    %v5852 = vpop.f32.mrf.mxu0
    %v5853 = vpop.f32.mrf.mxu0
    %5854 = vmatmul.bf16.gmra.mxu0 %v1049
    %v5855 = vpop.f32.mrf.mxu0
    %v5856 = vpop.f32.mrf.mxu0
    %5857 = vmatmul.bf16.gmra.mxu0 %v1051
    %v5858 = vpop.f32.mrf.mxu0
    %v5859 = vadd.f32 %v1599, %v5858
    %v5860 = vpop.f32.mrf.mxu0
    %5861 = vmatmul.bf16.gmra.mxu0 %v1053
    %v5862 = vpop.f32.mrf.mxu0
    %v5863 = vpop.f32.mrf.mxu0
    %5864 = vdwg.mxu0
    %5865 = vmatpush.bf16.msra.mxu0 %v3679
    %5866 = vmatpush.bf16.msra.mxu0 %v3647
    %5867 = vmatpush.bf16.msra.mxu0 %v3615
    %5868 = vmatpush.bf16.msra.mxu0 %v3583
    %5869 = vmatpush.bf16.msra.mxu0 %v3551
    %5870 = vmatpush.bf16.msra.mxu0 %v3519
    %5871 = vmatpush.bf16.msra.mxu0 %v3487
    %5872 = vmatpush.bf16.msra.mxu0 %v3455
    %5873 = vmatmul.bf16.gmra.mxu0 %v1040
    %v5874 = vpop.f32.mrf.mxu0
    %v5875 = vpop.f32.mrf.mxu0
    %5876 = vmatmul.bf16.gmra.mxu0 %v1042
    %v5877 = vpop.f32.mrf.mxu0
    %v5878 = vpop.f32.mrf.mxu0
    %5879 = vmatmul.bf16.gmra.mxu0 %v1044
    %v5880 = vpop.f32.mrf.mxu0
    %v5881 = vpop.f32.mrf.mxu0
    %5882 = vmatmul.bf16.gmra.mxu0 %v1046
    %v5883 = vpop.f32.mrf.mxu0
    %v5884 = vpop.f32.mrf.mxu0
    %5885 = vmatmul.bf16.gmra.mxu0 %v1048
    %v5886 = vpop.f32.mrf.mxu0
    %v5887 = vpop.f32.mrf.mxu0
    %5888 = vmatmul.bf16.gmra.mxu0 %v1050
    %v5889 = vpop.f32.mrf.mxu0
    %v5890 = vpop.f32.mrf.mxu0
    %5891 = vmatmul.bf16.gmra.mxu0 %v1052
    %v5892 = vpop.f32.mrf.mxu0
    %v5893 = vadd.f32 %v5859, %v5892
    %v5894 = vpop.f32.mrf.mxu0
    %5895 = vmatmul.bf16.gmra.mxu0 %v1054
    %v5896 = vpop.f32.mrf.mxu0
    %v5897 = vpop.f32.mrf.mxu0
    %5898 = vdwg.mxu0
    %5899 = vmatpush.bf16.msra.mxu0 %v3424
    %5900 = vmatpush.bf16.msra.mxu0 %v3392
    %5901 = vmatpush.bf16.msra.mxu0 %v3360
    %5902 = vmatpush.bf16.msra.mxu0 %v3328
    %5903 = vmatpush.bf16.msra.mxu0 %v3296
    %5904 = vmatpush.bf16.msra.mxu0 %v3264
    %5905 = vmatpush.bf16.msra.mxu0 %v3232
    %5906 = vmatpush.bf16.msra.mxu0 %v3200
    %5907 = vmatmul.bf16.gmra.mxu0 %v1039
    %v5908 = vpop.f32.mrf.mxu0
    %v5909 = vpop.f32.mrf.mxu0
    %5910 = vmatmul.bf16.gmra.mxu0 %v1041
    %v5911 = vpop.f32.mrf.mxu0
    %v5912 = vpop.f32.mrf.mxu0
    %5913 = vmatmul.bf16.gmra.mxu0 %v1043
    %v5914 = vpop.f32.mrf.mxu0
    %v5915 = vpop.f32.mrf.mxu0
    %5916 = vmatmul.bf16.gmra.mxu0 %v1045
    %v5917 = vpop.f32.mrf.mxu0
    %v5918 = vpop.f32.mrf.mxu0
    %5919 = vmatmul.bf16.gmra.mxu0 %v1047
    %v5920 = vpop.f32.mrf.mxu0
    %v5921 = vpop.f32.mrf.mxu0
    %5922 = vmatmul.bf16.gmra.mxu0 %v1049
    %v5923 = vpop.f32.mrf.mxu0
    %v5924 = vpop.f32.mrf.mxu0
    %5925 = vmatmul.bf16.gmra.mxu0 %v1051
    %v5926 = vpop.f32.mrf.mxu0
    %v5927 = vadd.f32 %v1600, %v5926
    %v5928 = vpop.f32.mrf.mxu0
    %5929 = vmatmul.bf16.gmra.mxu0 %v1053
    %v5930 = vpop.f32.mrf.mxu0
    %v5931 = vpop.f32.mrf.mxu0
    %5932 = vdwg.mxu0
    %5933 = vmatpush.bf16.msra.mxu0 %v3680
    %5934 = vmatpush.bf16.msra.mxu0 %v3648
    %5935 = vmatpush.bf16.msra.mxu0 %v3616
    %5936 = vmatpush.bf16.msra.mxu0 %v3584
    %5937 = vmatpush.bf16.msra.mxu0 %v3552
    %5938 = vmatpush.bf16.msra.mxu0 %v3520
    %5939 = vmatpush.bf16.msra.mxu0 %v3488
    %5940 = vmatpush.bf16.msra.mxu0 %v3456
    %5941 = vmatmul.bf16.gmra.mxu0 %v1040
    %v5942 = vpop.f32.mrf.mxu0
    %v5943 = vpop.f32.mrf.mxu0
    %5944 = vmatmul.bf16.gmra.mxu0 %v1042
    %v5945 = vpop.f32.mrf.mxu0
    %v5946 = vpop.f32.mrf.mxu0
    %5947 = vmatmul.bf16.gmra.mxu0 %v1044
    %v5948 = vpop.f32.mrf.mxu0
    %v5949 = vpop.f32.mrf.mxu0
    %5950 = vmatmul.bf16.gmra.mxu0 %v1046
    %v5951 = vpop.f32.mrf.mxu0
    %v5952 = vpop.f32.mrf.mxu0
    %5953 = vmatmul.bf16.gmra.mxu0 %v1048
    %v5954 = vpop.f32.mrf.mxu0
    %v5955 = vpop.f32.mrf.mxu0
    %5956 = vmatmul.bf16.gmra.mxu0 %v1050
    %v5957 = vpop.f32.mrf.mxu0
    %v5958 = vpop.f32.mrf.mxu0
    %5959 = vmatmul.bf16.gmra.mxu0 %v1052
    %v5960 = vpop.f32.mrf.mxu0
    %v5961 = vadd.f32 %v5927, %v5960
    %v5962 = vpop.f32.mrf.mxu0
    %5963 = vmatmul.bf16.gmra.mxu0 %v1054
    %v5964 = vpop.f32.mrf.mxu0
    %v5965 = vpop.f32.mrf.mxu0
    %5966 = vdwg.mxu0
    %5967 = vmatpush.bf16.msra.mxu0 %v3425
    %5968 = vmatpush.bf16.msra.mxu0 %v3393
    %5969 = vmatpush.bf16.msra.mxu0 %v3361
    %5970 = vmatpush.bf16.msra.mxu0 %v3329
    %5971 = vmatpush.bf16.msra.mxu0 %v3297
    %5972 = vmatpush.bf16.msra.mxu0 %v3265
    %5973 = vmatpush.bf16.msra.mxu0 %v3233
    %5974 = vmatpush.bf16.msra.mxu0 %v3201
    %5975 = vmatmul.bf16.gmra.mxu0 %v1039
    %v5976 = vpop.f32.mrf.mxu0
    %v5977 = vpop.f32.mrf.mxu0
    %5978 = vmatmul.bf16.gmra.mxu0 %v1041
    %v5979 = vpop.f32.mrf.mxu0
    %v5980 = vpop.f32.mrf.mxu0
    %5981 = vmatmul.bf16.gmra.mxu0 %v1043
    %v5982 = vpop.f32.mrf.mxu0
    %v5983 = vpop.f32.mrf.mxu0
    %5984 = vmatmul.bf16.gmra.mxu0 %v1045
    %v5985 = vpop.f32.mrf.mxu0
    %v5986 = vpop.f32.mrf.mxu0
    %5987 = vmatmul.bf16.gmra.mxu0 %v1047
    %v5988 = vpop.f32.mrf.mxu0
    %v5989 = vpop.f32.mrf.mxu0
    %5990 = vmatmul.bf16.gmra.mxu0 %v1049
    %v5991 = vpop.f32.mrf.mxu0
    %v5992 = vpop.f32.mrf.mxu0
    %5993 = vmatmul.bf16.gmra.mxu0 %v1051
    %v5994 = vpop.f32.mrf.mxu0
    %v5995 = vpop.f32.mrf.mxu0
    %v5996 = vadd.f32 %v1601, %v5995
    %5997 = vmatmul.bf16.gmra.mxu0 %v1053
    %v5998 = vpop.f32.mrf.mxu0
    %v5999 = vpop.f32.mrf.mxu0
    %6000 = vdwg.mxu0
    %6001 = vmatpush.bf16.msra.mxu0 %v3681
    %6002 = vmatpush.bf16.msra.mxu0 %v3649
    %6003 = vmatpush.bf16.msra.mxu0 %v3617
    %6004 = vmatpush.bf16.msra.mxu0 %v3585
    %6005 = vmatpush.bf16.msra.mxu0 %v3553
    %6006 = vmatpush.bf16.msra.mxu0 %v3521
    %6007 = vmatpush.bf16.msra.mxu0 %v3489
    %6008 = vmatpush.bf16.msra.mxu0 %v3457
    %6009 = vmatmul.bf16.gmra.mxu0 %v1040
    %v6010 = vpop.f32.mrf.mxu0
    %v6011 = vpop.f32.mrf.mxu0
    %6012 = vmatmul.bf16.gmra.mxu0 %v1042
    %v6013 = vpop.f32.mrf.mxu0
    %v6014 = vpop.f32.mrf.mxu0
    %6015 = vmatmul.bf16.gmra.mxu0 %v1044
    %v6016 = vpop.f32.mrf.mxu0
    %v6017 = vpop.f32.mrf.mxu0
    %6018 = vmatmul.bf16.gmra.mxu0 %v1046
    %v6019 = vpop.f32.mrf.mxu0
    %v6020 = vpop.f32.mrf.mxu0
    %6021 = vmatmul.bf16.gmra.mxu0 %v1048
    %v6022 = vpop.f32.mrf.mxu0
    %v6023 = vpop.f32.mrf.mxu0
    %6024 = vmatmul.bf16.gmra.mxu0 %v1050
    %v6025 = vpop.f32.mrf.mxu0
    %v6026 = vpop.f32.mrf.mxu0
    %6027 = vmatmul.bf16.gmra.mxu0 %v1052
    %v6028 = vpop.f32.mrf.mxu0
    %v6029 = vpop.f32.mrf.mxu0
    %v6030 = vadd.f32 %v5996, %v6029
    %6031 = vmatmul.bf16.gmra.mxu0 %v1054
    %v6032 = vpop.f32.mrf.mxu0
    %v6033 = vpop.f32.mrf.mxu0
    %6034 = vdwg.mxu0
    %6035 = vmatpush.bf16.msra.mxu0 %v3426
    %6036 = vmatpush.bf16.msra.mxu0 %v3394
    %6037 = vmatpush.bf16.msra.mxu0 %v3362
    %6038 = vmatpush.bf16.msra.mxu0 %v3330
    %6039 = vmatpush.bf16.msra.mxu0 %v3298
    %6040 = vmatpush.bf16.msra.mxu0 %v3266
    %6041 = vmatpush.bf16.msra.mxu0 %v3234
    %6042 = vmatpush.bf16.msra.mxu0 %v3202
    %6043 = vmatmul.bf16.gmra.mxu0 %v1039
    %v6044 = vpop.f32.mrf.mxu0
    %v6045 = vpop.f32.mrf.mxu0
    %6046 = vmatmul.bf16.gmra.mxu0 %v1041
    %v6047 = vpop.f32.mrf.mxu0
    %v6048 = vpop.f32.mrf.mxu0
    %6049 = vmatmul.bf16.gmra.mxu0 %v1043
    %v6050 = vpop.f32.mrf.mxu0
    %v6051 = vpop.f32.mrf.mxu0
    %6052 = vmatmul.bf16.gmra.mxu0 %v1045
    %v6053 = vpop.f32.mrf.mxu0
    %v6054 = vpop.f32.mrf.mxu0
    %6055 = vmatmul.bf16.gmra.mxu0 %v1047
    %v6056 = vpop.f32.mrf.mxu0
    %v6057 = vpop.f32.mrf.mxu0
    %6058 = vmatmul.bf16.gmra.mxu0 %v1049
    %v6059 = vpop.f32.mrf.mxu0
    %v6060 = vpop.f32.mrf.mxu0
    %6061 = vmatmul.bf16.gmra.mxu0 %v1051
    %v6062 = vpop.f32.mrf.mxu0
    %v6063 = vpop.f32.mrf.mxu0
    %v6064 = vadd.f32 %v1602, %v6063
    %6065 = vmatmul.bf16.gmra.mxu0 %v1053
    %v6066 = vpop.f32.mrf.mxu0
    %v6067 = vpop.f32.mrf.mxu0
    %6068 = vdwg.mxu0
    %6069 = vmatpush.bf16.msra.mxu0 %v3682
    %6070 = vmatpush.bf16.msra.mxu0 %v3650
    %6071 = vmatpush.bf16.msra.mxu0 %v3618
    %6072 = vmatpush.bf16.msra.mxu0 %v3586
    %6073 = vmatpush.bf16.msra.mxu0 %v3554
    %6074 = vmatpush.bf16.msra.mxu0 %v3522
    %6075 = vmatpush.bf16.msra.mxu0 %v3490
    %6076 = vmatpush.bf16.msra.mxu0 %v3458
    %6077 = vmatmul.bf16.gmra.mxu0 %v1040
    %v6078 = vpop.f32.mrf.mxu0
    %v6079 = vpop.f32.mrf.mxu0
    %6080 = vmatmul.bf16.gmra.mxu0 %v1042
    %v6081 = vpop.f32.mrf.mxu0
    %v6082 = vpop.f32.mrf.mxu0
    %6083 = vmatmul.bf16.gmra.mxu0 %v1044
    %v6084 = vpop.f32.mrf.mxu0
    %v6085 = vpop.f32.mrf.mxu0
    %6086 = vmatmul.bf16.gmra.mxu0 %v1046
    %v6087 = vpop.f32.mrf.mxu0
    %v6088 = vpop.f32.mrf.mxu0
    %6089 = vmatmul.bf16.gmra.mxu0 %v1048
    %v6090 = vpop.f32.mrf.mxu0
    %v6091 = vpop.f32.mrf.mxu0
    %6092 = vmatmul.bf16.gmra.mxu0 %v1050
    %v6093 = vpop.f32.mrf.mxu0
    %v6094 = vpop.f32.mrf.mxu0
    %6095 = vmatmul.bf16.gmra.mxu0 %v1052
    %v6096 = vpop.f32.mrf.mxu0
    %v6097 = vpop.f32.mrf.mxu0
    %v6098 = vadd.f32 %v6064, %v6097
    %6099 = vmatmul.bf16.gmra.mxu0 %v1054
    %v6100 = vpop.f32.mrf.mxu0
    %v6101 = vpop.f32.mrf.mxu0
    %6102 = vdwg.mxu0
    %6103 = vmatpush.bf16.msra.mxu0 %v3427
    %6104 = vmatpush.bf16.msra.mxu0 %v3395
    %6105 = vmatpush.bf16.msra.mxu0 %v3363
    %6106 = vmatpush.bf16.msra.mxu0 %v3331
    %6107 = vmatpush.bf16.msra.mxu0 %v3299
    %6108 = vmatpush.bf16.msra.mxu0 %v3267
    %6109 = vmatpush.bf16.msra.mxu0 %v3235
    %6110 = vmatpush.bf16.msra.mxu0 %v3203
    %6111 = vmatmul.bf16.gmra.mxu0 %v1039
    %v6112 = vpop.f32.mrf.mxu0
    %v6113 = vpop.f32.mrf.mxu0
    %6114 = vmatmul.bf16.gmra.mxu0 %v1041
    %v6115 = vpop.f32.mrf.mxu0
    %v6116 = vpop.f32.mrf.mxu0
    %6117 = vmatmul.bf16.gmra.mxu0 %v1043
    %v6118 = vpop.f32.mrf.mxu0
    %v6119 = vpop.f32.mrf.mxu0
    %6120 = vmatmul.bf16.gmra.mxu0 %v1045
    %v6121 = vpop.f32.mrf.mxu0
    %v6122 = vpop.f32.mrf.mxu0
    %6123 = vmatmul.bf16.gmra.mxu0 %v1047
    %v6124 = vpop.f32.mrf.mxu0
    %v6125 = vpop.f32.mrf.mxu0
    %6126 = vmatmul.bf16.gmra.mxu0 %v1049
    %v6127 = vpop.f32.mrf.mxu0
    %v6128 = vpop.f32.mrf.mxu0
    %6129 = vmatmul.bf16.gmra.mxu0 %v1051
    %v6130 = vpop.f32.mrf.mxu0
    %v6131 = vpop.f32.mrf.mxu0
    %6132 = vmatmul.bf16.gmra.mxu0 %v1053
    %v6133 = vpop.f32.mrf.mxu0
    %v6134 = vadd.f32 %v1603, %v6133
    %v6135 = vpop.f32.mrf.mxu0
    %6136 = vdwg.mxu0
    %6137 = vmatpush.bf16.msra.mxu0 %v3683
    %6138 = vmatpush.bf16.msra.mxu0 %v3651
    %6139 = vmatpush.bf16.msra.mxu0 %v3619
    %6140 = vmatpush.bf16.msra.mxu0 %v3587
    %6141 = vmatpush.bf16.msra.mxu0 %v3555
    %6142 = vmatpush.bf16.msra.mxu0 %v3523
    %6143 = vmatpush.bf16.msra.mxu0 %v3491
    %6144 = vmatpush.bf16.msra.mxu0 %v3459
    %6145 = vmatmul.bf16.gmra.mxu0 %v1040
    %v6146 = vpop.f32.mrf.mxu0
    %v6147 = vpop.f32.mrf.mxu0
    %6148 = vmatmul.bf16.gmra.mxu0 %v1042
    %v6149 = vpop.f32.mrf.mxu0
    %v6150 = vpop.f32.mrf.mxu0
    %6151 = vmatmul.bf16.gmra.mxu0 %v1044
    %v6152 = vpop.f32.mrf.mxu0
    %v6153 = vpop.f32.mrf.mxu0
    %6154 = vmatmul.bf16.gmra.mxu0 %v1046
    %v6155 = vpop.f32.mrf.mxu0
    %v6156 = vpop.f32.mrf.mxu0
    %6157 = vmatmul.bf16.gmra.mxu0 %v1048
    %v6158 = vpop.f32.mrf.mxu0
    %v6159 = vpop.f32.mrf.mxu0
    %6160 = vmatmul.bf16.gmra.mxu0 %v1050
    %v6161 = vpop.f32.mrf.mxu0
    %v6162 = vpop.f32.mrf.mxu0
    %6163 = vmatmul.bf16.gmra.mxu0 %v1052
    %v6164 = vpop.f32.mrf.mxu0
    %v6165 = vpop.f32.mrf.mxu0
    %6166 = vmatmul.bf16.gmra.mxu0 %v1054
    %v6167 = vpop.f32.mrf.mxu0
    %v6168 = vadd.f32 %v6134, %v6167
    %v6169 = vpop.f32.mrf.mxu0
    %6170 = vdwg.mxu0
    %6171 = vmatpush.bf16.msra.mxu0 %v3428
    %6172 = vmatpush.bf16.msra.mxu0 %v3396
    %6173 = vmatpush.bf16.msra.mxu0 %v3364
    %6174 = vmatpush.bf16.msra.mxu0 %v3332
    %6175 = vmatpush.bf16.msra.mxu0 %v3300
    %6176 = vmatpush.bf16.msra.mxu0 %v3268
    %6177 = vmatpush.bf16.msra.mxu0 %v3236
    %6178 = vmatpush.bf16.msra.mxu0 %v3204
    %6179 = vmatmul.bf16.gmra.mxu0 %v1039
    %v6180 = vpop.f32.mrf.mxu0
    %v6181 = vpop.f32.mrf.mxu0
    %6182 = vmatmul.bf16.gmra.mxu0 %v1041
    %v6183 = vpop.f32.mrf.mxu0
    %v6184 = vpop.f32.mrf.mxu0
    %6185 = vmatmul.bf16.gmra.mxu0 %v1043
    %v6186 = vpop.f32.mrf.mxu0
    %v6187 = vpop.f32.mrf.mxu0
    %6188 = vmatmul.bf16.gmra.mxu0 %v1045
    %v6189 = vpop.f32.mrf.mxu0
    %v6190 = vpop.f32.mrf.mxu0
    %6191 = vmatmul.bf16.gmra.mxu0 %v1047
    %v6192 = vpop.f32.mrf.mxu0
    %v6193 = vpop.f32.mrf.mxu0
    %6194 = vmatmul.bf16.gmra.mxu0 %v1049
    %v6195 = vpop.f32.mrf.mxu0
    %v6196 = vpop.f32.mrf.mxu0
    %6197 = vmatmul.bf16.gmra.mxu0 %v1051
    %v6198 = vpop.f32.mrf.mxu0
    %v6199 = vpop.f32.mrf.mxu0
    %6200 = vmatmul.bf16.gmra.mxu0 %v1053
    %v6201 = vpop.f32.mrf.mxu0
    %v6202 = vadd.f32 %v1604, %v6201
    %v6203 = vpop.f32.mrf.mxu0
    %6204 = vdwg.mxu0
    %6205 = vmatpush.bf16.msra.mxu0 %v3684
    %6206 = vmatpush.bf16.msra.mxu0 %v3652
    %6207 = vmatpush.bf16.msra.mxu0 %v3620
    %6208 = vmatpush.bf16.msra.mxu0 %v3588
    %6209 = vmatpush.bf16.msra.mxu0 %v3556
    %6210 = vmatpush.bf16.msra.mxu0 %v3524
    %6211 = vmatpush.bf16.msra.mxu0 %v3492
    %6212 = vmatpush.bf16.msra.mxu0 %v3460
    %6213 = vmatmul.bf16.gmra.mxu0 %v1040
    %v6214 = vpop.f32.mrf.mxu0
    %v6215 = vpop.f32.mrf.mxu0
    %6216 = vmatmul.bf16.gmra.mxu0 %v1042
    %v6217 = vpop.f32.mrf.mxu0
    %v6218 = vpop.f32.mrf.mxu0
    %6219 = vmatmul.bf16.gmra.mxu0 %v1044
    %v6220 = vpop.f32.mrf.mxu0
    %v6221 = vpop.f32.mrf.mxu0
    %6222 = vmatmul.bf16.gmra.mxu0 %v1046
    %v6223 = vpop.f32.mrf.mxu0
    %v6224 = vpop.f32.mrf.mxu0
    %6225 = vmatmul.bf16.gmra.mxu0 %v1048
    %v6226 = vpop.f32.mrf.mxu0
    %v6227 = vpop.f32.mrf.mxu0
    %6228 = vmatmul.bf16.gmra.mxu0 %v1050
    %v6229 = vpop.f32.mrf.mxu0
    %v6230 = vpop.f32.mrf.mxu0
    %6231 = vmatmul.bf16.gmra.mxu0 %v1052
    %v6232 = vpop.f32.mrf.mxu0
    %v6233 = vpop.f32.mrf.mxu0
    %6234 = vmatmul.bf16.gmra.mxu0 %v1054
    %v6235 = vpop.f32.mrf.mxu0
    %v6236 = vadd.f32 %v6202, %v6235
    %v6237 = vpop.f32.mrf.mxu0
    %6238 = vdwg.mxu0
    %6239 = vmatpush.bf16.msra.mxu0 %v3429
    %6240 = vmatpush.bf16.msra.mxu0 %v3397
    %6241 = vmatpush.bf16.msra.mxu0 %v3365
    %6242 = vmatpush.bf16.msra.mxu0 %v3333
    %6243 = vmatpush.bf16.msra.mxu0 %v3301
    %6244 = vmatpush.bf16.msra.mxu0 %v3269
    %6245 = vmatpush.bf16.msra.mxu0 %v3237
    %6246 = vmatpush.bf16.msra.mxu0 %v3205
    %6247 = vmatmul.bf16.gmra.mxu0 %v1039
    %v6248 = vpop.f32.mrf.mxu0
    %v6249 = vpop.f32.mrf.mxu0
    %6250 = vmatmul.bf16.gmra.mxu0 %v1041
    %v6251 = vpop.f32.mrf.mxu0
    %v6252 = vpop.f32.mrf.mxu0
    %6253 = vmatmul.bf16.gmra.mxu0 %v1043
    %v6254 = vpop.f32.mrf.mxu0
    %v6255 = vpop.f32.mrf.mxu0
    %6256 = vmatmul.bf16.gmra.mxu0 %v1045
    %v6257 = vpop.f32.mrf.mxu0
    %v6258 = vpop.f32.mrf.mxu0
    %6259 = vmatmul.bf16.gmra.mxu0 %v1047
    %v6260 = vpop.f32.mrf.mxu0
    %v6261 = vpop.f32.mrf.mxu0
    %6262 = vmatmul.bf16.gmra.mxu0 %v1049
    %v6263 = vpop.f32.mrf.mxu0
    %v6264 = vpop.f32.mrf.mxu0
    %6265 = vmatmul.bf16.gmra.mxu0 %v1051
    %v6266 = vpop.f32.mrf.mxu0
    %v6267 = vpop.f32.mrf.mxu0
    %6268 = vmatmul.bf16.gmra.mxu0 %v1053
    %v6269 = vpop.f32.mrf.mxu0
    %v6270 = vpop.f32.mrf.mxu0
    %v6271 = vadd.f32 %v1605, %v6270
    %6272 = vdwg.mxu0
    %6273 = vmatpush.bf16.msra.mxu0 %v3685
    %6274 = vmatpush.bf16.msra.mxu0 %v3653
    %6275 = vmatpush.bf16.msra.mxu0 %v3621
    %6276 = vmatpush.bf16.msra.mxu0 %v3589
    %6277 = vmatpush.bf16.msra.mxu0 %v3557
    %6278 = vmatpush.bf16.msra.mxu0 %v3525
    %6279 = vmatpush.bf16.msra.mxu0 %v3493
    %6280 = vmatpush.bf16.msra.mxu0 %v3461
    %6281 = vmatmul.bf16.gmra.mxu0 %v1040
    %v6282 = vpop.f32.mrf.mxu0
    %v6283 = vpop.f32.mrf.mxu0
    %6284 = vmatmul.bf16.gmra.mxu0 %v1042
    %v6285 = vpop.f32.mrf.mxu0
    %v6286 = vpop.f32.mrf.mxu0
    %6287 = vmatmul.bf16.gmra.mxu0 %v1044
    %v6288 = vpop.f32.mrf.mxu0
    %v6289 = vpop.f32.mrf.mxu0
    %6290 = vmatmul.bf16.gmra.mxu0 %v1046
    %v6291 = vpop.f32.mrf.mxu0
    %v6292 = vpop.f32.mrf.mxu0
    %6293 = vmatmul.bf16.gmra.mxu0 %v1048
    %v6294 = vpop.f32.mrf.mxu0
    %v6295 = vpop.f32.mrf.mxu0
    %6296 = vmatmul.bf16.gmra.mxu0 %v1050
    %v6297 = vpop.f32.mrf.mxu0
    %v6298 = vpop.f32.mrf.mxu0
    %6299 = vmatmul.bf16.gmra.mxu0 %v1052
    %v6300 = vpop.f32.mrf.mxu0
    %v6301 = vpop.f32.mrf.mxu0
    %6302 = vmatmul.bf16.gmra.mxu0 %v1054
    %v6303 = vpop.f32.mrf.mxu0
    %v6304 = vpop.f32.mrf.mxu0
    %v6305 = vadd.f32 %v6271, %v6304
    %6306 = vdwg.mxu0
    %6307 = vmatpush.bf16.msra.mxu0 %v3430
    %6308 = vmatpush.bf16.msra.mxu0 %v3398
    %6309 = vmatpush.bf16.msra.mxu0 %v3366
    %6310 = vmatpush.bf16.msra.mxu0 %v3334
    %6311 = vmatpush.bf16.msra.mxu0 %v3302
    %6312 = vmatpush.bf16.msra.mxu0 %v3270
    %6313 = vmatpush.bf16.msra.mxu0 %v3238
    %6314 = vmatpush.bf16.msra.mxu0 %v3206
    %6315 = vmatmul.bf16.gmra.mxu0 %v1039
    %v6316 = vpop.f32.mrf.mxu0
    %v6317 = vpop.f32.mrf.mxu0
    %6318 = vmatmul.bf16.gmra.mxu0 %v1041
    %v6319 = vpop.f32.mrf.mxu0
    %v6320 = vpop.f32.mrf.mxu0
    %6321 = vmatmul.bf16.gmra.mxu0 %v1043
    %v6322 = vpop.f32.mrf.mxu0
    %v6323 = vpop.f32.mrf.mxu0
    %6324 = vmatmul.bf16.gmra.mxu0 %v1045
    %v6325 = vpop.f32.mrf.mxu0
    %v6326 = vpop.f32.mrf.mxu0
    %6327 = vmatmul.bf16.gmra.mxu0 %v1047
    %v6328 = vpop.f32.mrf.mxu0
    %v6329 = vpop.f32.mrf.mxu0
    %6330 = vmatmul.bf16.gmra.mxu0 %v1049
    %v6331 = vpop.f32.mrf.mxu0
    %v6332 = vpop.f32.mrf.mxu0
    %6333 = vmatmul.bf16.gmra.mxu0 %v1051
    %v6334 = vpop.f32.mrf.mxu0
    %v6335 = vpop.f32.mrf.mxu0
    %6336 = vmatmul.bf16.gmra.mxu0 %v1053
    %v6337 = vpop.f32.mrf.mxu0
    %v6338 = vpop.f32.mrf.mxu0
    %v6339 = vadd.f32 %v1606, %v6338
    %6340 = vdwg.mxu0
    %6341 = vmatpush.bf16.msra.mxu0 %v3686
    %6342 = vmatpush.bf16.msra.mxu0 %v3654
    %6343 = vmatpush.bf16.msra.mxu0 %v3622
    %6344 = vmatpush.bf16.msra.mxu0 %v3590
    %6345 = vmatpush.bf16.msra.mxu0 %v3558
    %6346 = vmatpush.bf16.msra.mxu0 %v3526
    %6347 = vmatpush.bf16.msra.mxu0 %v3494
    %6348 = vmatpush.bf16.msra.mxu0 %v3462
    %6349 = vmatmul.bf16.gmra.mxu0 %v1040
    %v6350 = vpop.f32.mrf.mxu0
    %v6351 = vpop.f32.mrf.mxu0
    %6352 = vmatmul.bf16.gmra.mxu0 %v1042
    %v6353 = vpop.f32.mrf.mxu0
    %v6354 = vpop.f32.mrf.mxu0
    %6355 = vmatmul.bf16.gmra.mxu0 %v1044
    %v6356 = vpop.f32.mrf.mxu0
    %v6357 = vpop.f32.mrf.mxu0
    %6358 = vmatmul.bf16.gmra.mxu0 %v1046
    %v6359 = vpop.f32.mrf.mxu0
    %v6360 = vpop.f32.mrf.mxu0
    %6361 = vmatmul.bf16.gmra.mxu0 %v1048
    %v6362 = vpop.f32.mrf.mxu0
    %v6363 = vpop.f32.mrf.mxu0
    %6364 = vmatmul.bf16.gmra.mxu0 %v1050
    %v6365 = vpop.f32.mrf.mxu0
    %v6366 = vpop.f32.mrf.mxu0
    %6367 = vmatmul.bf16.gmra.mxu0 %v1052
    %v6368 = vpop.f32.mrf.mxu0
    %v6369 = vpop.f32.mrf.mxu0
    %6370 = vmatmul.bf16.gmra.mxu0 %v1054
    %v6371 = vpop.f32.mrf.mxu0
    %v6372 = vpop.f32.mrf.mxu0
    %v6373 = vadd.f32 %v6339, %v6372
    %6374 = vdwg.mxu0
    %v6375 = vmax.f32 %v4243, 0.0
    %v6376 = vmax.f32 %v4311, 0.0
    %v6377 = vmax.f32 %v4380, 0.0
    %v6378 = vmax.f32 %v4448, 0.0
    %v6379 = vmax.f32 %v4518, 0.0
    %v6380 = vmax.f32 %v4586, 0.0
    %v6381 = vmax.f32 %v4655, 0.0
    %v6382 = vmax.f32 %v4723, 0.0
    %v6383 = vmax.f32 %v4793, 0.0
    %v6384 = vmax.f32 %v4861, 0.0
    %v6385 = vmax.f32 %v4930, 0.0
    %v6386 = vmax.f32 %v4998, 0.0
    %v6387 = vmax.f32 %v5068, 0.0
    %v6388 = vmax.f32 %v5136, 0.0
    %v6389 = vmax.f32 %v5205, 0.0
    %v6390 = vmax.f32 %v5273, 0.0
    %v6391 = vmax.f32 %v5343, 0.0
    %v6392 = vmax.f32 %v5411, 0.0
    %v6393 = vmax.f32 %v5480, 0.0
    %v6394 = vmax.f32 %v5548, 0.0
    %v6395 = vmax.f32 %v5618, 0.0
    %v6396 = vmax.f32 %v5686, 0.0
    %v6397 = vmax.f32 %v5755, 0.0
    %v6398 = vmax.f32 %v5823, 0.0
    %v6399 = vmax.f32 %v5893, 0.0
    %v6400 = vmax.f32 %v5961, 0.0
    %v6401 = vmax.f32 %v6030, 0.0
    %v6402 = vmax.f32 %v6098, 0.0
    %v6403 = vmax.f32 %v6168, 0.0
    %v6404 = vmax.f32 %v6236, 0.0
    %v6405 = vmax.f32 %v6305, 0.0
    %v6406 = vmax.f32 %v6373, 0.0
    %v6407 = vlaneseq
    %v6408 = vand.u32 %v6407, 127
    %v6409 = vld [vmem:[#allocation11] ss:$8 sm:$0x3]
    %v6411 = vperm.slane %v6409, 0
    %v6412 = vperm.slane %v6409, 1
    %v6415 = vmul.f32 %v6375, %v6411
    %v6416 = vmul.f32 %v6376, %v6412
    %v6417 = vadd.f32 %v6415, %v6416
    %6418 = vadd.xlane.f32.xlu0 %v6417
    %v6419 = vpop.xlane.xlu0 %6418
    %vm6420 = vcmp.eq.s32.totalorder %v6408, 0
    %v6421 = vsel %vm6420, %v6419, 0.0
    %v6422 = vadd.f32 %v6421, 0.0
    %s6423 = scalar_lea.vmem [#allocation11], 1
    %v6424 = vld [vmem:[%s6423] ss:$8 sm:$0x3]
    %v6426 = vperm.slane %v6424, 0
    %v6427 = vperm.slane %v6424, 1
    %v6430 = vmul.f32 %v6377, %v6426
    %v6431 = vmul.f32 %v6378, %v6427
    %v6432 = vadd.f32 %v6430, %v6431
    %6433 = vadd.xlane.f32.xlu0 %v6432
    %v6434 = vpop.xlane.xlu0 %6433
    %vm6435 = vcmp.eq.s32.totalorder %v6408, 1
    %v6436 = vsel %vm6435, %v6434, 0.0
    %v6437 = vadd.f32 %v6422, %v6436
    %s6438 = scalar_lea.vmem [#allocation11], 2
    %v6439 = vld [vmem:[%s6438] ss:$8 sm:$0x3]
    %v6441 = vperm.slane %v6439, 0
    %v6442 = vperm.slane %v6439, 1
    %v6445 = vmul.f32 %v6379, %v6441
    %v6446 = vmul.f32 %v6380, %v6442
    %v6447 = vadd.f32 %v6445, %v6446
    %6448 = vadd.xlane.f32.xlu0 %v6447
    %v6449 = vpop.xlane.xlu0 %6448
    %vm6450 = vcmp.eq.s32.totalorder %v6408, 2
    %v6451 = vsel %vm6450, %v6449, 0.0
    %v6452 = vadd.f32 %v6437, %v6451
    %s6453 = scalar_lea.vmem [#allocation11], 3
    %v6454 = vld [vmem:[%s6453] ss:$8 sm:$0x3]
    %v6456 = vperm.slane %v6454, 0
    %v6457 = vperm.slane %v6454, 1
    %v6460 = vmul.f32 %v6381, %v6456
    %v6461 = vmul.f32 %v6382, %v6457
    %v6462 = vadd.f32 %v6460, %v6461
    %6463 = vadd.xlane.f32.xlu0 %v6462
    %v6464 = vpop.xlane.xlu0 %6463
    %vm6465 = vcmp.eq.s32.totalorder %v6408, 3
    %v6466 = vsel %vm6465, %v6464, 0.0
    %v6467 = vadd.f32 %v6452, %v6466
    %s6468 = scalar_lea.vmem [#allocation11], 4
    %v6469 = vld [vmem:[%s6468] ss:$8 sm:$0x3]
    %v6471 = vperm.slane %v6469, 0
    %v6472 = vperm.slane %v6469, 1
    %v6475 = vmul.f32 %v6383, %v6471
    %v6476 = vmul.f32 %v6384, %v6472
    %v6477 = vadd.f32 %v6475, %v6476
    %6478 = vadd.xlane.f32.xlu0 %v6477
    %v6479 = vpop.xlane.xlu0 %6478
    %vm6480 = vcmp.eq.s32.totalorder %v6408, 4
    %v6481 = vsel %vm6480, %v6479, 0.0
    %v6482 = vadd.f32 %v6467, %v6481
    %s6483 = scalar_lea.vmem [#allocation11], 5
    %v6484 = vld [vmem:[%s6483] ss:$8 sm:$0x3]
    %v6486 = vperm.slane %v6484, 0
    %v6487 = vperm.slane %v6484, 1
    %v6490 = vmul.f32 %v6385, %v6486
    %v6491 = vmul.f32 %v6386, %v6487
    %v6492 = vadd.f32 %v6490, %v6491
    %6493 = vadd.xlane.f32.xlu0 %v6492
    %v6494 = vpop.xlane.xlu0 %6493
    %vm6495 = vcmp.eq.s32.totalorder %v6408, 5
    %v6496 = vsel %vm6495, %v6494, 0.0
    %v6497 = vadd.f32 %v6482, %v6496
    %s6498 = scalar_lea.vmem [#allocation11], 6
    %v6499 = vld [vmem:[%s6498] ss:$8 sm:$0x3]
    %v6501 = vperm.slane %v6499, 0
    %v6502 = vperm.slane %v6499, 1
    %v6505 = vmul.f32 %v6387, %v6501
    %v6506 = vmul.f32 %v6388, %v6502
    %v6507 = vadd.f32 %v6505, %v6506
    %6508 = vadd.xlane.f32.xlu0 %v6507
    %v6509 = vpop.xlane.xlu0 %6508
    %vm6510 = vcmp.eq.s32.totalorder %v6408, 6
    %v6511 = vsel %vm6510, %v6509, 0.0
    %v6512 = vadd.f32 %v6497, %v6511
    %s6513 = scalar_lea.vmem [#allocation11], 7
    %v6514 = vld [vmem:[%s6513] ss:$8 sm:$0x3]
    %v6516 = vperm.slane %v6514, 0
    %v6517 = vperm.slane %v6514, 1
    %v6520 = vmul.f32 %v6389, %v6516
    %v6521 = vmul.f32 %v6390, %v6517
    %v6522 = vadd.f32 %v6520, %v6521
    %6523 = vadd.xlane.f32.xlu0 %v6522
    %v6524 = vpop.xlane.xlu0 %6523
    %vm6525 = vcmp.eq.s32.totalorder %v6408, 7
    %v6526 = vsel %vm6525, %v6524, 0.0
    %v6527 = vadd.f32 %v6512, %v6526
    %s6528 = scalar_lea.vmem [#allocation11], 16
    %v6529 = vld [vmem:[%s6528] ss:$8 sm:$0x3]
    %v6531 = vperm.slane %v6529, 0
    %v6532 = vperm.slane %v6529, 1
    %v6535 = vmul.f32 %v6391, %v6531
    %v6536 = vmul.f32 %v6392, %v6532
    %v6537 = vadd.f32 %v6535, %v6536
    %6538 = vadd.xlane.f32.xlu0 %v6537
    %v6539 = vpop.xlane.xlu0 %6538
    %vm6540 = vcmp.eq.s32.totalorder %v6408, 8
    %v6541 = vsel %vm6540, %v6539, 0.0
    %v6542 = vadd.f32 %v6527, %v6541
    %s6543 = scalar_lea.vmem [#allocation11], 17
    %v6544 = vld [vmem:[%s6543] ss:$8 sm:$0x3]
    %v6546 = vperm.slane %v6544, 0
    %v6547 = vperm.slane %v6544, 1
    %v6550 = vmul.f32 %v6393, %v6546
    %v6551 = vmul.f32 %v6394, %v6547
    %v6552 = vadd.f32 %v6550, %v6551
    %6553 = vadd.xlane.f32.xlu0 %v6552
    %v6554 = vpop.xlane.xlu0 %6553
    %vm6555 = vcmp.eq.s32.totalorder %v6408, 9
    %v6556 = vsel %vm6555, %v6554, 0.0
    %v6557 = vadd.f32 %v6542, %v6556
    %s6558 = scalar_lea.vmem [#allocation11], 18
    %v6559 = vld [vmem:[%s6558] ss:$8 sm:$0x3]
    %v6561 = vperm.slane %v6559, 0
    %v6562 = vperm.slane %v6559, 1
    %v6565 = vmul.f32 %v6395, %v6561
    %v6566 = vmul.f32 %v6396, %v6562
    %v6567 = vadd.f32 %v6565, %v6566
    %6568 = vadd.xlane.f32.xlu0 %v6567
    %v6569 = vpop.xlane.xlu0 %6568
    %vm6570 = vcmp.eq.s32.totalorder %v6408, 10
    %v6571 = vsel %vm6570, %v6569, 0.0
    %v6572 = vadd.f32 %v6557, %v6571
    %s6573 = scalar_lea.vmem [#allocation11], 19
    %v6574 = vld [vmem:[%s6573] ss:$8 sm:$0x3]
    %v6576 = vperm.slane %v6574, 0
    %v6577 = vperm.slane %v6574, 1
    %v6580 = vmul.f32 %v6397, %v6576
    %v6581 = vmul.f32 %v6398, %v6577
    %v6582 = vadd.f32 %v6580, %v6581
    %6583 = vadd.xlane.f32.xlu0 %v6582
    %v6584 = vpop.xlane.xlu0 %6583
    %vm6585 = vcmp.eq.s32.totalorder %v6408, 11
    %v6586 = vsel %vm6585, %v6584, 0.0
    %v6587 = vadd.f32 %v6572, %v6586
    %s6588 = scalar_lea.vmem [#allocation11], 20
    %v6589 = vld [vmem:[%s6588] ss:$8 sm:$0x3]
    %v6591 = vperm.slane %v6589, 0
    %v6592 = vperm.slane %v6589, 1
    %v6595 = vmul.f32 %v6399, %v6591
    %v6596 = vmul.f32 %v6400, %v6592
    %v6597 = vadd.f32 %v6595, %v6596
    %6598 = vadd.xlane.f32.xlu0 %v6597
    %v6599 = vpop.xlane.xlu0 %6598
    %vm6600 = vcmp.eq.s32.totalorder %v6408, 12
    %v6601 = vsel %vm6600, %v6599, 0.0
    %v6602 = vadd.f32 %v6587, %v6601
    %s6603 = scalar_lea.vmem [#allocation11], 21
    %v6604 = vld [vmem:[%s6603] ss:$8 sm:$0x3]
    %v6606 = vperm.slane %v6604, 0
    %v6607 = vperm.slane %v6604, 1
    %v6610 = vmul.f32 %v6401, %v6606
    %v6611 = vmul.f32 %v6402, %v6607
    %v6612 = vadd.f32 %v6610, %v6611
    %6613 = vadd.xlane.f32.xlu0 %v6612
    %v6614 = vpop.xlane.xlu0 %6613
    %vm6615 = vcmp.eq.s32.totalorder %v6408, 13
    %v6616 = vsel %vm6615, %v6614, 0.0
    %v6617 = vadd.f32 %v6602, %v6616
    %s6618 = scalar_lea.vmem [#allocation11], 22
    %v6619 = vld [vmem:[%s6618] ss:$8 sm:$0x3]
    %v6621 = vperm.slane %v6619, 0
    %v6622 = vperm.slane %v6619, 1
    %v6625 = vmul.f32 %v6403, %v6621
    %v6626 = vmul.f32 %v6404, %v6622
    %v6627 = vadd.f32 %v6625, %v6626
    %6628 = vadd.xlane.f32.xlu0 %v6627
    %v6629 = vpop.xlane.xlu0 %6628
    %vm6630 = vcmp.eq.s32.totalorder %v6408, 14
    %v6631 = vsel %vm6630, %v6629, 0.0
    %v6632 = vadd.f32 %v6617, %v6631
    %s6633 = scalar_lea.vmem [#allocation11], 23
    %v6634 = vld [vmem:[%s6633] ss:$8 sm:$0x3]
    %v6636 = vperm.slane %v6634, 0
    %v6637 = vperm.slane %v6634, 1
    %v6640 = vmul.f32 %v6405, %v6636
    %v6641 = vmul.f32 %v6406, %v6637
    %v6642 = vadd.f32 %v6640, %v6641
    %6643 = vadd.xlane.f32.xlu0 %v6642
    %v6644 = vpop.xlane.xlu0 %6643
    %vm6645 = vcmp.eq.s32.totalorder %v6408, 15
    %v6646 = vsel %vm6645, %v6644, 0.0
    %v6647 = vadd.f32 %v6632, %v6646
    %v6648 = vld [vmem:[#allocation13] sm:$0x1]
    %v6650 = vperm.slane %v6648, 0
    %v6652 = vadd.f32 %v6647, %v6650
    %v6653 = vxor.u32 %v6652, 2147483648
    %v6654 = vmul.f32 %v6653, 1.442695
    %v6655 = vpow.pop %v6654
    %v6656 = vadd.f32 %v6655, 1.0
    %v6657 = vrcp.pop %v6656
    %v6658 = vmul.f32 %v6656, %v6657
    %v6659 = vsub.f32 1.0, %v6658
    %v6660 = vmul.f32 %v6657, %v6659
    %v6661 = vadd.f32 %v6657, %v6660
    %vm6662 = vweird.f32 %v6656
    %vm6663 = vweird.f32 %v6657
    %vm6664 = vmor %vm6662, %vm6663
    %v6665 = vsel %vm6664, %v6657, %v6661
    %v6666 = vand.u32 2147483647, %v6656
    %vm6667 = vcmp.eq.f32.partialorder %v6666, 8.507059e+37
    %v6668 = vand.u32 %v6656, 2147483648
    %v6669 = vor.u32 1.1754944e-38, %v6668
    %v6670 = vsel %vm6667, %v6669, %v6665
    %v6671 = vmul.f32 1.0, %v6670
    %vm6672 = vcmask 130048
    %6673 = vst.msk [vmem:[#allocation14] sm:$0xff] %vm6672, %v6671
    // Predicated region
    $region58: #{tpu_custom_call.1} parent=1 // pred_check
      _
    $region59: #{tpu_custom_call.1} parent=1 // pred_check_branch
      %6675 = sbr.rel (0) target = $region61
    $region60: #{tpu_custom_call.1} parent=1 // pred_region
      %6677 = vsyncadd [#allocation4], 0
      %s6679 = sshll.u32 [#allocation14], 4
      %s6680 = int_to_ptr.vmem [resolvable:$true] %s6679
      %s6681 = sshll.u32 %s7, 4
      %s6682 = int_to_ptr.hbm [resolvable:$true] %s6681
      %6684 = dma.vmem_to_hbm [thread:$0]  %s6680, 128, %s6682, [#allocation4]
    $region61: #{tpu_custom_call.1} parent=1 // pred_fallthru
      _
    // Predicated region
    $region62: #{tpu_custom_call.1} parent=1 // pred_check
      _
    $region63: #{tpu_custom_call.1} parent=1 // pred_check_branch
      %6686 = sbr.rel (0) target = $region65
    $region64: #{tpu_custom_call.1} parent=1 // pred_region
      %6688 = dma.done [#allocation4], 128
    $region65: #{tpu_custom_call.1} parent=1 // pred_fallthru
      _
    %6689 = vsyncpa [#allocation3], 1
    %6690 = vsyncpa [#allocation6], 1
    %6691 = vsyncpa [#allocation9], 1
    %6692 = vsyncpa [#allocation12], 1
    %6693 = vsyncpa [#allocation4], 1

</llo_original>
